<compile_context>
chip_gen: v7x
topology: tpu7x:2x2x1
jax: 0.10.0
libtpu: 0.0.40
codegen_flags: <defaults>
</compile_context>

<pallas_src>
import functools

import numpy as np
import jax
import jax.numpy as jnp
from jax import lax
from jax.experimental import pallas as pl
from jax.experimental.pallas import tpu as pltpu


# ------------------------------ fused kernel --------------------------------

def _rt_attn_fused_kernel(lens_ref,                      # SMEM (B,) int32
                          x_ref,                         # VMEM (T, C)  f32
                          wqkv_ref, bqkv_ref,            # (C, 3C) bf16, (1, 3C) f32
                          wproj_ref, bproj_ref,          # (C, C)  bf16, (1, C)  f32
                          o_ref,                         # VMEM (T, C)  f32
                          *, num_heads):
    b = pl.program_id(0)
    T, C = x_ref.shape
    hd = C // num_heads

    # --- qkv projection (MXU, bf16 operands, f32 accumulation) --------------
    # softmax scale is pre-folded into the Q columns of Wqkv/bqkv at init.
    x_bf16 = x_ref[...].astype(jnp.bfloat16)
    qkv = jnp.dot(x_bf16, wqkv_ref[...],
                  preferred_element_type=jnp.float32) + bqkv_ref[...]   # (T, 3C)

    # --- key-padding mask: single (1, T) row, broadcast by the VPU ----------
    n = lens_ref[b]
    key_ids = lax.broadcasted_iota(jnp.int32, (1, T), 1)
    mask = jnp.where(key_ids < n, 0.0, -1e9).astype(jnp.float32)        # (1, T)

    # --- per-head attention, output projection accumulated per head ---------
    # Wproj row slices are sublane-aligned (hd % 8 == 0); no lane-granularity
    # head concat and no extra (T, C) temporary.
    y = jnp.broadcast_to(bproj_ref[...].astype(jnp.float32), (T, C))     # hoisted
    for h in range(num_heads):
        q = qkv[:, h * hd:(h + 1) * hd].astype(jnp.bfloat16)             # (T, hd)
        k = qkv[:, C + h * hd:C + (h + 1) * hd].astype(jnp.bfloat16)     # (T, hd)
        v = qkv[:, 2 * C + h * hd:2 * C + (h + 1) * hd].astype(jnp.bfloat16)
        # q @ k^T without transposing K in VMEM.
        s = lax.dot_general(q, k, (((1,), (1,)), ((), ())),
                            preferred_element_type=jnp.float32)          # (T, T)
        s = s + mask
        m = jnp.max(s, axis=-1, keepdims=True)
        p = jnp.exp(s - m)                                               # EUP
        l = jnp.sum(p, axis=-1, keepdims=True)
        o = jnp.dot(p.astype(jnp.bfloat16), v,
                    preferred_element_type=jnp.float32)                  # (T, hd)
        # deferred softmax normalization (exact reciprocal, still EUP slot).
        o = o * pl.reciprocal(l, approx=False)
        y = y + jnp.dot(o.astype(jnp.bfloat16),
                        wproj_ref[h * hd:(h + 1) * hd, :],
                        preferred_element_type=jnp.float32)              # (T, C)

    o_ref[...] = y.astype(o_ref.dtype)


def _build_rt_attention_call(B, T, C, num_heads, out_dtype, *,
                             single_buffer_weights):
    kern = functools.partial(_rt_attn_fused_kernel, num_heads=num_heads)

    weight_kwargs = {}
    if single_buffer_weights:
        # Grid-invariant blocks: do not double-buffer (VMEM headroom on v7x).
        weight_kwargs = dict(pipeline_mode=pl.Buffered(1))

    def const_spec(shape):
        return pl.BlockSpec(shape, lambda b, lens: (0, 0), **weight_kwargs)

    grid_spec = pltpu.PrefetchScalarGridSpec(
        num_scalar_prefetch=1,
        grid=(B,),
        in_specs=[
            pl.BlockSpec((None, T, C), lambda b, lens: (b, 0, 0)),   # x_pad
            const_spec((C, 3 * C)),                                  # Wqkv (bf16)
            const_spec((1, 3 * C)),                                  # bqkv (f32)
            const_spec((C, C)),                                      # Wproj (bf16)
            const_spec((1, C)),                                      # bproj (f32)
        ],
        out_specs=pl.BlockSpec((None, T, C), lambda b, lens: (b, 0, 0)),
    )

    hd = C // num_heads
    flops = B * (2 * T * C * (3 * C)             # qkv projection
                 + num_heads * 4 * T * T * hd    # qk^T + pv
                 + 2 * T * C * C)                # output projection
    transcendentals = B * num_heads * T * T      # exp
    bytes_accessed = (2 * B * T * C * 4          # x in + out (f32)
                      + C * 3 * C * 2 + C * C * 2   # bf16 weights
                      + 3 * C * 4 + C * 4           # f32 biases
                      + B * 4)                      # lens

    return pl.pallas_call(
        kern,
        out_shape=jax.ShapeDtypeStruct((B, T, C), out_dtype),
        grid_spec=grid_spec,
        compiler_params=pltpu.CompilerParams(
            # TODO(synk): on v7x verify the batch/grid axis actually shards
            # across both TensorCores; otherwise use CORE_PARALLEL / core_map.
            dimension_semantics=("parallel",),
            vmem_limit_bytes=32 * 1024 * 1024,   # raises v5e's 16 MiB default
        ),
        cost_estimate=pl.CostEstimate(flops=flops,
                                      transcendentals=transcendentals,
                                      bytes_accessed=bytes_accessed),
    )


def rt_attention_fused(lens, x_pad, wqkv, bqkv, wproj, bproj, *, num_heads):
    B, T, C = (int(d) for d in x_pad.shape)
    try:
        call = _build_rt_attention_call(B, T, C, num_heads, x_pad.dtype,
                                        single_buffer_weights=True)
        return call(lens, x_pad, wqkv, bqkv, wproj, bproj)
    except Exception:
        # pipeline_mode=pl.Buffered(1) is a pure VMEM-footprint hint; retry
        # without it on JAX builds that reject it on the top-level pipeline.
        call = _build_rt_attention_call(B, T, C, num_heads, x_pad.dtype,
                                        single_buffer_weights=False)
        return call(lens, x_pad, wqkv, bqkv, wproj, bproj)


# ------------------------------ module wrapper -------------------------------

class RTAttentionOldPallas:
    def __init__(self, dim, patch_size, num_heads, qkv_bias=True,
                 qk_scale=None, attn_drop=0.0, proj_drop=0.0,
                 rt_per_window=0, use_rpe=True, *, key):
        self.dim = dim
        self.patch_size = patch_size
        self.num_heads = num_heads
        self.rt_per_window = rt_per_window
        self.use_rpe = use_rpe
        self.scale = qk_scale or (dim // num_heads) ** (-0.5)
        k1, k2, k3, k4 = jax.random.split(key, 4)
        s = 1.0 / (dim ** 0.5)
        # f32 master parameters (faithful to the torch module; used by the
        # pure-JAX reference).
        self.qkv_w_f32 = jax.random.uniform(k1, (dim, 3 * dim), jnp.float32, -s, s)
        self.qkv_b_f32 = (jax.random.uniform(k2, (1, 3 * dim), jnp.float32, -s, s)
                          if qkv_bias else jnp.zeros((1, 3 * dim), jnp.float32))
        self.proj_w_f32 = jax.random.uniform(k3, (dim, dim), jnp.float32, -s, s)
        self.proj_b_f32 = jax.random.uniform(k4, (1, dim), jnp.float32, -s, s)
        # Kernel parameters:
        #   * softmax scale folded into the Q columns of Wqkv/bqkv (one-time
        #     transform -> removes per-head q*scale VPU multiplies).
        #   * weight matrices stored bf16 (half the DMA bytes, native MXU rate
        #     on v6e/v7x); biases stay f32 (added after the f32 accumulation).
        self.qkv_w = self.qkv_w_f32.at[:, :dim].multiply(self.scale).astype(jnp.bfloat16)
        self.qkv_b = self.qkv_b_f32.at[:, :dim].multiply(self.scale)
        self.proj_w = self.proj_w_f32.astype(jnp.bfloat16)
        self.proj_b = self.proj_b_f32
        # attn_drop / proj_drop (p=0.0) are identity under eval semantics.

    def __call__(self, relay_tokens, batch_num_windows):
        """relay_tokens: (sum(batch_num_windows), C)."""
        # TODO(synk): octree.rt_mask[depth] is regenerated in-kernel as the
        # key-padding mask implied by batch_num_windows; an arbitrary external
        # (B,T,T) additive mask would need to be passed to the kernel.
        B = len(batch_num_windows)
        C = self.dim
        T = int(max(batch_num_windows))
        nb = np.asarray(batch_num_windows, np.int64)

        # --- pad_sequence (batch_first=False) as ONE static gather ----------
        # flat row r = t*B + b of the padded (T, B, C) buffer.
        t_idx = np.arange(T)[:, None]                          # (T, 1)
        offsets = np.concatenate([[0], np.cumsum(nb)[:-1]])    # (B,)
        valid = t_idx < nb[None, :]                            # (T, B)
        gidx = np.where(valid, offsets[None, :] + t_idx, 0).reshape(T * B)
        x_pad = jnp.where(
            jnp.asarray(valid.reshape(T * B, 1)),
            jnp.take(relay_tokens, jnp.asarray(gidx, np.int32), axis=0),
            0.0)
        # Re-view flat (T*B, C) as (B, T, C): reproduces torch's row-major
        # reshape of the padded buffer (commutes with the row-wise qkv Linear).
        x_pad = x_pad.reshape(B, T, C)

        lens = jnp.asarray(batch_num_windows, jnp.int32)
        out = rt_attention_fused(lens, x_pad, self.qkv_w, self.qkv_b,
                                 self.proj_w, self.proj_b,
                                 num_heads=self.num_heads)

        # --- unpad_sequence(batch_first=True) + cat as ONE static gather ----
        out_rows = np.concatenate(
            [b * T + np.arange(n) for b, n in enumerate(nb)]).astype(np.int32)
        return jnp.take(out.reshape(B * T, C), jnp.asarray(out_rows), axis=0)


# --------------------------- pure-JAX reference ------------------------------

def reference_forward(mod, relay_tokens, batch_num_windows):
    """Faithful f32 replication of the torch forward (uses f32 master params)."""
    B, T, C, H = (len(batch_num_windows), int(max(batch_num_windows)),
                  mod.dim, mod.num_heads)
    rt_pad = jnp.zeros((T, B, C), relay_tokens.dtype)
    off = 0
    for b, n in enumerate(batch_num_windows):
        rt_pad = rt_pad.at[:n, b, :].set(relay_tokens[off:off + n])
        off += n
    valid = jnp.arange(T)[None, :] < jnp.asarray(batch_num_windows)[:, None]
    rt_mask = jnp.broadcast_to(
        jnp.where(valid[:, None, :], 0.0, -1e9), (B, T, T)).astype(jnp.float32)
    qkv = rt_pad @ mod.qkv_w_f32 + mod.qkv_b_f32
    qkv = jnp.transpose(qkv.reshape(B, T, 3, H, C // H), (2, 0, 3, 1, 4))
    q, k, v = qkv[0] * mod.scale, qkv[1], qkv[2]
    attn = q @ jnp.swapaxes(k, -2, -1) + rt_mask[:, None]
    attn = jax.nn.softmax(attn, axis=-1)
    out = jnp.transpose(attn @ v, (0, 2, 1, 3)).reshape(B, T, C)
    out = jnp.concatenate(
        [out[b, :n] for b, n in enumerate(batch_num_windows)], axis=0)
    return out @ mod.proj_w_f32 + mod.proj_b_f32


# ----------------------------------- main ------------------------------------

if __name__ == "__main__":
    key = jax.random.PRNGKey(0)
    k_params, k_x = jax.random.split(key)

    # C=128 -> lane-dense output stores; hd=32 keeps Wproj row slices
    # sublane-aligned.  Shapes stay small (14 relay tokens total).
    dim, num_heads, patch_size = 128, 4, 32
    batch_num_windows = [6, 8]          # per-batch window counts at this depth
    total = sum(batch_num_windows)

    relay_tokens = jax.random.normal(k_x, (total, dim), jnp.float32)

    module = RTAttentionOldPallas(dim, patch_size, num_heads, key=k_params)

    out = module(relay_tokens, batch_num_windows)
    out = jax.block_until_ready(out)

    ref = reference_forward(module, relay_tokens, batch_num_windows)
    assert out.shape == (total, dim), out.shape
    # bf16 MXU operands (weights + activations) vs the f32 reference give
    # ~1e-3-level absolute error; tolerance chosen with ample margin.
    assert jnp.allclose(out, ref, rtol=3e-2, atol=3e-2), "mismatch vs reference"

    print("KERNEL_OK")
</pallas_src>

<mosaic_0001>
module attributes {stable_mosaic.version = 11 : i64} {
  func.func @_rt_attn_fused_kernel(%arg0: i32, %arg1: memref<2xi32, #tpu.memory_space<smem>>, %arg2: memref<1x8x128xf32, #tpu.memory_space<vmem>>, %arg3: memref<128x384xbf16, #tpu.memory_space<vmem>>, %arg4: memref<1x384xf32, #tpu.memory_space<vmem>>, %arg5: memref<128x128xbf16, #tpu.memory_space<vmem>>, %arg6: memref<1x128xf32, #tpu.memory_space<vmem>>, %arg7: memref<1x8x128xf32, #tpu.memory_space<vmem>>) attributes {dimension_semantics = [#tpu.dimension_semantics<parallel>], iteration_bounds = array<i64: 2>, scalar_prefetch = 1 : i64, scratch_operands = 0 : i64, tpu.core_type = #tpu.core_type<tc>, window_params = [{transform_indices = @transform_0, window_bounds = array<i64: 1, 8, 128>}, {pipeline_mode = #tpu.pipeline_mode<synchronous>, transform_indices = @transform_1, window_bounds = array<i64: 128, 384>}, {pipeline_mode = #tpu.pipeline_mode<synchronous>, transform_indices = @transform_2, window_bounds = array<i64: 1, 384>}, {pipeline_mode = #tpu.pipeline_mode<synchronous>, transform_indices = @transform_3, window_bounds = array<i64: 128, 128>}, {pipeline_mode = #tpu.pipeline_mode<synchronous>, transform_indices = @transform_4, window_bounds = array<i64: 1, 128>}, {transform_indices = @transform_5, window_bounds = array<i64: 1, 8, 128>}]} {
    %c0 = arith.constant 0 : index
    %c0_0 = arith.constant 0 : index
    %c0_1 = arith.constant 0 : index
    %0 = vector.load %arg2[%c0, %c0_0, %c0_1] : memref<1x8x128xf32, #tpu.memory_space<vmem>>, vector<1x8x128xf32>
    %1 = vector.shape_cast %0 : vector<1x8x128xf32> to vector<8x128xf32>
    %2 = arith.truncf %1 : vector<8x128xf32> to vector<8x128xbf16>
    %c0_2 = arith.constant 0 : index
    %c0_3 = arith.constant 0 : index
    %3 = vector.load %arg3[%c0_2, %c0_3] : memref<128x384xbf16, #tpu.memory_space<vmem>>, vector<128x384xbf16>
    %cst = arith.constant dense<0.000000e+00> : vector<8x384xf32>
    %4 = tpu.matmul %2, %3, %cst {dimension_numbers = #tpu.dot_dimension_numbers<[1], [0], [0], [1], [0, 0, 1, 1], [], []>} : vector<8x128xbf16>, vector<128x384xbf16>, vector<8x384xf32> -> vector<8x384xf32>
    %c0_4 = arith.constant 0 : index
    %c0_5 = arith.constant 0 : index
    %5 = vector.load %arg4[%c0_4, %c0_5] : memref<1x384xf32, #tpu.memory_space<vmem>>, vector<1x384xf32>
    %6 = vector.broadcast %5 : vector<1x384xf32> to vector<8x384xf32>
    %7 = arith.addf %4, %6 : vector<8x384xf32>
    %8 = arith.index_cast %arg0 : i32 to index
    %9 = memref.load %arg1[%8] : memref<2xi32, #tpu.memory_space<smem>>
    %10 = tpu.iota {dimensions = array<i32: 1>} : vector<1x8xi32>
    %11 = vector.broadcast %9 : i32 to vector<1x8xi32>
    %12 = arith.cmpi slt, %10, %11 : vector<1x8xi32>
    %cst_6 = arith.constant 0.000000e+00 : f32
    %cst_7 = arith.constant -1.000000e+09 : f32
    %13 = vector.broadcast %cst_6 : f32 to vector<1x8xf32>
    %14 = vector.broadcast %cst_7 : f32 to vector<1x8xf32>
    %15 = arith.select %12, %13, %14 : vector<1x8xi1>, vector<1x8xf32>
    %c0_8 = arith.constant 0 : index
    %c0_9 = arith.constant 0 : index
    %16 = vector.load %arg6[%c0_8, %c0_9] : memref<1x128xf32, #tpu.memory_space<vmem>>, vector<1x128xf32>
    %17 = vector.shape_cast %16 : vector<1x128xf32> to vector<1x128xf32>
    %18 = vector.broadcast %17 : vector<1x128xf32> to vector<8x128xf32>
    %19 = vector.extract_strided_slice %7 {offsets = [0, 0], sizes = [8, 32], strides = [1, 1]} : vector<8x384xf32> to vector<8x32xf32>
    %20 = arith.truncf %19 : vector<8x32xf32> to vector<8x32xbf16>
    %21 = vector.extract_strided_slice %7 {offsets = [0, 128], sizes = [8, 32], strides = [1, 1]} : vector<8x384xf32> to vector<8x32xf32>
    %22 = arith.truncf %21 : vector<8x32xf32> to vector<8x32xbf16>
    %23 = vector.extract_strided_slice %7 {offsets = [0, 256], sizes = [8, 32], strides = [1, 1]} : vector<8x384xf32> to vector<8x32xf32>
    %24 = arith.truncf %23 : vector<8x32xf32> to vector<8x32xbf16>
    %cst_10 = arith.constant dense<0.000000e+00> : vector<8x8xf32>
    %25 = tpu.matmul %20, %22, %cst_10 {dimension_numbers = #tpu.dot_dimension_numbers<[1], [1], [0], [0], [0, 0, 1, 0], [], []>} : vector<8x32xbf16>, vector<8x32xbf16>, vector<8x8xf32> -> vector<8x8xf32>
    %26 = vector.broadcast %15 : vector<1x8xf32> to vector<8x8xf32>
    %27 = arith.addf %25, %26 : vector<8x8xf32>
    %cst_11 = arith.constant dense<0xFF800000> : vector<8xf32>
    %28 = vector.multi_reduction <maximumf>, %27, %cst_11 [1] : vector<8x8xf32> to vector<8xf32>
    %29 = vector.shape_cast %28 : vector<8xf32> to vector<8x1xf32>
    %30 = vector.broadcast %29 : vector<8x1xf32> to vector<8x8xf32>
    %31 = arith.subf %27, %30 : vector<8x8xf32>
    %32 = math.exp %31 : vector<8x8xf32>
    %cst_12 = arith.constant dense<0.000000e+00> : vector<8xf32>
    %33 = vector.multi_reduction <add>, %32, %cst_12 [1] : vector<8x8xf32> to vector<8xf32>
    %34 = vector.shape_cast %33 : vector<8xf32> to vector<8x1xf32>
    %35 = arith.truncf %32 : vector<8x8xf32> to vector<8x8xbf16>
    %cst_13 = arith.constant dense<0.000000e+00> : vector<8x32xf32>
    %36 = tpu.matmul %35, %24, %cst_13 {dimension_numbers = #tpu.dot_dimension_numbers<[1], [0], [0], [1], [0, 0, 1, 1], [], []>} : vector<8x8xbf16>, vector<8x32xbf16>, vector<8x32xf32> -> vector<8x32xf32>
    %37 = tpu.reciprocal %34 : vector<8x1xf32> -> vector<8x1xf32>
    %38 = vector.broadcast %37 : vector<8x1xf32> to vector<8x32xf32>
    %39 = arith.mulf %36, %38 : vector<8x32xf32>
    %40 = arith.truncf %39 : vector<8x32xf32> to vector<8x32xbf16>
    %c0_14 = arith.constant 0 : index
    %c0_15 = arith.constant 0 : index
    %41 = vector.load %arg5[%c0_14, %c0_15] : memref<128x128xbf16, #tpu.memory_space<vmem>>, vector<32x128xbf16>
    %cst_16 = arith.constant dense<0.000000e+00> : vector<8x128xf32>
    %42 = tpu.matmul %40, %41, %cst_16 {dimension_numbers = #tpu.dot_dimension_numbers<[1], [0], [0], [1], [0, 0, 1, 1], [], []>} : vector<8x32xbf16>, vector<32x128xbf16>, vector<8x128xf32> -> vector<8x128xf32>
    %43 = arith.addf %18, %42 : vector<8x128xf32>
    %44 = vector.extract_strided_slice %7 {offsets = [0, 32], sizes = [8, 32], strides = [1, 1]} : vector<8x384xf32> to vector<8x32xf32>
    %45 = arith.truncf %44 : vector<8x32xf32> to vector<8x32xbf16>
    %46 = vector.extract_strided_slice %7 {offsets = [0, 160], sizes = [8, 32], strides = [1, 1]} : vector<8x384xf32> to vector<8x32xf32>
    %47 = arith.truncf %46 : vector<8x32xf32> to vector<8x32xbf16>
    %48 = vector.extract_strided_slice %7 {offsets = [0, 288], sizes = [8, 32], strides = [1, 1]} : vector<8x384xf32> to vector<8x32xf32>
    %49 = arith.truncf %48 : vector<8x32xf32> to vector<8x32xbf16>
    %cst_17 = arith.constant dense<0.000000e+00> : vector<8x8xf32>
    %50 = tpu.matmul %45, %47, %cst_17 {dimension_numbers = #tpu.dot_dimension_numbers<[1], [1], [0], [0], [0, 0, 1, 0], [], []>} : vector<8x32xbf16>, vector<8x32xbf16>, vector<8x8xf32> -> vector<8x8xf32>
    %51 = vector.broadcast %15 : vector<1x8xf32> to vector<8x8xf32>
    %52 = arith.addf %50, %51 : vector<8x8xf32>
    %cst_18 = arith.constant dense<0xFF800000> : vector<8xf32>
    %53 = vector.multi_reduction <maximumf>, %52, %cst_18 [1] : vector<8x8xf32> to vector<8xf32>
    %54 = vector.shape_cast %53 : vector<8xf32> to vector<8x1xf32>
    %55 = vector.broadcast %54 : vector<8x1xf32> to vector<8x8xf32>
    %56 = arith.subf %52, %55 : vector<8x8xf32>
    %57 = math.exp %56 : vector<8x8xf32>
    %cst_19 = arith.constant dense<0.000000e+00> : vector<8xf32>
    %58 = vector.multi_reduction <add>, %57, %cst_19 [1] : vector<8x8xf32> to vector<8xf32>
    %59 = vector.shape_cast %58 : vector<8xf32> to vector<8x1xf32>
    %60 = arith.truncf %57 : vector<8x8xf32> to vector<8x8xbf16>
    %cst_20 = arith.constant dense<0.000000e+00> : vector<8x32xf32>
    %61 = tpu.matmul %60, %49, %cst_20 {dimension_numbers = #tpu.dot_dimension_numbers<[1], [0], [0], [1], [0, 0, 1, 1], [], []>} : vector<8x8xbf16>, vector<8x32xbf16>, vector<8x32xf32> -> vector<8x32xf32>
    %62 = tpu.reciprocal %59 : vector<8x1xf32> -> vector<8x1xf32>
    %63 = vector.broadcast %62 : vector<8x1xf32> to vector<8x32xf32>
    %64 = arith.mulf %61, %63 : vector<8x32xf32>
    %65 = arith.truncf %64 : vector<8x32xf32> to vector<8x32xbf16>
    %c32 = arith.constant 32 : index
    %c0_21 = arith.constant 0 : index
    %66 = vector.load %arg5[%c32, %c0_21] : memref<128x128xbf16, #tpu.memory_space<vmem>>, vector<32x128xbf16>
    %cst_22 = arith.constant dense<0.000000e+00> : vector<8x128xf32>
    %67 = tpu.matmul %65, %66, %cst_22 {dimension_numbers = #tpu.dot_dimension_numbers<[1], [0], [0], [1], [0, 0, 1, 1], [], []>} : vector<8x32xbf16>, vector<32x128xbf16>, vector<8x128xf32> -> vector<8x128xf32>
    %68 = arith.addf %43, %67 : vector<8x128xf32>
    %69 = vector.extract_strided_slice %7 {offsets = [0, 64], sizes = [8, 32], strides = [1, 1]} : vector<8x384xf32> to vector<8x32xf32>
    %70 = arith.truncf %69 : vector<8x32xf32> to vector<8x32xbf16>
    %71 = vector.extract_strided_slice %7 {offsets = [0, 192], sizes = [8, 32], strides = [1, 1]} : vector<8x384xf32> to vector<8x32xf32>
    %72 = arith.truncf %71 : vector<8x32xf32> to vector<8x32xbf16>
    %73 = vector.extract_strided_slice %7 {offsets = [0, 320], sizes = [8, 32], strides = [1, 1]} : vector<8x384xf32> to vector<8x32xf32>
    %74 = arith.truncf %73 : vector<8x32xf32> to vector<8x32xbf16>
    %cst_23 = arith.constant dense<0.000000e+00> : vector<8x8xf32>
    %75 = tpu.matmul %70, %72, %cst_23 {dimension_numbers = #tpu.dot_dimension_numbers<[1], [1], [0], [0], [0, 0, 1, 0], [], []>} : vector<8x32xbf16>, vector<8x32xbf16>, vector<8x8xf32> -> vector<8x8xf32>
    %76 = vector.broadcast %15 : vector<1x8xf32> to vector<8x8xf32>
    %77 = arith.addf %75, %76 : vector<8x8xf32>
    %cst_24 = arith.constant dense<0xFF800000> : vector<8xf32>
    %78 = vector.multi_reduction <maximumf>, %77, %cst_24 [1] : vector<8x8xf32> to vector<8xf32>
    %79 = vector.shape_cast %78 : vector<8xf32> to vector<8x1xf32>
    %80 = vector.broadcast %79 : vector<8x1xf32> to vector<8x8xf32>
    %81 = arith.subf %77, %80 : vector<8x8xf32>
    %82 = math.exp %81 : vector<8x8xf32>
    %cst_25 = arith.constant dense<0.000000e+00> : vector<8xf32>
    %83 = vector.multi_reduction <add>, %82, %cst_25 [1] : vector<8x8xf32> to vector<8xf32>
    %84 = vector.shape_cast %83 : vector<8xf32> to vector<8x1xf32>
    %85 = arith.truncf %82 : vector<8x8xf32> to vector<8x8xbf16>
    %cst_26 = arith.constant dense<0.000000e+00> : vector<8x32xf32>
    %86 = tpu.matmul %85, %74, %cst_26 {dimension_numbers = #tpu.dot_dimension_numbers<[1], [0], [0], [1], [0, 0, 1, 1], [], []>} : vector<8x8xbf16>, vector<8x32xbf16>, vector<8x32xf32> -> vector<8x32xf32>
    %87 = tpu.reciprocal %84 : vector<8x1xf32> -> vector<8x1xf32>
    %88 = vector.broadcast %87 : vector<8x1xf32> to vector<8x32xf32>
    %89 = arith.mulf %86, %88 : vector<8x32xf32>
    %90 = arith.truncf %89 : vector<8x32xf32> to vector<8x32xbf16>
    %c64 = arith.constant 64 : index
    %c0_27 = arith.constant 0 : index
    %91 = vector.load %arg5[%c64, %c0_27] : memref<128x128xbf16, #tpu.memory_space<vmem>>, vector<32x128xbf16>
    %cst_28 = arith.constant dense<0.000000e+00> : vector<8x128xf32>
    %92 = tpu.matmul %90, %91, %cst_28 {dimension_numbers = #tpu.dot_dimension_numbers<[1], [0], [0], [1], [0, 0, 1, 1], [], []>} : vector<8x32xbf16>, vector<32x128xbf16>, vector<8x128xf32> -> vector<8x128xf32>
    %93 = arith.addf %68, %92 : vector<8x128xf32>
    %94 = vector.extract_strided_slice %7 {offsets = [0, 96], sizes = [8, 32], strides = [1, 1]} : vector<8x384xf32> to vector<8x32xf32>
    %95 = arith.truncf %94 : vector<8x32xf32> to vector<8x32xbf16>
    %96 = vector.extract_strided_slice %7 {offsets = [0, 224], sizes = [8, 32], strides = [1, 1]} : vector<8x384xf32> to vector<8x32xf32>
    %97 = arith.truncf %96 : vector<8x32xf32> to vector<8x32xbf16>
    %98 = vector.extract_strided_slice %7 {offsets = [0, 352], sizes = [8, 32], strides = [1, 1]} : vector<8x384xf32> to vector<8x32xf32>
    %99 = arith.truncf %98 : vector<8x32xf32> to vector<8x32xbf16>
    %cst_29 = arith.constant dense<0.000000e+00> : vector<8x8xf32>
    %100 = tpu.matmul %95, %97, %cst_29 {dimension_numbers = #tpu.dot_dimension_numbers<[1], [1], [0], [0], [0, 0, 1, 0], [], []>} : vector<8x32xbf16>, vector<8x32xbf16>, vector<8x8xf32> -> vector<8x8xf32>
    %101 = vector.broadcast %15 : vector<1x8xf32> to vector<8x8xf32>
    %102 = arith.addf %100, %101 : vector<8x8xf32>
    %cst_30 = arith.constant dense<0xFF800000> : vector<8xf32>
    %103 = vector.multi_reduction <maximumf>, %102, %cst_30 [1] : vector<8x8xf32> to vector<8xf32>
    %104 = vector.shape_cast %103 : vector<8xf32> to vector<8x1xf32>
    %105 = vector.broadcast %104 : vector<8x1xf32> to vector<8x8xf32>
    %106 = arith.subf %102, %105 : vector<8x8xf32>
    %107 = math.exp %106 : vector<8x8xf32>
    %cst_31 = arith.constant dense<0.000000e+00> : vector<8xf32>
    %108 = vector.multi_reduction <add>, %107, %cst_31 [1] : vector<8x8xf32> to vector<8xf32>
    %109 = vector.shape_cast %108 : vector<8xf32> to vector<8x1xf32>
    %110 = arith.truncf %107 : vector<8x8xf32> to vector<8x8xbf16>
    %cst_32 = arith.constant dense<0.000000e+00> : vector<8x32xf32>
    %111 = tpu.matmul %110, %99, %cst_32 {dimension_numbers = #tpu.dot_dimension_numbers<[1], [0], [0], [1], [0, 0, 1, 1], [], []>} : vector<8x8xbf16>, vector<8x32xbf16>, vector<8x32xf32> -> vector<8x32xf32>
    %112 = tpu.reciprocal %109 : vector<8x1xf32> -> vector<8x1xf32>
    %113 = vector.broadcast %112 : vector<8x1xf32> to vector<8x32xf32>
    %114 = arith.mulf %111, %113 : vector<8x32xf32>
    %115 = arith.truncf %114 : vector<8x32xf32> to vector<8x32xbf16>
    %c96 = arith.constant 96 : index
    %c0_33 = arith.constant 0 : index
    %116 = vector.load %arg5[%c96, %c0_33] : memref<128x128xbf16, #tpu.memory_space<vmem>>, vector<32x128xbf16>
    %cst_34 = arith.constant dense<0.000000e+00> : vector<8x128xf32>
    %117 = tpu.matmul %115, %116, %cst_34 {dimension_numbers = #tpu.dot_dimension_numbers<[1], [0], [0], [1], [0, 0, 1, 1], [], []>} : vector<8x32xbf16>, vector<32x128xbf16>, vector<8x128xf32> -> vector<8x128xf32>
    %118 = arith.addf %93, %117 : vector<8x128xf32>
    %c0_35 = arith.constant 0 : index
    %c0_36 = arith.constant 0 : index
    %c0_37 = arith.constant 0 : index
    %119 = vector.load %arg7[%c0_35, %c0_36, %c0_37] : memref<1x8x128xf32, #tpu.memory_space<vmem>>, vector<1x8x128xf32>
    %120 = vector.shape_cast %119 : vector<1x8x128xf32> to vector<8x128xf32>
    %121 = vector.shape_cast %118 : vector<8x128xf32> to vector<1x8x128xf32>
    tpu.vector_store %arg7[%c0_35, %c0_36, %c0_37], %121 {strides = array<i32>} : memref<1x8x128xf32, #tpu.memory_space<vmem>>, vector<1x8x128xf32>,
    return
  }
  func.func @transform_0(%arg0: i32, %arg1: memref<2xi32, #tpu.memory_space<smem>>) -> (i32, i32, i32) {
    %c0_i32 = arith.constant 0 : i32
    %c0_i32_0 = arith.constant 0 : i32
    %c0_i32_1 = arith.constant 0 : i32
    return %arg0, %c0_i32, %c0_i32_0 : i32, i32, i32
  }
  func.func @transform_1(%arg0: i32, %arg1: memref<2xi32, #tpu.memory_space<smem>>) -> (i32, i32) {
    %c0_i32 = arith.constant 0 : i32
    %c0_i32_0 = arith.constant 0 : i32
    %c0_i32_1 = arith.constant 0 : i32
    return %c0_i32, %c0_i32_0 : i32, i32
  }
  func.func @transform_2(%arg0: i32, %arg1: memref<2xi32, #tpu.memory_space<smem>>) -> (i32, i32) {
    %c0_i32 = arith.constant 0 : i32
    %c0_i32_0 = arith.constant 0 : i32
    %c0_i32_1 = arith.constant 0 : i32
    return %c0_i32, %c0_i32_0 : i32, i32
  }
  func.func @transform_3(%arg0: i32, %arg1: memref<2xi32, #tpu.memory_space<smem>>) -> (i32, i32) {
    %c0_i32 = arith.constant 0 : i32
    %c0_i32_0 = arith.constant 0 : i32
    %c0_i32_1 = arith.constant 0 : i32
    return %c0_i32, %c0_i32_0 : i32, i32
  }
  func.func @transform_4(%arg0: i32, %arg1: memref<2xi32, #tpu.memory_space<smem>>) -> (i32, i32) {
    %c0_i32 = arith.constant 0 : i32
    %c0_i32_0 = arith.constant 0 : i32
    %c0_i32_1 = arith.constant 0 : i32
    return %c0_i32, %c0_i32_0 : i32, i32
  }
  func.func @transform_5(%arg0: i32, %arg1: memref<2xi32, #tpu.memory_space<smem>>) -> (i32, i32, i32) {
    %c0_i32 = arith.constant 0 : i32
    %c0_i32_0 = arith.constant 0 : i32
    %c0_i32_1 = arith.constant 0 : i32
    return %arg0, %c0_i32, %c0_i32_0 : i32, i32, i32
  }
}

module attributes {stable_mosaic.version = 11 : i64} {
  func.func @_rt_attn_fused_kernel(%arg0: i32, %arg1: memref<2xi32, #tpu.memory_space<smem>>, %arg2: memref<1x8x128xf32, #tpu.memory_space<vmem>>, %arg3: memref<128x384xbf16, #tpu.memory_space<vmem>>, %arg4: memref<1x384xf32, #tpu.memory_space<vmem>>, %arg5: memref<128x128xbf16, #tpu.memory_space<vmem>>, %arg6: memref<1x128xf32, #tpu.memory_space<vmem>>, %arg7: memref<1x8x128xf32, #tpu.memory_space<vmem>>) attributes {dimension_semantics = [#tpu.dimension_semantics<parallel>], iteration_bounds = array<i64: 2>, scalar_prefetch = 1 : i64, scratch_operands = 0 : i64, tpu.core_type = #tpu.core_type<tc>, window_params = [{transform_indices = @transform_0, window_bounds = array<i64: 1, 8, 128>}, {pipeline_mode = #tpu.pipeline_mode<synchronous>, transform_indices = @transform_1, window_bounds = array<i64: 128, 384>}, {pipeline_mode = #tpu.pipeline_mode<synchronous>, transform_indices = @transform_2, window_bounds = array<i64: 1, 384>}, {pipeline_mode = #tpu.pipeline_mode<synchronous>, transform_indices = @transform_3, window_bounds = array<i64: 128, 128>}, {pipeline_mode = #tpu.pipeline_mode<synchronous>, transform_indices = @transform_4, window_bounds = array<i64: 1, 128>}, {transform_indices = @transform_5, window_bounds = array<i64: 1, 8, 128>}]} {
    %c0 = arith.constant 0 : index
    %c0_0 = arith.constant 0 : index
    %c0_1 = arith.constant 0 : index
    %0 = vector.load %arg2[%c0, %c0_0, %c0_1] : memref<1x8x128xf32, #tpu.memory_space<vmem>>, vector<1x8x128xf32>
    %1 = vector.shape_cast %0 : vector<1x8x128xf32> to vector<8x128xf32>
    %2 = arith.truncf %1 : vector<8x128xf32> to vector<8x128xbf16>
    %c0_2 = arith.constant 0 : index
    %c0_3 = arith.constant 0 : index
    %3 = vector.load %arg3[%c0_2, %c0_3] : memref<128x384xbf16, #tpu.memory_space<vmem>>, vector<128x384xbf16>
    %cst = arith.constant dense<0.000000e+00> : vector<8x384xf32>
    %4 = tpu.matmul %2, %3, %cst {dimension_numbers = #tpu.dot_dimension_numbers<[1], [0], [0], [1], [0, 0, 1, 1], [], []>} : vector<8x128xbf16>, vector<128x384xbf16>, vector<8x384xf32> -> vector<8x384xf32>
    %c0_4 = arith.constant 0 : index
    %c0_5 = arith.constant 0 : index
    %5 = vector.load %arg4[%c0_4, %c0_5] : memref<1x384xf32, #tpu.memory_space<vmem>>, vector<1x384xf32>
    %6 = vector.broadcast %5 : vector<1x384xf32> to vector<8x384xf32>
    %7 = arith.addf %4, %6 : vector<8x384xf32>
    %8 = arith.index_cast %arg0 : i32 to index
    %9 = memref.load %arg1[%8] : memref<2xi32, #tpu.memory_space<smem>>
    %10 = tpu.iota {dimensions = array<i32: 1>} : vector<1x8xi32>
    %11 = vector.broadcast %9 : i32 to vector<1x8xi32>
    %12 = arith.cmpi slt, %10, %11 : vector<1x8xi32>
    %cst_6 = arith.constant 0.000000e+00 : f32
    %cst_7 = arith.constant -1.000000e+09 : f32
    %13 = vector.broadcast %cst_6 : f32 to vector<1x8xf32>
    %14 = vector.broadcast %cst_7 : f32 to vector<1x8xf32>
    %15 = arith.select %12, %13, %14 : vector<1x8xi1>, vector<1x8xf32>
    %c0_8 = arith.constant 0 : index
    %c0_9 = arith.constant 0 : index
    %16 = vector.load %arg6[%c0_8, %c0_9] : memref<1x128xf32, #tpu.memory_space<vmem>>, vector<1x128xf32>
    %17 = vector.shape_cast %16 : vector<1x128xf32> to vector<1x128xf32>
    %18 = vector.broadcast %17 : vector<1x128xf32> to vector<8x128xf32>
    %19 = vector.extract_strided_slice %7 {offsets = [0, 0], sizes = [8, 32], strides = [1, 1]} : vector<8x384xf32> to vector<8x32xf32>
    %20 = arith.truncf %19 : vector<8x32xf32> to vector<8x32xbf16>
    %21 = vector.extract_strided_slice %7 {offsets = [0, 128], sizes = [8, 32], strides = [1, 1]} : vector<8x384xf32> to vector<8x32xf32>
    %22 = arith.truncf %21 : vector<8x32xf32> to vector<8x32xbf16>
    %23 = vector.extract_strided_slice %7 {offsets = [0, 256], sizes = [8, 32], strides = [1, 1]} : vector<8x384xf32> to vector<8x32xf32>
    %24 = arith.truncf %23 : vector<8x32xf32> to vector<8x32xbf16>
    %cst_10 = arith.constant dense<0.000000e+00> : vector<8x8xf32>
    %25 = tpu.matmul %20, %22, %cst_10 {dimension_numbers = #tpu.dot_dimension_numbers<[1], [1], [0], [0], [0, 0, 1, 0], [], []>} : vector<8x32xbf16>, vector<8x32xbf16>, vector<8x8xf32> -> vector<8x8xf32>
    %26 = vector.broadcast %15 : vector<1x8xf32> to vector<8x8xf32>
    %27 = arith.addf %25, %26 : vector<8x8xf32>
    %cst_11 = arith.constant dense<0xFF800000> : vector<8xf32>
    %28 = vector.multi_reduction <maximumf>, %27, %cst_11 [1] : vector<8x8xf32> to vector<8xf32>
    %29 = vector.shape_cast %28 : vector<8xf32> to vector<8x1xf32>
    %30 = vector.broadcast %29 : vector<8x1xf32> to vector<8x8xf32>
    %31 = arith.subf %27, %30 : vector<8x8xf32>
    %32 = math.exp %31 : vector<8x8xf32>
    %cst_12 = arith.constant dense<0.000000e+00> : vector<8xf32>
    %33 = vector.multi_reduction <add>, %32, %cst_12 [1] : vector<8x8xf32> to vector<8xf32>
    %34 = vector.shape_cast %33 : vector<8xf32> to vector<8x1xf32>
    %35 = arith.truncf %32 : vector<8x8xf32> to vector<8x8xbf16>
    %cst_13 = arith.constant dense<0.000000e+00> : vector<8x32xf32>
    %36 = tpu.matmul %35, %24, %cst_13 {dimension_numbers = #tpu.dot_dimension_numbers<[1], [0], [0], [1], [0, 0, 1, 1], [], []>} : vector<8x8xbf16>, vector<8x32xbf16>, vector<8x32xf32> -> vector<8x32xf32>
    %37 = tpu.reciprocal %34 : vector<8x1xf32> -> vector<8x1xf32>
    %38 = vector.broadcast %37 : vector<8x1xf32> to vector<8x32xf32>
    %39 = arith.mulf %36, %38 : vector<8x32xf32>
    %40 = arith.truncf %39 : vector<8x32xf32> to vector<8x32xbf16>
    %c0_14 = arith.constant 0 : index
    %c0_15 = arith.constant 0 : index
    %41 = vector.load %arg5[%c0_14, %c0_15] : memref<128x128xbf16, #tpu.memory_space<vmem>>, vector<32x128xbf16>
    %cst_16 = arith.constant dense<0.000000e+00> : vector<8x128xf32>
    %42 = tpu.matmul %40, %41, %cst_16 {dimension_numbers = #tpu.dot_dimension_numbers<[1], [0], [0], [1], [0, 0, 1, 1], [], []>} : vector<8x32xbf16>, vector<32x128xbf16>, vector<8x128xf32> -> vector<8x128xf32>
    %43 = arith.addf %18, %42 : vector<8x128xf32>
    %44 = vector.extract_strided_slice %7 {offsets = [0, 32], sizes = [8, 32], strides = [1, 1]} : vector<8x384xf32> to vector<8x32xf32>
    %45 = arith.truncf %44 : vector<8x32xf32> to vector<8x32xbf16>
    %46 = vector.extract_strided_slice %7 {offsets = [0, 160], sizes = [8, 32], strides = [1, 1]} : vector<8x384xf32> to vector<8x32xf32>
    %47 = arith.truncf %46 : vector<8x32xf32> to vector<8x32xbf16>
    %48 = vector.extract_strided_slice %7 {offsets = [0, 288], sizes = [8, 32], strides = [1, 1]} : vector<8x384xf32> to vector<8x32xf32>
    %49 = arith.truncf %48 : vector<8x32xf32> to vector<8x32xbf16>
    %cst_17 = arith.constant dense<0.000000e+00> : vector<8x8xf32>
    %50 = tpu.matmul %45, %47, %cst_17 {dimension_numbers = #tpu.dot_dimension_numbers<[1], [1], [0], [0], [0, 0, 1, 0], [], []>} : vector<8x32xbf16>, vector<8x32xbf16>, vector<8x8xf32> -> vector<8x8xf32>
    %51 = vector.broadcast %15 : vector<1x8xf32> to vector<8x8xf32>
    %52 = arith.addf %50, %51 : vector<8x8xf32>
    %cst_18 = arith.constant dense<0xFF800000> : vector<8xf32>
    %53 = vector.multi_reduction <maximumf>, %52, %cst_18 [1] : vector<8x8xf32> to vector<8xf32>
    %54 = vector.shape_cast %53 : vector<8xf32> to vector<8x1xf32>
    %55 = vector.broadcast %54 : vector<8x1xf32> to vector<8x8xf32>
    %56 = arith.subf %52, %55 : vector<8x8xf32>
    %57 = math.exp %56 : vector<8x8xf32>
    %cst_19 = arith.constant dense<0.000000e+00> : vector<8xf32>
    %58 = vector.multi_reduction <add>, %57, %cst_19 [1] : vector<8x8xf32> to vector<8xf32>
    %59 = vector.shape_cast %58 : vector<8xf32> to vector<8x1xf32>
    %60 = arith.truncf %57 : vector<8x8xf32> to vector<8x8xbf16>
    %cst_20 = arith.constant dense<0.000000e+00> : vector<8x32xf32>
    %61 = tpu.matmul %60, %49, %cst_20 {dimension_numbers = #tpu.dot_dimension_numbers<[1], [0], [0], [1], [0, 0, 1, 1], [], []>} : vector<8x8xbf16>, vector<8x32xbf16>, vector<8x32xf32> -> vector<8x32xf32>
    %62 = tpu.reciprocal %59 : vector<8x1xf32> -> vector<8x1xf32>
    %63 = vector.broadcast %62 : vector<8x1xf32> to vector<8x32xf32>
    %64 = arith.mulf %61, %63 : vector<8x32xf32>
    %65 = arith.truncf %64 : vector<8x32xf32> to vector<8x32xbf16>
    %c32 = arith.constant 32 : index
    %c0_21 = arith.constant 0 : index
    %66 = vector.load %arg5[%c32, %c0_21] : memref<128x128xbf16, #tpu.memory_space<vmem>>, vector<32x128xbf16>
    %cst_22 = arith.constant dense<0.000000e+00> : vector<8x128xf32>
    %67 = tpu.matmul %65, %66, %cst_22 {dimension_numbers = #tpu.dot_dimension_numbers<[1], [0], [0], [1], [0, 0, 1, 1], [], []>} : vector<8x32xbf16>, vector<32x128xbf16>, vector<8x128xf32> -> vector<8x128xf32>
    %68 = arith.addf %43, %67 : vector<8x128xf32>
    %69 = vector.extract_strided_slice %7 {offsets = [0, 64], sizes = [8, 32], strides = [1, 1]} : vector<8x384xf32> to vector<8x32xf32>
    %70 = arith.truncf %69 : vector<8x32xf32> to vector<8x32xbf16>
    %71 = vector.extract_strided_slice %7 {offsets = [0, 192], sizes = [8, 32], strides = [1, 1]} : vector<8x384xf32> to vector<8x32xf32>
    %72 = arith.truncf %71 : vector<8x32xf32> to vector<8x32xbf16>
    %73 = vector.extract_strided_slice %7 {offsets = [0, 320], sizes = [8, 32], strides = [1, 1]} : vector<8x384xf32> to vector<8x32xf32>
    %74 = arith.truncf %73 : vector<8x32xf32> to vector<8x32xbf16>
    %cst_23 = arith.constant dense<0.000000e+00> : vector<8x8xf32>
    %75 = tpu.matmul %70, %72, %cst_23 {dimension_numbers = #tpu.dot_dimension_numbers<[1], [1], [0], [0], [0, 0, 1, 0], [], []>} : vector<8x32xbf16>, vector<8x32xbf16>, vector<8x8xf32> -> vector<8x8xf32>
    %76 = vector.broadcast %15 : vector<1x8xf32> to vector<8x8xf32>
    %77 = arith.addf %75, %76 : vector<8x8xf32>
    %cst_24 = arith.constant dense<0xFF800000> : vector<8xf32>
    %78 = vector.multi_reduction <maximumf>, %77, %cst_24 [1] : vector<8x8xf32> to vector<8xf32>
    %79 = vector.shape_cast %78 : vector<8xf32> to vector<8x1xf32>
    %80 = vector.broadcast %79 : vector<8x1xf32> to vector<8x8xf32>
    %81 = arith.subf %77, %80 : vector<8x8xf32>
    %82 = math.exp %81 : vector<8x8xf32>
    %cst_25 = arith.constant dense<0.000000e+00> : vector<8xf32>
    %83 = vector.multi_reduction <add>, %82, %cst_25 [1] : vector<8x8xf32> to vector<8xf32>
    %84 = vector.shape_cast %83 : vector<8xf32> to vector<8x1xf32>
    %85 = arith.truncf %82 : vector<8x8xf32> to vector<8x8xbf16>
    %cst_26 = arith.constant dense<0.000000e+00> : vector<8x32xf32>
    %86 = tpu.matmul %85, %74, %cst_26 {dimension_numbers = #tpu.dot_dimension_numbers<[1], [0], [0], [1], [0, 0, 1, 1], [], []>} : vector<8x8xbf16>, vector<8x32xbf16>, vector<8x32xf32> -> vector<8x32xf32>
    %87 = tpu.reciprocal %84 : vector<8x1xf32> -> vector<8x1xf32>
    %88 = vector.broadcast %87 : vector<8x1xf32> to vector<8x32xf32>
    %89 = arith.mulf %86, %88 : vector<8x32xf32>
    %90 = arith.truncf %89 : vector<8x32xf32> to vector<8x32xbf16>
    %c64 = arith.constant 64 : index
    %c0_27 = arith.constant 0 : index
    %91 = vector.load %arg5[%c64, %c0_27] : memref<128x128xbf16, #tpu.memory_space<vmem>>, vector<32x128xbf16>
    %cst_28 = arith.constant dense<0.000000e+00> : vector<8x128xf32>
    %92 = tpu.matmul %90, %91, %cst_28 {dimension_numbers = #tpu.dot_dimension_numbers<[1], [0], [0], [1], [0, 0, 1, 1], [], []>} : vector<8x32xbf16>, vector<32x128xbf16>, vector<8x128xf32> -> vector<8x128xf32>
    %93 = arith.addf %68, %92 : vector<8x128xf32>
    %94 = vector.extract_strided_slice %7 {offsets = [0, 96], sizes = [8, 32], strides = [1, 1]} : vector<8x384xf32> to vector<8x32xf32>
    %95 = arith.truncf %94 : vector<8x32xf32> to vector<8x32xbf16>
    %96 = vector.extract_strided_slice %7 {offsets = [0, 224], sizes = [8, 32], strides = [1, 1]} : vector<8x384xf32> to vector<8x32xf32>
    %97 = arith.truncf %96 : vector<8x32xf32> to vector<8x32xbf16>
    %98 = vector.extract_strided_slice %7 {offsets = [0, 352], sizes = [8, 32], strides = [1, 1]} : vector<8x384xf32> to vector<8x32xf32>
    %99 = arith.truncf %98 : vector<8x32xf32> to vector<8x32xbf16>
    %cst_29 = arith.constant dense<0.000000e+00> : vector<8x8xf32>
    %100 = tpu.matmul %95, %97, %cst_29 {dimension_numbers = #tpu.dot_dimension_numbers<[1], [1], [0], [0], [0, 0, 1, 0], [], []>} : vector<8x32xbf16>, vector<8x32xbf16>, vector<8x8xf32> -> vector<8x8xf32>
    %101 = vector.broadcast %15 : vector<1x8xf32> to vector<8x8xf32>
    %102 = arith.addf %100, %101 : vector<8x8xf32>
    %cst_30 = arith.constant dense<0xFF800000> : vector<8xf32>
    %103 = vector.multi_reduction <maximumf>, %102, %cst_30 [1] : vector<8x8xf32> to vector<8xf32>
    %104 = vector.shape_cast %103 : vector<8xf32> to vector<8x1xf32>
    %105 = vector.broadcast %104 : vector<8x1xf32> to vector<8x8xf32>
    %106 = arith.subf %102, %105 : vector<8x8xf32>
    %107 = math.exp %106 : vector<8x8xf32>
    %cst_31 = arith.constant dense<0.000000e+00> : vector<8xf32>
    %108 = vector.multi_reduction <add>, %107, %cst_31 [1] : vector<8x8xf32> to vector<8xf32>
    %109 = vector.shape_cast %108 : vector<8xf32> to vector<8x1xf32>
    %110 = arith.truncf %107 : vector<8x8xf32> to vector<8x8xbf16>
    %cst_32 = arith.constant dense<0.000000e+00> : vector<8x32xf32>
    %111 = tpu.matmul %110, %99, %cst_32 {dimension_numbers = #tpu.dot_dimension_numbers<[1], [0], [0], [1], [0, 0, 1, 1], [], []>} : vector<8x8xbf16>, vector<8x32xbf16>, vector<8x32xf32> -> vector<8x32xf32>
    %112 = tpu.reciprocal %109 : vector<8x1xf32> -> vector<8x1xf32>
    %113 = vector.broadcast %112 : vector<8x1xf32> to vector<8x32xf32>
    %114 = arith.mulf %111, %113 : vector<8x32xf32>
    %115 = arith.truncf %114 : vector<8x32xf32> to vector<8x32xbf16>
    %c96 = arith.constant 96 : index
    %c0_33 = arith.constant 0 : index
    %116 = vector.load %arg5[%c96, %c0_33] : memref<128x128xbf16, #tpu.memory_space<vmem>>, vector<32x128xbf16>
    %cst_34 = arith.constant dense<0.000000e+00> : vector<8x128xf32>
    %117 = tpu.matmul %115, %116, %cst_34 {dimension_numbers = #tpu.dot_dimension_numbers<[1], [0], [0], [1], [0, 0, 1, 1], [], []>} : vector<8x32xbf16>, vector<32x128xbf16>, vector<8x128xf32> -> vector<8x128xf32>
    %118 = arith.addf %93, %117 : vector<8x128xf32>
    %c0_35 = arith.constant 0 : index
    %c0_36 = arith.constant 0 : index
    %c0_37 = arith.constant 0 : index
    %119 = vector.load %arg7[%c0_35, %c0_36, %c0_37] : memref<1x8x128xf32, #tpu.memory_space<vmem>>, vector<1x8x128xf32>
    %120 = vector.shape_cast %119 : vector<1x8x128xf32> to vector<8x128xf32>
    %121 = vector.shape_cast %118 : vector<8x128xf32> to vector<1x8x128xf32>
    tpu.vector_store %arg7[%c0_35, %c0_36, %c0_37], %121 {strides = array<i32>} : memref<1x8x128xf32, #tpu.memory_space<vmem>>, vector<1x8x128xf32>,
    return
  }
  func.func @transform_0(%arg0: i32, %arg1: memref<2xi32, #tpu.memory_space<smem>>) -> (i32, i32, i32) {
    %c0_i32 = arith.constant 0 : i32
    %c0_i32_0 = arith.constant 0 : i32
    %c0_i32_1 = arith.constant 0 : i32
    return %arg0, %c0_i32, %c0_i32_0 : i32, i32, i32
  }
  func.func @transform_1(%arg0: i32, %arg1: memref<2xi32, #tpu.memory_space<smem>>) -> (i32, i32) {
    %c0_i32 = arith.constant 0 : i32
    %c0_i32_0 = arith.constant 0 : i32
    %c0_i32_1 = arith.constant 0 : i32
    return %c0_i32, %c0_i32_0 : i32, i32
  }
  func.func @transform_2(%arg0: i32, %arg1: memref<2xi32, #tpu.memory_space<smem>>) -> (i32, i32) {
    %c0_i32 = arith.constant 0 : i32
    %c0_i32_0 = arith.constant 0 : i32
    %c0_i32_1 = arith.constant 0 : i32
    return %c0_i32, %c0_i32_0 : i32, i32
  }
  func.func @transform_3(%arg0: i32, %arg1: memref<2xi32, #tpu.memory_space<smem>>) -> (i32, i32) {
    %c0_i32 = arith.constant 0 : i32
    %c0_i32_0 = arith.constant 0 : i32
    %c0_i32_1 = arith.constant 0 : i32
    return %c0_i32, %c0_i32_0 : i32, i32
  }
  func.func @transform_4(%arg0: i32, %arg1: memref<2xi32, #tpu.memory_space<smem>>) -> (i32, i32) {
    %c0_i32 = arith.constant 0 : i32
    %c0_i32_0 = arith.constant 0 : i32
    %c0_i32_1 = arith.constant 0 : i32
    return %c0_i32, %c0_i32_0 : i32, i32
  }
  func.func @transform_5(%arg0: i32, %arg1: memref<2xi32, #tpu.memory_space<smem>>) -> (i32, i32, i32) {
    %c0_i32 = arith.constant 0 : i32
    %c0_i32_0 = arith.constant 0 : i32
    %c0_i32_1 = arith.constant 0 : i32
    return %arg0, %c0_i32, %c0_i32_0 : i32, i32, i32
  }
}

</mosaic_0001>

<llo_original>
// kernel: tpu_custom_call.1
$region0: #{tpu_custom_call.1}
  #allocation0 [shape = 'u32[]', space=smem, size = 0x4, offset = 0x4, fixed_abs, tag = 'smem constant byte address 0x4 - core index']
  #allocation1 [shape = 'u32[144,128]{1,0:T(1,128)}', space=vmem, size = 0x12000, scoped, tag = 'internal scratch']
  #allocation2 [shape = 's32[1]{0}', space=sflag, size = 0x4, scoped, tag = 'scoped memory for tpu_custom_call.1']
  #allocation3 [shape = 'u8[512]{0}', space=smem, size = 0x200, scoped, tag = 'prefetched SMEM operand 0']
  %s0 = inlined_call_operand.hbm [shape: s32[2], index: 0, kind: input, shape index: {}]
  %s1 = inlined_call_operand.hbm [shape: f32[2,8,128], index: 1, kind: input, shape index: {}]
  %s2 = inlined_call_operand.hbm [shape: bf16[128,384], index: 2, kind: input, shape index: {}]
  %s3 = inlined_call_operand.vmem [shape: f32[1,384], index: 3, kind: input, shape index: {}]
  %s4 = inlined_call_operand.hbm [shape: bf16[128,128], index: 4, kind: input, shape index: {}]
  %s5 = inlined_call_operand.vmem [shape: f32[1,128], index: 5, kind: input, shape index: {}]
  %s6 = inlined_call_operand.hbm [shape: f32[2,8,128], index: 6, kind: output, shape index: {}]
  %s7 = sld [smem:[#allocation0]]
  $region65: #{tpu_custom_call.1} parent=0
    _
  %s9 = ssub.s32 1, %s7
  %s10 = scalar_select 0, %s9, %s7
  %12 = dma.hbm_to_smem %s0, 16, [#allocation3], [#allocation2]
  %13 = dma.done [#allocation2], 16
  %14 = sfence
  $region1: #{tpu_custom_call.1} parent=0
    #allocation4 [shape = 'u8[8192]{0}', space=vmem, size = 0x2000, scoped, tag = 'input window, operand 1']
    #allocation5 [shape = 's32[2]{0}', space=sflag, size = 0x8, scoped, tag = 'scoped memory for tpu_custom_call.1']
    #allocation6 [shape = 's32[2]{0}', space=sflag, size = 0x8, scoped, tag = 'scoped memory for tpu_custom_call.1']
    #allocation7 [shape = 'u8[98304]{0}', space=vmem, size = 0x18000, scoped, tag = 'input window, operand 2, single buffered']
    #allocation8 [shape = 's32[1]{0}', space=sflag, size = 0x4, scoped, tag = 'scoped memory for tpu_custom_call.1']
    #allocation9 [shape = 'u8[32768]{0}', space=vmem, size = 0x8000, scoped, tag = 'input window, operand 4, single buffered']
    #allocation10 [shape = 'u8[8192]{0}', space=vmem, size = 0x2000, scoped, tag = 'output window, operand 0']
    %15 = vsyncpa [#allocation5], 0
    %s16 = scalar_lea.sflag [#allocation5], 1
    %17 = vsyncpa %s16, 0
    %18 = vsyncpa [#allocation8], 0
    %19 = vsyncpa [#allocation6], 0
    %s20 = scalar_lea.sflag [#allocation6], 1
    %21 = vsyncpa %s20, 0
    loop: start=0, step=1, limit=4
    $region2: #{tpu_custom_call.1} parent=1 // loop_pre_header
      _
    $region3: #{tpu_custom_call.1} parent=1 // loop_header
      %s23 = sphi 0, %s27
      %p24 = scmp.ge.s32.totalorder %s23, 4
      %s33 = sphi 0, %s35
      %s36 = sphi 0, %s33
      %s37 = sphi 0, %s36
      %s53 = sphi 0, %s37
      %s57 = sphi 0, %s57
      %s59 = sphi 0, %s57
      %s60 = sphi 0, %s59
      %s74 = sphi 0, %s60
      %s78 = sphi 0, %s78
      %s80 = sphi 0, %s78
      %s81 = sphi 0, %s80
      %s95 = sphi 0, %s81
      %s99 = sphi 0, %s99
      %s101 = sphi 0, %s99
      %s102 = sphi 0, %s101
      %s116 = sphi 0, %s102
      %s120 = sphi 0, %s120
      %s122 = sphi 0, %s120
      %s123 = sphi 0, %s122
      %s137 = sphi 0, %s123
      %s143 = sphi 0, %s145
      %s146 = sphi 0, %s143
      %s147 = sphi 0, %s146
      %s163 = sphi 0, %s147
    $region4: #{tpu_custom_call.1} parent=1 // loop_header_branch
      %26 = sbr.rel (%p24) target = $region8
    $region5: #{tpu_custom_call.1} parent=1 // loop_body
      %s28 = ssub.s32 %s23, 1
      %s29 = ssub.s32 %s23, 2
      %s30 = sadd.s32 %s23, 1
      %s31 = ssub.s32 %s23, %s30
      %p32 = scmp.eq.s32.totalorder %s31, 0
      %s34 = sadd.s32 %s33, 1
      %s35 = scalar_select %p32, %s33, %s34
      %p38 = pneg %p32
      %p39 = scmp.eq.s32.totalorder %s23, 1
      %p40 = por %p38, %p39
      %p41 = scmp.ne.s32.totalorder %s33, %s36
      %p42 = scmp.eq.s32.totalorder %s23, 0
      %p43 = por %p41, %p42
      %p44 = scmp.ne.s32.totalorder %s33, %s36
      %p45 = scmp.eq.s32.totalorder %s28, 1
      %p46 = por %p44, %p45
      %p47 = scmp.ne.s32.totalorder %s36, %s37
      %p48 = scmp.eq.s32.totalorder %s28, 0
      %p49 = por %p47, %p48
      %p50 = scmp.ne.s32.totalorder %s36, %s37
      %p51 = scmp.eq.s32.totalorder %s29, 1
      %p52 = por %p50, %p51
      %p54 = scmp.ne.s32.totalorder %s37, %s53
      %p55 = scmp.eq.s32.totalorder %s29, 0
      %p56 = por %p54, %p55
      %s58 = sadd.s32 %s57, 1
      %p61 = scmp.eq.s32.totalorder %s23, 1
      %p62 = scmp.ne.s32.totalorder %s57, %s59
      %p63 = scmp.eq.s32.totalorder %s23, 0
      %p64 = por %p62, %p63
      %p65 = scmp.ne.s32.totalorder %s57, %s59
      %p66 = scmp.eq.s32.totalorder %s28, 1
      %p67 = por %p65, %p66
      %p68 = scmp.ne.s32.totalorder %s59, %s60
      %p69 = scmp.eq.s32.totalorder %s28, 0
      %p70 = por %p68, %p69
      %p71 = scmp.ne.s32.totalorder %s59, %s60
      %p72 = scmp.eq.s32.totalorder %s29, 1
      %p73 = por %p71, %p72
      %p75 = scmp.ne.s32.totalorder %s60, %s74
      %p76 = scmp.eq.s32.totalorder %s29, 0
      %p77 = por %p75, %p76
      %s79 = sadd.s32 %s78, 1
      %p82 = scmp.eq.s32.totalorder %s23, 1
      %p83 = scmp.ne.s32.totalorder %s78, %s80
      %p84 = scmp.eq.s32.totalorder %s23, 0
      %p85 = por %p83, %p84
      %p86 = scmp.ne.s32.totalorder %s78, %s80
      %p87 = scmp.eq.s32.totalorder %s28, 1
      %p88 = por %p86, %p87
      %p89 = scmp.ne.s32.totalorder %s80, %s81
      %p90 = scmp.eq.s32.totalorder %s28, 0
      %p91 = por %p89, %p90
      %p92 = scmp.ne.s32.totalorder %s80, %s81
      %p93 = scmp.eq.s32.totalorder %s29, 1
      %p94 = por %p92, %p93
      %p96 = scmp.ne.s32.totalorder %s81, %s95
      %p97 = scmp.eq.s32.totalorder %s29, 0
      %p98 = por %p96, %p97
      %s100 = sadd.s32 %s99, 1
      %p103 = scmp.eq.s32.totalorder %s23, 1
      %p104 = scmp.ne.s32.totalorder %s99, %s101
      %p105 = scmp.eq.s32.totalorder %s23, 0
      %p106 = por %p104, %p105
      %p107 = scmp.ne.s32.totalorder %s99, %s101
      %p108 = scmp.eq.s32.totalorder %s28, 1
      %p109 = por %p107, %p108
      %p110 = scmp.ne.s32.totalorder %s101, %s102
      %p111 = scmp.eq.s32.totalorder %s28, 0
      %p112 = por %p110, %p111
      %p113 = scmp.ne.s32.totalorder %s101, %s102
      %p114 = scmp.eq.s32.totalorder %s29, 1
      %p115 = por %p113, %p114
      %p117 = scmp.ne.s32.totalorder %s102, %s116
      %p118 = scmp.eq.s32.totalorder %s29, 0
      %p119 = por %p117, %p118
      %s121 = sadd.s32 %s120, 1
      %p124 = scmp.eq.s32.totalorder %s23, 1
      %p125 = scmp.ne.s32.totalorder %s120, %s122
      %p126 = scmp.eq.s32.totalorder %s23, 0
      %p127 = por %p125, %p126
      %p128 = scmp.ne.s32.totalorder %s120, %s122
      %p129 = scmp.eq.s32.totalorder %s28, 1
      %p130 = por %p128, %p129
      %p131 = scmp.ne.s32.totalorder %s122, %s123
      %p132 = scmp.eq.s32.totalorder %s28, 0
      %p133 = por %p131, %p132
      %p134 = scmp.ne.s32.totalorder %s122, %s123
      %p135 = scmp.eq.s32.totalorder %s29, 1
      %p136 = por %p134, %p135
      %p138 = scmp.ne.s32.totalorder %s123, %s137
      %p139 = scmp.eq.s32.totalorder %s29, 0
      %p140 = por %p138, %p139
      %s141 = ssub.s32 %s23, %s30
      %p142 = scmp.eq.s32.totalorder %s141, 0
      %s144 = sadd.s32 %s143, 1
      %s145 = scalar_select %p142, %s143, %s144
      %p148 = pneg %p142
      %p149 = scmp.eq.s32.totalorder %s23, 1
      %p150 = por %p148, %p149
      %p151 = scmp.ne.s32.totalorder %s143, %s146
      %p152 = scmp.eq.s32.totalorder %s23, 0
      %p153 = por %p151, %p152
      %p154 = scmp.ne.s32.totalorder %s143, %s146
      %p155 = scmp.eq.s32.totalorder %s28, 1
      %p156 = por %p154, %p155
      %p157 = scmp.ne.s32.totalorder %s146, %s147
      %p158 = scmp.eq.s32.totalorder %s28, 0
      %p159 = por %p157, %p158
      %p160 = scmp.ne.s32.totalorder %s146, %s147
      %p161 = scmp.eq.s32.totalorder %s29, 1
      %p162 = por %p160, %p161
      %p164 = scmp.ne.s32.totalorder %s147, %s163
      %p165 = scmp.eq.s32.totalorder %s29, 0
      %p166 = por %p164, %p165
      %p167 = scmp.le.s32.totalorder 1, %s23
      %p168 = scmp.lt.s32.totalorder %s23, 3
      %p169 = pnand %p167, %p168
      %p170 = pneg %p169
      // Predicated region
      $region9: #{tpu_custom_call.1} parent=5 // pred_check
        _
      $region10: #{tpu_custom_call.1} parent=5 // pred_check_branch
        %172 = sbr.rel (%p169) target = $region12
      $region11: #{tpu_custom_call.1} parent=5 // pred_region
        %s173 = ssub.s32 %s23, 1
        // Predicated region
        $region13: #{tpu_custom_call.1} parent=11 // pred_check
          %p174 = pneg %p70
        $region14: #{tpu_custom_call.1} parent=11 // pred_check_branch
          %176 = sbr.rel (%p174) target = $region16
        $region15: #{tpu_custom_call.1} parent=11 // pred_region
          %s178 = ssub.s32 3072, 3072
          %179 = vsyncadd [#allocation8], %s178
          %s180 = sshll.u32 [#allocation7], 4
          %s181 = int_to_ptr.vmem [resolvable:$true] %s180
          %186 = dma.hbm_to_vmem [thread:$0]  %s2, 3072, %s181, [#allocation8], 192, 192, 12
        $region16: #{tpu_custom_call.1} parent=11 // pred_fallthru
          _
        // Predicated region
        $region17: #{tpu_custom_call.1} parent=11 // pred_check
          %p187 = pneg %p91
        $region18: #{tpu_custom_call.1} parent=11 // pred_check_branch
          %189 = sbr.rel (%p187) target = $region20
        $region19: #{tpu_custom_call.1} parent=11 // pred_region
          _
        $region20: #{tpu_custom_call.1} parent=11 // pred_fallthru
          _
        // Predicated region
        $region21: #{tpu_custom_call.1} parent=11 // pred_check
          %p190 = pneg %p112
        $region22: #{tpu_custom_call.1} parent=11 // pred_check_branch
          %192 = sbr.rel (%p190) target = $region24
        $region23: #{tpu_custom_call.1} parent=11 // pred_region
          %s194 = ssub.s32 1024, 1024
          %195 = vsyncadd [#allocation8], %s194
          %s196 = sshll.u32 [#allocation9], 4
          %s197 = int_to_ptr.vmem [resolvable:$true] %s196
          %202 = dma.hbm_to_vmem [thread:$0]  %s4, 1024, %s197, [#allocation8], 64, 64, 4
        $region24: #{tpu_custom_call.1} parent=11 // pred_fallthru
          _
        // Predicated region
        $region25: #{tpu_custom_call.1} parent=11 // pred_check
          %p203 = pneg %p133
        $region26: #{tpu_custom_call.1} parent=11 // pred_check_branch
          %205 = sbr.rel (%p203) target = $region28
        $region27: #{tpu_custom_call.1} parent=11 // pred_region
          _
        $region28: #{tpu_custom_call.1} parent=11 // pred_fallthru
          _
      $region12: #{tpu_custom_call.1} parent=5 // pred_fallthru
        _
      %p206 = scmp.lt.s32.totalorder %s23, 2
      // Predicated region
      $region29: #{tpu_custom_call.1} parent=5 // pred_check
        %p207 = pneg %p206
      $region30: #{tpu_custom_call.1} parent=5 // pred_check_branch
        %209 = sbr.rel (%p207) target = $region32
      $region31: #{tpu_custom_call.1} parent=5 // pred_region
        // Predicated region
        $region33: #{tpu_custom_call.1} parent=31 // pred_check
          %p210 = pneg %p43
        $region34: #{tpu_custom_call.1} parent=31 // pred_check_branch
          %212 = sbr.rel (%p210) target = $region36
        $region35: #{tpu_custom_call.1} parent=31 // pred_region
          %s213 = sand.u32 %s33, 1
          %s214 = scalar_lea.sflag [#allocation5], %s213
          %s215 = sand.u32 %s33, 1
          %s216 = smul.addr %s215, 8
          %s217 = scalar_lea.vmem [#allocation4], %s216
          %s219 = ssub.s32 128, 128
          %220 = vsyncadd %s214, %s219
          %s221 = smul.addr %s23, 128
          %s222 = scalar_lea.hbm %s1, %s221
          %s224 = sshll.u32 %s217, 4
          %s225 = int_to_ptr.vmem [resolvable:$true] %s224
          %227 = dma.hbm_to_vmem [thread:$0]  %s222, 128, %s225, %s214
        $region36: #{tpu_custom_call.1} parent=31 // pred_fallthru
          _
      $region32: #{tpu_custom_call.1} parent=5 // pred_fallthru
        _
      %p228 = scmp.le.s32.totalorder 1, %s23
      %p229 = scmp.lt.s32.totalorder %s23, 3
      %p230 = pnand %p228, %p229
      %p231 = pneg %p230
      // Predicated region
      $region37: #{tpu_custom_call.1} parent=5 // pred_check
        _
      $region38: #{tpu_custom_call.1} parent=5 // pred_check_branch
        %233 = sbr.rel (%p230) target = $region40
      $region39: #{tpu_custom_call.1} parent=5 // pred_region
        %s234 = ssub.s32 %s23, 1
        %s235 = sand.u32 %s36, 1
        %s236 = scalar_lea.sflag [#allocation5], %s235
        %s237 = sand.u32 %s36, 1
        %s238 = smul.addr %s237, 8
        %s239 = scalar_lea.vmem [#allocation4], %s238
        // Predicated region
        $region41: #{tpu_custom_call.1} parent=39 // pred_check
          %p240 = pneg %p49
        $region42: #{tpu_custom_call.1} parent=39 // pred_check_branch
          %242 = sbr.rel (%p240) target = $region44
        $region43: #{tpu_custom_call.1} parent=39 // pred_region
          %243 = dma.done %s236, 128
        $region44: #{tpu_custom_call.1} parent=39 // pred_fallthru
          _
        // Predicated region
        $region45: #{tpu_custom_call.1} parent=39 // pred_check
          %p244 = pneg %p70
        $region46: #{tpu_custom_call.1} parent=39 // pred_check_branch
          %246 = sbr.rel (%p244) target = $region48
        $region47: #{tpu_custom_call.1} parent=39 // pred_region
          %247 = dma.done [#allocation8], 3072
        $region48: #{tpu_custom_call.1} parent=39 // pred_fallthru
          _
        // Predicated region
        $region49: #{tpu_custom_call.1} parent=39 // pred_check
          %p248 = pneg %p112
        $region50: #{tpu_custom_call.1} parent=39 // pred_check_branch
          %250 = sbr.rel (%p248) target = $region52
        $region51: #{tpu_custom_call.1} parent=39 // pred_region
          %251 = dma.done [#allocation8], 1024
        $region52: #{tpu_custom_call.1} parent=39 // pred_fallthru
          _
        %s252 = sand.u32 %s36, 1
        %s253 = scalar_lea.sflag [#allocation5], %s252
        %s254 = sand.u32 %s36, 1
        %s255 = smul.addr %s254, 8
        %s256 = scalar_lea.vmem [#allocation4], %s255
        %p257 = pneg %p49
        %p258 = pneg %p46
        %p259 = pneg %p70
        %p260 = pneg %p67
        %p261 = pneg %p91
        %p262 = pneg %p88
        %p263 = pneg %p112
        %p264 = pneg %p109
        %p265 = pneg %p133
        %p266 = pneg %p130
        %p267 = pneg %p159
        %p268 = pneg %p156
        %s269 = sand.u32 %s146, 1
        %s270 = scalar_lea.sflag [#allocation6], %s269
        %s271 = sand.u32 %s146, 1
        %s272 = smul.addr %s271, 8
        %s273 = scalar_lea.vmem [#allocation10], %s272
        %v275 = vld [vmem:[%s239] sm:$0xff]
        %v276 = vpack.c.bf16 %v275, %v275
        %v277 = vld [vmem:[#allocation7] sm:$0xff]
        %v278 = vld [vmem:[#allocation7 + $0x8] sm:$0xf]
        %v279 = vld [vmem:[#allocation7 + $0xc] sm:$0xff]
        %v280 = vld [vmem:[#allocation7 + $0x14] sm:$0xf]
        %v281 = vld [vmem:[#allocation7 + $0x18] sm:$0xff]
        %v282 = vld [vmem:[#allocation7 + $0x20] sm:$0xf]
        %v283 = vld [vmem:[#allocation7 + $0x24] sm:$0xff]
        %v284 = vld [vmem:[#allocation7 + $0x2c] sm:$0xf]
        %v285 = vld [vmem:[#allocation7 + $0x30] sm:$0xff]
        %v286 = vld [vmem:[#allocation7 + $0x38] sm:$0xf]
        %v287 = vld [vmem:[#allocation7 + $0x3c] sm:$0xff]
        %v288 = vld [vmem:[#allocation7 + $0x44] sm:$0xf]
        %v289 = vld [vmem:[#allocation7 + $0x48] sm:$0xff]
        %v290 = vld [vmem:[#allocation7 + $0x50] sm:$0xf]
        %v291 = vld [vmem:[#allocation7 + $0x54] sm:$0xff]
        %v292 = vld [vmem:[#allocation7 + $0x5c] sm:$0xf]
        %v293 = vld [vmem:[#allocation7 + $0x60] sm:$0xff]
        %v294 = vld [vmem:[#allocation7 + $0x68] sm:$0xf]
        %v295 = vld [vmem:[#allocation7 + $0x6c] sm:$0xff]
        %v296 = vld [vmem:[#allocation7 + $0x74] sm:$0xf]
        %v297 = vld [vmem:[#allocation7 + $0x78] sm:$0xff]
        %v298 = vld [vmem:[#allocation7 + $0x80] sm:$0xf]
        %v299 = vld [vmem:[#allocation7 + $0x84] sm:$0xff]
        %v300 = vld [vmem:[#allocation7 + $0x8c] sm:$0xf]
        %v301 = vld [vmem:[#allocation7 + $0x90] sm:$0xff]
        %v302 = vld [vmem:[#allocation7 + $0x98] sm:$0xf]
        %v303 = vld [vmem:[#allocation7 + $0x9c] sm:$0xff]
        %v304 = vld [vmem:[#allocation7 + $0xa4] sm:$0xf]
        %v305 = vld [vmem:[#allocation7 + $0xa8] sm:$0xff]
        %v306 = vld [vmem:[#allocation7 + $0xb0] sm:$0xf]
        %v307 = vld [vmem:[#allocation7 + $0xb4] sm:$0xff]
        %v308 = vld [vmem:[#allocation7 + $0xbc] sm:$0xf]
        %v309 = vld [vmem:[%s3] sm:$0x7]
        %v311 = vlaneseq
        %v312 = vshrl.u32 %v311, 7
        %v313 = vsub.s32 0, %v312
        %v314 = vrot.slane %v309, %v313
        %v315 = vlaneseq
        %v316 = vshrl.u32 %v315, 7
        %v317 = vsub.s32 1, %v316
        %v318 = vrot.slane %v309, %v317
        %v319 = vlaneseq
        %v320 = vshrl.u32 %v319, 7
        %v321 = vsub.s32 2, %v320
        %v322 = vrot.slane %v309, %v321
        %v358 = vunpack.c.l.b16 %v277
        %v359 = vunpack.c.h.b16 %v277
        %v360 = vunpack.c.l.b16 %v278
        %v361 = vunpack.c.l.b16 %v279
        %v362 = vunpack.c.h.b16 %v279
        %v363 = vunpack.c.l.b16 %v280
        %v364 = vunpack.c.l.b16 %v281
        %v365 = vunpack.c.h.b16 %v281
        %v366 = vunpack.c.l.b16 %v282
        %v367 = vunpack.c.l.b16 %v283
        %v368 = vunpack.c.h.b16 %v283
        %v369 = vunpack.c.l.b16 %v284
        %v370 = vunpack.c.l.b16 %v285
        %v371 = vunpack.c.h.b16 %v285
        %v372 = vunpack.c.l.b16 %v286
        %v373 = vunpack.c.l.b16 %v287
        %v374 = vunpack.c.h.b16 %v287
        %v375 = vunpack.c.l.b16 %v288
        %v376 = vunpack.c.l.b16 %v289
        %v377 = vunpack.c.h.b16 %v289
        %v378 = vunpack.c.l.b16 %v290
        %v379 = vunpack.c.l.b16 %v291
        %v380 = vunpack.c.h.b16 %v291
        %v381 = vunpack.c.l.b16 %v292
        %v382 = vunpack.c.l.b16 %v293
        %v383 = vunpack.c.h.b16 %v293
        %v384 = vunpack.c.l.b16 %v294
        %v385 = vunpack.c.l.b16 %v295
        %v386 = vunpack.c.h.b16 %v295
        %v387 = vunpack.c.l.b16 %v296
        %v388 = vunpack.c.l.b16 %v297
        %v389 = vunpack.c.h.b16 %v297
        %v390 = vunpack.c.l.b16 %v298
        %v391 = vunpack.c.l.b16 %v299
        %v392 = vunpack.c.h.b16 %v299
        %v393 = vunpack.c.l.b16 %v300
        %v394 = vunpack.c.l.b16 %v301
        %v395 = vunpack.c.h.b16 %v301
        %v396 = vunpack.c.l.b16 %v302
        %v397 = vunpack.c.l.b16 %v303
        %v398 = vunpack.c.h.b16 %v303
        %v399 = vunpack.c.l.b16 %v304
        %v400 = vunpack.c.l.b16 %v305
        %v401 = vunpack.c.h.b16 %v305
        %v402 = vunpack.c.l.b16 %v306
        %v403 = vunpack.c.l.b16 %v307
        %v404 = vunpack.c.h.b16 %v307
        %v405 = vunpack.c.l.b16 %v308
        %v406 = vpack.c.b16 %v361, %v358
        %v407 = vpack.c.b16 %v362, %v359
        %v408 = vpack.c.b16 %v363, %v360
        %v409 = vpack.c.b16 %v367, %v364
        %v410 = vpack.c.b16 %v368, %v365
        %v411 = vpack.c.b16 %v369, %v366
        %v412 = vpack.c.b16 %v373, %v370
        %v413 = vpack.c.b16 %v374, %v371
        %v414 = vpack.c.b16 %v375, %v372
        %v415 = vpack.c.b16 %v379, %v376
        %v416 = vpack.c.b16 %v380, %v377
        %v417 = vpack.c.b16 %v381, %v378
        %v418 = vpack.c.b16 %v385, %v382
        %v419 = vpack.c.b16 %v386, %v383
        %v420 = vpack.c.b16 %v387, %v384
        %v421 = vpack.c.b16 %v391, %v388
        %v422 = vpack.c.b16 %v392, %v389
        %v423 = vpack.c.b16 %v393, %v390
        %v424 = vpack.c.b16 %v397, %v394
        %v425 = vpack.c.b16 %v398, %v395
        %v426 = vpack.c.b16 %v399, %v396
        %v427 = vpack.c.b16 %v403, %v400
        %v428 = vpack.c.b16 %v404, %v401
        %v429 = vpack.c.b16 %v405, %v402
        %454 = vmatprep.subr.bf16.mxu0 %v407
        %455 = vmatpush1.bf16.msra.mxu0 %v406
        %456 = vmatprep.subr.bf16.mxu0 %v410
        %457 = vmatpush1.bf16.msra.mxu0 %v409
        %458 = vmatprep.subr.bf16.mxu0 %v413
        %459 = vmatpush1.bf16.msra.mxu0 %v412
        %460 = vmatprep.subr.bf16.mxu0 %v416
        %461 = vmatpush1.bf16.msra.mxu0 %v415
        %462 = vmatprep.subr.bf16.mxu0 %v419
        %463 = vmatpush1.bf16.msra.mxu0 %v418
        %464 = vmatprep.subr.bf16.mxu0 %v422
        %465 = vmatpush1.bf16.msra.mxu0 %v421
        %466 = vmatprep.subr.bf16.mxu0 %v425
        %467 = vmatpush1.bf16.msra.mxu0 %v424
        %468 = vmatprep.subr.bf16.mxu0 %v428
        %469 = vmatpush1.bf16.msra.mxu0 %v427
        %470 = vmatprep.subr.bf16.mxu0 0
        %471 = vmatpush1.bf16.msra.mxu0 0
        %472 = vmatprep.subr.bf16.mxu0 0
        %473 = vmatpush1.bf16.msra.mxu0 0
        %474 = vmatprep.subr.bf16.mxu0 0
        %475 = vmatpush1.bf16.msra.mxu0 0
        %476 = vmatprep.subr.bf16.mxu0 0
        %477 = vmatpush1.bf16.msra.mxu0 0
        %478 = vmatprep.subr.bf16.mxu0 0
        %479 = vmatpush1.bf16.msra.mxu0 0
        %480 = vmatprep.subr.bf16.mxu0 0
        %481 = vmatpush1.bf16.msra.mxu0 0
        %482 = vmatprep.subr.bf16.mxu0 0
        %483 = vmatpush1.bf16.msra.mxu0 0
        %484 = vmatprep.subr.bf16.mxu0 0
        %485 = vmatpush1.bf16.msra.mxu0 0
        %486 = vmatprep.mubr.bf16.mxu0 0
        %487 = vmatmul.mubr.bf16.gmra.mrb[0].mxu0 %v276
        %v488 = vpop.f32.mrb[0].mxu0
        %v489 = vadd.f32 %v314, %v488
        %v490 = vpop.f32.mrb[0].mxu0
        %v491 = vadd.f32 %v318, %v490
        %v492 = vpop.f32.mrb[0].mxu0
        %v493 = vpop.f32.mrb[0].mxu0
        %494 = vdwg.mxu0
        %495 = vmatprep.subr.bf16.mxu0 0
        %496 = vmatpush1.bf16.msra.mxu0 %v408
        %497 = vmatprep.subr.bf16.mxu0 0
        %498 = vmatpush1.bf16.msra.mxu0 %v411
        %499 = vmatprep.subr.bf16.mxu0 0
        %500 = vmatpush1.bf16.msra.mxu0 %v414
        %501 = vmatprep.subr.bf16.mxu0 0
        %502 = vmatpush1.bf16.msra.mxu0 %v417
        %503 = vmatprep.subr.bf16.mxu0 0
        %504 = vmatpush1.bf16.msra.mxu0 %v420
        %505 = vmatprep.subr.bf16.mxu0 0
        %506 = vmatpush1.bf16.msra.mxu0 %v423
        %507 = vmatprep.subr.bf16.mxu0 0
        %508 = vmatpush1.bf16.msra.mxu0 %v426
        %509 = vmatprep.subr.bf16.mxu0 0
        %510 = vmatpush1.bf16.msra.mxu0 %v429
        %511 = vmatprep.subr.bf16.mxu0 0
        %512 = vmatpush1.bf16.msra.mxu0 0
        %513 = vmatprep.subr.bf16.mxu0 0
        %514 = vmatpush1.bf16.msra.mxu0 0
        %515 = vmatprep.subr.bf16.mxu0 0
        %516 = vmatpush1.bf16.msra.mxu0 0
        %517 = vmatprep.subr.bf16.mxu0 0
        %518 = vmatpush1.bf16.msra.mxu0 0
        %519 = vmatprep.subr.bf16.mxu0 0
        %520 = vmatpush1.bf16.msra.mxu0 0
        %521 = vmatprep.subr.bf16.mxu0 0
        %522 = vmatpush1.bf16.msra.mxu0 0
        %523 = vmatprep.subr.bf16.mxu0 0
        %524 = vmatpush1.bf16.msra.mxu0 0
        %525 = vmatprep.subr.bf16.mxu0 0
        %526 = vmatpush1.bf16.msra.mxu0 0
        %527 = vmatprep.mubr.bf16.mxu0 0
        %528 = vmatmul.mubr.bf16.gmra.mrb[0].mxu0 %v276
        %v529 = vpop.f32.mrb[0].mxu0
        %v530 = vadd.f32 %v322, %v529
        %v531 = vpop.f32.mrb[0].mxu0
        %v532 = vpop.f32.mrb[0].mxu0
        %v533 = vpop.f32.mrb[0].mxu0
        %534 = vdwg.mxu0
        %s535 = sld [smem:[#allocation3 + %s28]]
        %v536 = vlaneseq
        %v537 = vand.u32 %v536, 127
        %v538 = vstv %s535
        %vm539 = vcmp.lt.s32.totalorder %v537, %v538
        %v540 = vsel %vm539, 0.0, -1e+09
        %v541 = vld [vmem:[%s5] sm:$0x1]
        %v543 = vlaneseq
        %v544 = vshrl.u32 %v543, 7
        %v545 = vsub.s32 0, %v544
        %v546 = vrot.slane %v541, %v545
        %v548 = vpack.c.bf16 %v489, %v489
        %v549 = vpack.c.bf16 %v491, %v491
        %v550 = vpack.c.bf16 %v530, %v530
        %vm551 = vcmask 261120
        %v553 = vsel %vm551, %v548, 0
        %v556 = vsel %vm551, %v549, 0
        %558 = vmatprep.subr.bf16.mxu0 0
        %559 = vmatpush1.bf16.xpose.msra.mxu0 %v556
        %560 = vmatprep.subr.bf16.mxu0 0
        %561 = vmatpush1.bf16.xpose.msra.mxu0 0
        %562 = vmatprep.subr.bf16.mxu0 0
        %563 = vmatpush1.bf16.xpose.msra.mxu0 0
        %564 = vmatprep.subr.bf16.mxu0 0
        %565 = vmatpush1.bf16.xpose.msra.mxu0 0
        %566 = vmatprep.subr.bf16.mxu0 0
        %567 = vmatpush1.bf16.xpose.msra.mxu0 0
        %568 = vmatprep.subr.bf16.mxu0 0
        %569 = vmatpush1.bf16.xpose.msra.mxu0 0
        %570 = vmatprep.subr.bf16.mxu0 0
        %571 = vmatpush1.bf16.xpose.msra.mxu0 0
        %572 = vmatprep.subr.bf16.mxu0 0
        %573 = vmatpush1.bf16.xpose.msra.mxu0 0
        %574 = vmatprep.subr.bf16.mxu0 0
        %575 = vmatpush1.bf16.xpose.msra.mxu0 0
        %576 = vmatprep.subr.bf16.mxu0 0
        %577 = vmatpush1.bf16.xpose.msra.mxu0 0
        %578 = vmatprep.subr.bf16.mxu0 0
        %579 = vmatpush1.bf16.xpose.msra.mxu0 0
        %580 = vmatprep.subr.bf16.mxu0 0
        %581 = vmatpush1.bf16.xpose.msra.mxu0 0
        %582 = vmatprep.subr.bf16.mxu0 0
        %583 = vmatpush1.bf16.xpose.msra.mxu0 0
        %584 = vmatprep.subr.bf16.mxu0 0
        %585 = vmatpush1.bf16.xpose.msra.mxu0 0
        %586 = vmatprep.subr.bf16.mxu0 0
        %587 = vmatpush1.bf16.xpose.msra.mxu0 0
        %588 = vmatprep.subr.bf16.mxu0 0
        %589 = vmatpush1.bf16.xpose.msra.mxu0 0
        %590 = vmatprep.mubr.bf16.mxu0 0
        %591 = vmatmul.mubr.bf16.gmra.mrb[0].mxu0 %v553
        %v592 = vpop.f32.mrb[0].mxu0
        %v593 = vadd.f32 %v540, %v592
        %v594 = vpop.f32.mrb[0].mxu0
        %v595 = vpop.f32.mrb[0].mxu0
        %v596 = vpop.f32.mrb[0].mxu0
        %597 = vdwg.mxu0
        %vm598 = vcmask 64512
        %v599 = vsel %vm598, %v593, -inf
        %600 = vmax.xlane.f32.xlu0 %v599
        %v601 = vpop.xlane.xlu0 %600
        %v602 = vsub.f32 %v593, %v601
        %v603 = vmul.f32 %v602, 1.442695
        %v604 = vpow.pop %v603
        %v605 = vsel %vm598, %v604, 0.0
        %606 = vadd.xlane.f32.xlu0 %v605
        %v607 = vpop.xlane.xlu0 %606
        %v608 = vpack.c.bf16 %v604, %v604
        %v610 = vsel %vm598, %v608, 0
        %vm612 = vcmask 1043456
        %v614 = vsel %vm612, %v550, 0
        %616 = vmatprep.subr.bf16.mxu0 0
        %617 = vmatpush1.bf16.msra.mxu0 %v614
        %618 = vmatprep.subr.bf16.mxu0 0
        %619 = vmatpush1.bf16.msra.mxu0 0
        %620 = vmatprep.subr.bf16.mxu0 0
        %621 = vmatpush1.bf16.msra.mxu0 0
        %622 = vmatprep.subr.bf16.mxu0 0
        %623 = vmatpush1.bf16.msra.mxu0 0
        %624 = vmatprep.subr.bf16.mxu0 0
        %625 = vmatpush1.bf16.msra.mxu0 0
        %626 = vmatprep.subr.bf16.mxu0 0
        %627 = vmatpush1.bf16.msra.mxu0 0
        %628 = vmatprep.subr.bf16.mxu0 0
        %629 = vmatpush1.bf16.msra.mxu0 0
        %630 = vmatprep.subr.bf16.mxu0 0
        %631 = vmatpush1.bf16.msra.mxu0 0
        %632 = vmatprep.subr.bf16.mxu0 0
        %633 = vmatpush1.bf16.msra.mxu0 0
        %634 = vmatprep.subr.bf16.mxu0 0
        %635 = vmatpush1.bf16.msra.mxu0 0
        %636 = vmatprep.subr.bf16.mxu0 0
        %637 = vmatpush1.bf16.msra.mxu0 0
        %638 = vmatprep.subr.bf16.mxu0 0
        %639 = vmatpush1.bf16.msra.mxu0 0
        %640 = vmatprep.subr.bf16.mxu0 0
        %641 = vmatpush1.bf16.msra.mxu0 0
        %642 = vmatprep.subr.bf16.mxu0 0
        %643 = vmatpush1.bf16.msra.mxu0 0
        %644 = vmatprep.subr.bf16.mxu0 0
        %645 = vmatpush1.bf16.msra.mxu0 0
        %646 = vmatprep.subr.bf16.mxu0 0
        %647 = vmatpush1.bf16.msra.mxu0 0
        %648 = vmatprep.mubr.bf16.mxu0 0
        %649 = vmatmul.mubr.bf16.gmra.mrb[0].mxu0 %v610
        %v650 = vpop.f32.mrb[0].mxu0
        %v651 = vadd.f32 0.0, %v650
        %v652 = vpop.f32.mrb[0].mxu0
        %v653 = vpop.f32.mrb[0].mxu0
        %v654 = vpop.f32.mrb[0].mxu0
        %655 = vdwg.mxu0
        %v656 = vrcp.pop %v607
        %v657 = vmul.f32 %v651, %v656
        %v658 = vpack.c.bf16 %v657, %v657
        %v659 = vld [vmem:[#allocation9] sm:$0xf]
        %v660 = vld [vmem:[#allocation9 + $0x4] sm:$0xf]
        %v661 = vld [vmem:[#allocation9 + $0x8] sm:$0xf]
        %v662 = vld [vmem:[#allocation9 + $0xc] sm:$0xf]
        %v667 = vunpack.c.l.b16 %v659
        %v668 = vunpack.c.l.b16 %v660
        %v669 = vunpack.c.l.b16 %v661
        %v670 = vunpack.c.l.b16 %v662
        %v671 = vpack.c.b16 %v668, %v667
        %v672 = vpack.c.b16 %v670, %v669
        %v676 = vsel %vm551, %v658, 0
        %678 = vmatprep.subr.bf16.mxu0 0
        %679 = vmatpush1.bf16.msra.mxu0 %v671
        %680 = vmatprep.subr.bf16.mxu0 0
        %681 = vmatpush1.bf16.msra.mxu0 %v672
        %682 = vmatprep.subr.bf16.mxu0 0
        %683 = vmatpush1.bf16.msra.mxu0 0
        %684 = vmatprep.subr.bf16.mxu0 0
        %685 = vmatpush1.bf16.msra.mxu0 0
        %686 = vmatprep.subr.bf16.mxu0 0
        %687 = vmatpush1.bf16.msra.mxu0 0
        %688 = vmatprep.subr.bf16.mxu0 0
        %689 = vmatpush1.bf16.msra.mxu0 0
        %690 = vmatprep.subr.bf16.mxu0 0
        %691 = vmatpush1.bf16.msra.mxu0 0
        %692 = vmatprep.subr.bf16.mxu0 0
        %693 = vmatpush1.bf16.msra.mxu0 0
        %694 = vmatprep.subr.bf16.mxu0 0
        %695 = vmatpush1.bf16.msra.mxu0 0
        %696 = vmatprep.subr.bf16.mxu0 0
        %697 = vmatpush1.bf16.msra.mxu0 0
        %698 = vmatprep.subr.bf16.mxu0 0
        %699 = vmatpush1.bf16.msra.mxu0 0
        %700 = vmatprep.subr.bf16.mxu0 0
        %701 = vmatpush1.bf16.msra.mxu0 0
        %702 = vmatprep.subr.bf16.mxu0 0
        %703 = vmatpush1.bf16.msra.mxu0 0
        %704 = vmatprep.subr.bf16.mxu0 0
        %705 = vmatpush1.bf16.msra.mxu0 0
        %706 = vmatprep.subr.bf16.mxu0 0
        %707 = vmatpush1.bf16.msra.mxu0 0
        %708 = vmatprep.subr.bf16.mxu0 0
        %709 = vmatpush1.bf16.msra.mxu0 0
        %710 = vmatprep.mubr.bf16.mxu0 0
        %711 = vmatmul.mubr.bf16.gmra.mrb[0].mxu0 %v676
        %v712 = vpop.f32.mrb[0].mxu0
        %v713 = vadd.f32 0.0, %v712
        %v714 = vpop.f32.mrb[0].mxu0
        %v715 = vpop.f32.mrb[0].mxu0
        %v716 = vpop.f32.mrb[0].mxu0
        %717 = vdwg.mxu0
        %v718 = vadd.f32 %v546, %v713
        %720 = vrot.lane.b32.xlu0 %v548, 96
        %v721 = vpop.permute.xlu0 %720
        %723 = vrot.lane.b32.xlu0 %v549, 96
        %v724 = vpop.permute.xlu0 %723
        %v726 = vsel %vm551, %v721, 0
        %v729 = vsel %vm551, %v724, 0
        %731 = vmatprep.subr.bf16.mxu0 0
        %732 = vmatpush1.bf16.xpose.msra.mxu0 %v729
        %733 = vmatprep.subr.bf16.mxu0 0
        %734 = vmatpush1.bf16.xpose.msra.mxu0 0
        %735 = vmatprep.subr.bf16.mxu0 0
        %736 = vmatpush1.bf16.xpose.msra.mxu0 0
        %737 = vmatprep.subr.bf16.mxu0 0
        %738 = vmatpush1.bf16.xpose.msra.mxu0 0
        %739 = vmatprep.subr.bf16.mxu0 0
        %740 = vmatpush1.bf16.xpose.msra.mxu0 0
        %741 = vmatprep.subr.bf16.mxu0 0
        %742 = vmatpush1.bf16.xpose.msra.mxu0 0
        %743 = vmatprep.subr.bf16.mxu0 0
        %744 = vmatpush1.bf16.xpose.msra.mxu0 0
        %745 = vmatprep.subr.bf16.mxu0 0
        %746 = vmatpush1.bf16.xpose.msra.mxu0 0
        %747 = vmatprep.subr.bf16.mxu0 0
        %748 = vmatpush1.bf16.xpose.msra.mxu0 0
        %749 = vmatprep.subr.bf16.mxu0 0
        %750 = vmatpush1.bf16.xpose.msra.mxu0 0
        %751 = vmatprep.subr.bf16.mxu0 0
        %752 = vmatpush1.bf16.xpose.msra.mxu0 0
        %753 = vmatprep.subr.bf16.mxu0 0
        %754 = vmatpush1.bf16.xpose.msra.mxu0 0
        %755 = vmatprep.subr.bf16.mxu0 0
        %756 = vmatpush1.bf16.xpose.msra.mxu0 0
        %757 = vmatprep.subr.bf16.mxu0 0
        %758 = vmatpush1.bf16.xpose.msra.mxu0 0
        %759 = vmatprep.subr.bf16.mxu0 0
        %760 = vmatpush1.bf16.xpose.msra.mxu0 0
        %761 = vmatprep.subr.bf16.mxu0 0
        %762 = vmatpush1.bf16.xpose.msra.mxu0 0
        %763 = vmatprep.mubr.bf16.mxu0 0
        %764 = vmatmul.mubr.bf16.gmra.mrb[0].mxu0 %v726
        %v765 = vpop.f32.mrb[0].mxu0
        %v766 = vadd.f32 %v540, %v765
        %v767 = vpop.f32.mrb[0].mxu0
        %v768 = vpop.f32.mrb[0].mxu0
        %v769 = vpop.f32.mrb[0].mxu0
        %770 = vdwg.mxu0
        %v771 = vsel %vm598, %v766, -inf
        %772 = vmax.xlane.f32.xlu0 %v771
        %v773 = vpop.xlane.xlu0 %772
        %v774 = vsub.f32 %v766, %v773
        %v775 = vmul.f32 %v774, 1.442695
        %v776 = vpow.pop %v775
        %v777 = vsel %vm598, %v776, 0.0
        %778 = vadd.xlane.f32.xlu0 %v777
        %v779 = vpop.xlane.xlu0 %778
        %v780 = vpack.c.bf16 %v776, %v776
        %782 = vrot.lane.b32.xlu0 %v550, 96
        %v783 = vpop.permute.xlu0 %782
        %v785 = vsel %vm598, %v780, 0
        %v788 = vsel %vm612, %v783, 0
        %790 = vmatprep.subr.bf16.mxu0 0
        %791 = vmatpush1.bf16.msra.mxu0 %v788
        %792 = vmatprep.subr.bf16.mxu0 0
        %793 = vmatpush1.bf16.msra.mxu0 0
        %794 = vmatprep.subr.bf16.mxu0 0
        %795 = vmatpush1.bf16.msra.mxu0 0
        %796 = vmatprep.subr.bf16.mxu0 0
        %797 = vmatpush1.bf16.msra.mxu0 0
        %798 = vmatprep.subr.bf16.mxu0 0
        %799 = vmatpush1.bf16.msra.mxu0 0
        %800 = vmatprep.subr.bf16.mxu0 0
        %801 = vmatpush1.bf16.msra.mxu0 0
        %802 = vmatprep.subr.bf16.mxu0 0
        %803 = vmatpush1.bf16.msra.mxu0 0
        %804 = vmatprep.subr.bf16.mxu0 0
        %805 = vmatpush1.bf16.msra.mxu0 0
        %806 = vmatprep.subr.bf16.mxu0 0
        %807 = vmatpush1.bf16.msra.mxu0 0
        %808 = vmatprep.subr.bf16.mxu0 0
        %809 = vmatpush1.bf16.msra.mxu0 0
        %810 = vmatprep.subr.bf16.mxu0 0
        %811 = vmatpush1.bf16.msra.mxu0 0
        %812 = vmatprep.subr.bf16.mxu0 0
        %813 = vmatpush1.bf16.msra.mxu0 0
        %814 = vmatprep.subr.bf16.mxu0 0
        %815 = vmatpush1.bf16.msra.mxu0 0
        %816 = vmatprep.subr.bf16.mxu0 0
        %817 = vmatpush1.bf16.msra.mxu0 0
        %818 = vmatprep.subr.bf16.mxu0 0
        %819 = vmatpush1.bf16.msra.mxu0 0
        %820 = vmatprep.subr.bf16.mxu0 0
        %821 = vmatpush1.bf16.msra.mxu0 0
        %822 = vmatprep.mubr.bf16.mxu0 0
        %823 = vmatmul.mubr.bf16.gmra.mrb[0].mxu0 %v785
        %v824 = vpop.f32.mrb[0].mxu0
        %v825 = vadd.f32 0.0, %v824
        %v826 = vpop.f32.mrb[0].mxu0
        %v827 = vpop.f32.mrb[0].mxu0
        %v828 = vpop.f32.mrb[0].mxu0
        %829 = vdwg.mxu0
        %v830 = vrcp.pop %v779
        %v831 = vmul.f32 %v825, %v830
        %v832 = vpack.c.bf16 %v831, %v831
        %v833 = vld [vmem:[#allocation9 + $0x10] sm:$0xf]
        %v834 = vld [vmem:[#allocation9 + $0x14] sm:$0xf]
        %v835 = vld [vmem:[#allocation9 + $0x18] sm:$0xf]
        %v836 = vld [vmem:[#allocation9 + $0x1c] sm:$0xf]
        %v841 = vunpack.c.l.b16 %v833
        %v842 = vunpack.c.l.b16 %v834
        %v843 = vunpack.c.l.b16 %v835
        %v844 = vunpack.c.l.b16 %v836
        %v845 = vpack.c.b16 %v842, %v841
        %v846 = vpack.c.b16 %v844, %v843
        %v850 = vsel %vm551, %v832, 0
        %852 = vmatprep.subr.bf16.mxu0 0
        %853 = vmatpush1.bf16.msra.mxu0 %v845
        %854 = vmatprep.subr.bf16.mxu0 0
        %855 = vmatpush1.bf16.msra.mxu0 %v846
        %856 = vmatprep.subr.bf16.mxu0 0
        %857 = vmatpush1.bf16.msra.mxu0 0
        %858 = vmatprep.subr.bf16.mxu0 0
        %859 = vmatpush1.bf16.msra.mxu0 0
        %860 = vmatprep.subr.bf16.mxu0 0
        %861 = vmatpush1.bf16.msra.mxu0 0
        %862 = vmatprep.subr.bf16.mxu0 0
        %863 = vmatpush1.bf16.msra.mxu0 0
        %864 = vmatprep.subr.bf16.mxu0 0
        %865 = vmatpush1.bf16.msra.mxu0 0
        %866 = vmatprep.subr.bf16.mxu0 0
        %867 = vmatpush1.bf16.msra.mxu0 0
        %868 = vmatprep.subr.bf16.mxu0 0
        %869 = vmatpush1.bf16.msra.mxu0 0
        %870 = vmatprep.subr.bf16.mxu0 0
        %871 = vmatpush1.bf16.msra.mxu0 0
        %872 = vmatprep.subr.bf16.mxu0 0
        %873 = vmatpush1.bf16.msra.mxu0 0
        %874 = vmatprep.subr.bf16.mxu0 0
        %875 = vmatpush1.bf16.msra.mxu0 0
        %876 = vmatprep.subr.bf16.mxu0 0
        %877 = vmatpush1.bf16.msra.mxu0 0
        %878 = vmatprep.subr.bf16.mxu0 0
        %879 = vmatpush1.bf16.msra.mxu0 0
        %880 = vmatprep.subr.bf16.mxu0 0
        %881 = vmatpush1.bf16.msra.mxu0 0
        %882 = vmatprep.subr.bf16.mxu0 0
        %883 = vmatpush1.bf16.msra.mxu0 0
        %884 = vmatprep.mubr.bf16.mxu0 0
        %885 = vmatmul.mubr.bf16.gmra.mrb[0].mxu0 %v850
        %v886 = vpop.f32.mrb[0].mxu0
        %v887 = vadd.f32 0.0, %v886
        %v888 = vpop.f32.mrb[0].mxu0
        %v889 = vpop.f32.mrb[0].mxu0
        %v890 = vpop.f32.mrb[0].mxu0
        %891 = vdwg.mxu0
        %v892 = vadd.f32 %v718, %v887
        %893 = vrot.lane.b32.xlu0 %v548, 64
        %v894 = vpop.permute.xlu0 %893
        %895 = vrot.lane.b32.xlu0 %v549, 64
        %v896 = vpop.permute.xlu0 %895
        %v898 = vsel %vm551, %v894, 0
        %v901 = vsel %vm551, %v896, 0
        %903 = vmatprep.subr.bf16.mxu0 0
        %904 = vmatpush1.bf16.xpose.msra.mxu0 %v901
        %905 = vmatprep.subr.bf16.mxu0 0
        %906 = vmatpush1.bf16.xpose.msra.mxu0 0
        %907 = vmatprep.subr.bf16.mxu0 0
        %908 = vmatpush1.bf16.xpose.msra.mxu0 0
        %909 = vmatprep.subr.bf16.mxu0 0
        %910 = vmatpush1.bf16.xpose.msra.mxu0 0
        %911 = vmatprep.subr.bf16.mxu0 0
        %912 = vmatpush1.bf16.xpose.msra.mxu0 0
        %913 = vmatprep.subr.bf16.mxu0 0
        %914 = vmatpush1.bf16.xpose.msra.mxu0 0
        %915 = vmatprep.subr.bf16.mxu0 0
        %916 = vmatpush1.bf16.xpose.msra.mxu0 0
        %917 = vmatprep.subr.bf16.mxu0 0
        %918 = vmatpush1.bf16.xpose.msra.mxu0 0
        %919 = vmatprep.subr.bf16.mxu0 0
        %920 = vmatpush1.bf16.xpose.msra.mxu0 0
        %921 = vmatprep.subr.bf16.mxu0 0
        %922 = vmatpush1.bf16.xpose.msra.mxu0 0
        %923 = vmatprep.subr.bf16.mxu0 0
        %924 = vmatpush1.bf16.xpose.msra.mxu0 0
        %925 = vmatprep.subr.bf16.mxu0 0
        %926 = vmatpush1.bf16.xpose.msra.mxu0 0
        %927 = vmatprep.subr.bf16.mxu0 0
        %928 = vmatpush1.bf16.xpose.msra.mxu0 0
        %929 = vmatprep.subr.bf16.mxu0 0
        %930 = vmatpush1.bf16.xpose.msra.mxu0 0
        %931 = vmatprep.subr.bf16.mxu0 0
        %932 = vmatpush1.bf16.xpose.msra.mxu0 0
        %933 = vmatprep.subr.bf16.mxu0 0
        %934 = vmatpush1.bf16.xpose.msra.mxu0 0
        %935 = vmatprep.mubr.bf16.mxu0 0
        %936 = vmatmul.mubr.bf16.gmra.mrb[0].mxu0 %v898
        %v937 = vpop.f32.mrb[0].mxu0
        %v938 = vadd.f32 %v540, %v937
        %v939 = vpop.f32.mrb[0].mxu0
        %v940 = vpop.f32.mrb[0].mxu0
        %v941 = vpop.f32.mrb[0].mxu0
        %942 = vdwg.mxu0
        %v943 = vsel %vm598, %v938, -inf
        %944 = vmax.xlane.f32.xlu0 %v943
        %v945 = vpop.xlane.xlu0 %944
        %v946 = vsub.f32 %v938, %v945
        %v947 = vmul.f32 %v946, 1.442695
        %v948 = vpow.pop %v947
        %v949 = vsel %vm598, %v948, 0.0
        %950 = vadd.xlane.f32.xlu0 %v949
        %v951 = vpop.xlane.xlu0 %950
        %v952 = vpack.c.bf16 %v948, %v948
        %953 = vrot.lane.b32.xlu0 %v550, 64
        %v954 = vpop.permute.xlu0 %953
        %v956 = vsel %vm598, %v952, 0
        %v959 = vsel %vm612, %v954, 0
        %961 = vmatprep.subr.bf16.mxu0 0
        %962 = vmatpush1.bf16.msra.mxu0 %v959
        %963 = vmatprep.subr.bf16.mxu0 0
        %964 = vmatpush1.bf16.msra.mxu0 0
        %965 = vmatprep.subr.bf16.mxu0 0
        %966 = vmatpush1.bf16.msra.mxu0 0
        %967 = vmatprep.subr.bf16.mxu0 0
        %968 = vmatpush1.bf16.msra.mxu0 0
        %969 = vmatprep.subr.bf16.mxu0 0
        %970 = vmatpush1.bf16.msra.mxu0 0
        %971 = vmatprep.subr.bf16.mxu0 0
        %972 = vmatpush1.bf16.msra.mxu0 0
        %973 = vmatprep.subr.bf16.mxu0 0
        %974 = vmatpush1.bf16.msra.mxu0 0
        %975 = vmatprep.subr.bf16.mxu0 0
        %976 = vmatpush1.bf16.msra.mxu0 0
        %977 = vmatprep.subr.bf16.mxu0 0
        %978 = vmatpush1.bf16.msra.mxu0 0
        %979 = vmatprep.subr.bf16.mxu0 0
        %980 = vmatpush1.bf16.msra.mxu0 0
        %981 = vmatprep.subr.bf16.mxu0 0
        %982 = vmatpush1.bf16.msra.mxu0 0
        %983 = vmatprep.subr.bf16.mxu0 0
        %984 = vmatpush1.bf16.msra.mxu0 0
        %985 = vmatprep.subr.bf16.mxu0 0
        %986 = vmatpush1.bf16.msra.mxu0 0
        %987 = vmatprep.subr.bf16.mxu0 0
        %988 = vmatpush1.bf16.msra.mxu0 0
        %989 = vmatprep.subr.bf16.mxu0 0
        %990 = vmatpush1.bf16.msra.mxu0 0
        %991 = vmatprep.subr.bf16.mxu0 0
        %992 = vmatpush1.bf16.msra.mxu0 0
        %993 = vmatprep.mubr.bf16.mxu0 0
        %994 = vmatmul.mubr.bf16.gmra.mrb[0].mxu0 %v956
        %v995 = vpop.f32.mrb[0].mxu0
        %v996 = vadd.f32 0.0, %v995
        %v997 = vpop.f32.mrb[0].mxu0
        %v998 = vpop.f32.mrb[0].mxu0
        %v999 = vpop.f32.mrb[0].mxu0
        %1000 = vdwg.mxu0
        %v1001 = vrcp.pop %v951
        %v1002 = vmul.f32 %v996, %v1001
        %v1003 = vpack.c.bf16 %v1002, %v1002
        %v1004 = vld [vmem:[#allocation9 + $0x20] sm:$0xf]
        %v1005 = vld [vmem:[#allocation9 + $0x24] sm:$0xf]
        %v1006 = vld [vmem:[#allocation9 + $0x28] sm:$0xf]
        %v1007 = vld [vmem:[#allocation9 + $0x2c] sm:$0xf]
        %v1012 = vunpack.c.l.b16 %v1004
        %v1013 = vunpack.c.l.b16 %v1005
        %v1014 = vunpack.c.l.b16 %v1006
        %v1015 = vunpack.c.l.b16 %v1007
        %v1016 = vpack.c.b16 %v1013, %v1012
        %v1017 = vpack.c.b16 %v1015, %v1014
        %v1021 = vsel %vm551, %v1003, 0
        %1023 = vmatprep.subr.bf16.mxu0 0
        %1024 = vmatpush1.bf16.msra.mxu0 %v1016
        %1025 = vmatprep.subr.bf16.mxu0 0
        %1026 = vmatpush1.bf16.msra.mxu0 %v1017
        %1027 = vmatprep.subr.bf16.mxu0 0
        %1028 = vmatpush1.bf16.msra.mxu0 0
        %1029 = vmatprep.subr.bf16.mxu0 0
        %1030 = vmatpush1.bf16.msra.mxu0 0
        %1031 = vmatprep.subr.bf16.mxu0 0
        %1032 = vmatpush1.bf16.msra.mxu0 0
        %1033 = vmatprep.subr.bf16.mxu0 0
        %1034 = vmatpush1.bf16.msra.mxu0 0
        %1035 = vmatprep.subr.bf16.mxu0 0
        %1036 = vmatpush1.bf16.msra.mxu0 0
        %1037 = vmatprep.subr.bf16.mxu0 0
        %1038 = vmatpush1.bf16.msra.mxu0 0
        %1039 = vmatprep.subr.bf16.mxu0 0
        %1040 = vmatpush1.bf16.msra.mxu0 0
        %1041 = vmatprep.subr.bf16.mxu0 0
        %1042 = vmatpush1.bf16.msra.mxu0 0
        %1043 = vmatprep.subr.bf16.mxu0 0
        %1044 = vmatpush1.bf16.msra.mxu0 0
        %1045 = vmatprep.subr.bf16.mxu0 0
        %1046 = vmatpush1.bf16.msra.mxu0 0
        %1047 = vmatprep.subr.bf16.mxu0 0
        %1048 = vmatpush1.bf16.msra.mxu0 0
        %1049 = vmatprep.subr.bf16.mxu0 0
        %1050 = vmatpush1.bf16.msra.mxu0 0
        %1051 = vmatprep.subr.bf16.mxu0 0
        %1052 = vmatpush1.bf16.msra.mxu0 0
        %1053 = vmatprep.subr.bf16.mxu0 0
        %1054 = vmatpush1.bf16.msra.mxu0 0
        %1055 = vmatprep.mubr.bf16.mxu0 0
        %1056 = vmatmul.mubr.bf16.gmra.mrb[0].mxu0 %v1021
        %v1057 = vpop.f32.mrb[0].mxu0
        %v1058 = vadd.f32 0.0, %v1057
        %v1059 = vpop.f32.mrb[0].mxu0
        %v1060 = vpop.f32.mrb[0].mxu0
        %v1061 = vpop.f32.mrb[0].mxu0
        %1062 = vdwg.mxu0
        %v1063 = vadd.f32 %v892, %v1058
        %1064 = vrot.lane.b32.xlu0 %v548, 32
        %v1065 = vpop.permute.xlu0 %1064
        %1066 = vrot.lane.b32.xlu0 %v549, 32
        %v1067 = vpop.permute.xlu0 %1066
        %v1069 = vsel %vm551, %v1065, 0
        %v1072 = vsel %vm551, %v1067, 0
        %1074 = vmatprep.subr.bf16.mxu0 0
        %1075 = vmatpush1.bf16.xpose.msra.mxu0 %v1072
        %1076 = vmatprep.subr.bf16.mxu0 0
        %1077 = vmatpush1.bf16.xpose.msra.mxu0 0
        %1078 = vmatprep.subr.bf16.mxu0 0
        %1079 = vmatpush1.bf16.xpose.msra.mxu0 0
        %1080 = vmatprep.subr.bf16.mxu0 0
        %1081 = vmatpush1.bf16.xpose.msra.mxu0 0
        %1082 = vmatprep.subr.bf16.mxu0 0
        %1083 = vmatpush1.bf16.xpose.msra.mxu0 0
        %1084 = vmatprep.subr.bf16.mxu0 0
        %1085 = vmatpush1.bf16.xpose.msra.mxu0 0
        %1086 = vmatprep.subr.bf16.mxu0 0
        %1087 = vmatpush1.bf16.xpose.msra.mxu0 0
        %1088 = vmatprep.subr.bf16.mxu0 0
        %1089 = vmatpush1.bf16.xpose.msra.mxu0 0
        %1090 = vmatprep.subr.bf16.mxu0 0
        %1091 = vmatpush1.bf16.xpose.msra.mxu0 0
        %1092 = vmatprep.subr.bf16.mxu0 0
        %1093 = vmatpush1.bf16.xpose.msra.mxu0 0
        %1094 = vmatprep.subr.bf16.mxu0 0
        %1095 = vmatpush1.bf16.xpose.msra.mxu0 0
        %1096 = vmatprep.subr.bf16.mxu0 0
        %1097 = vmatpush1.bf16.xpose.msra.mxu0 0
        %1098 = vmatprep.subr.bf16.mxu0 0
        %1099 = vmatpush1.bf16.xpose.msra.mxu0 0
        %1100 = vmatprep.subr.bf16.mxu0 0
        %1101 = vmatpush1.bf16.xpose.msra.mxu0 0
        %1102 = vmatprep.subr.bf16.mxu0 0
        %1103 = vmatpush1.bf16.xpose.msra.mxu0 0
        %1104 = vmatprep.subr.bf16.mxu0 0
        %1105 = vmatpush1.bf16.xpose.msra.mxu0 0
        %1106 = vmatprep.mubr.bf16.mxu0 0
        %1107 = vmatmul.mubr.bf16.gmra.mrb[0].mxu0 %v1069
        %v1108 = vpop.f32.mrb[0].mxu0
        %v1109 = vadd.f32 %v540, %v1108
        %v1110 = vpop.f32.mrb[0].mxu0
        %v1111 = vpop.f32.mrb[0].mxu0
        %v1112 = vpop.f32.mrb[0].mxu0
        %1113 = vdwg.mxu0
        %v1114 = vsel %vm598, %v1109, -inf
        %1115 = vmax.xlane.f32.xlu0 %v1114
        %v1116 = vpop.xlane.xlu0 %1115
        %v1117 = vsub.f32 %v1109, %v1116
        %v1118 = vmul.f32 %v1117, 1.442695
        %v1119 = vpow.pop %v1118
        %v1120 = vsel %vm598, %v1119, 0.0
        %1121 = vadd.xlane.f32.xlu0 %v1120
        %v1122 = vpop.xlane.xlu0 %1121
        %v1123 = vpack.c.bf16 %v1119, %v1119
        %1124 = vrot.lane.b32.xlu0 %v550, 32
        %v1125 = vpop.permute.xlu0 %1124
        %v1127 = vsel %vm598, %v1123, 0
        %v1130 = vsel %vm612, %v1125, 0
        %1132 = vmatprep.subr.bf16.mxu0 0
        %1133 = vmatpush1.bf16.msra.mxu0 %v1130
        %1134 = vmatprep.subr.bf16.mxu0 0
        %1135 = vmatpush1.bf16.msra.mxu0 0
        %1136 = vmatprep.subr.bf16.mxu0 0
        %1137 = vmatpush1.bf16.msra.mxu0 0
        %1138 = vmatprep.subr.bf16.mxu0 0
        %1139 = vmatpush1.bf16.msra.mxu0 0
        %1140 = vmatprep.subr.bf16.mxu0 0
        %1141 = vmatpush1.bf16.msra.mxu0 0
        %1142 = vmatprep.subr.bf16.mxu0 0
        %1143 = vmatpush1.bf16.msra.mxu0 0
        %1144 = vmatprep.subr.bf16.mxu0 0
        %1145 = vmatpush1.bf16.msra.mxu0 0
        %1146 = vmatprep.subr.bf16.mxu0 0
        %1147 = vmatpush1.bf16.msra.mxu0 0
        %1148 = vmatprep.subr.bf16.mxu0 0
        %1149 = vmatpush1.bf16.msra.mxu0 0
        %1150 = vmatprep.subr.bf16.mxu0 0
        %1151 = vmatpush1.bf16.msra.mxu0 0
        %1152 = vmatprep.subr.bf16.mxu0 0
        %1153 = vmatpush1.bf16.msra.mxu0 0
        %1154 = vmatprep.subr.bf16.mxu0 0
        %1155 = vmatpush1.bf16.msra.mxu0 0
        %1156 = vmatprep.subr.bf16.mxu0 0
        %1157 = vmatpush1.bf16.msra.mxu0 0
        %1158 = vmatprep.subr.bf16.mxu0 0
        %1159 = vmatpush1.bf16.msra.mxu0 0
        %1160 = vmatprep.subr.bf16.mxu0 0
        %1161 = vmatpush1.bf16.msra.mxu0 0
        %1162 = vmatprep.subr.bf16.mxu0 0
        %1163 = vmatpush1.bf16.msra.mxu0 0
        %1164 = vmatprep.mubr.bf16.mxu0 0
        %1165 = vmatmul.mubr.bf16.gmra.mrb[0].mxu0 %v1127
        %v1166 = vpop.f32.mrb[0].mxu0
        %v1167 = vadd.f32 0.0, %v1166
        %v1168 = vpop.f32.mrb[0].mxu0
        %v1169 = vpop.f32.mrb[0].mxu0
        %v1170 = vpop.f32.mrb[0].mxu0
        %1171 = vdwg.mxu0
        %v1172 = vrcp.pop %v1122
        %v1173 = vmul.f32 %v1167, %v1172
        %v1174 = vpack.c.bf16 %v1173, %v1173
        %v1175 = vld [vmem:[#allocation9 + $0x30] sm:$0xf]
        %v1176 = vld [vmem:[#allocation9 + $0x34] sm:$0xf]
        %v1177 = vld [vmem:[#allocation9 + $0x38] sm:$0xf]
        %v1178 = vld [vmem:[#allocation9 + $0x3c] sm:$0xf]
        %v1183 = vunpack.c.l.b16 %v1175
        %v1184 = vunpack.c.l.b16 %v1176
        %v1185 = vunpack.c.l.b16 %v1177
        %v1186 = vunpack.c.l.b16 %v1178
        %v1187 = vpack.c.b16 %v1184, %v1183
        %v1188 = vpack.c.b16 %v1186, %v1185
        %v1192 = vsel %vm551, %v1174, 0
        %1194 = vmatprep.subr.bf16.mxu0 0
        %1195 = vmatpush1.bf16.msra.mxu0 %v1187
        %1196 = vmatprep.subr.bf16.mxu0 0
        %1197 = vmatpush1.bf16.msra.mxu0 %v1188
        %1198 = vmatprep.subr.bf16.mxu0 0
        %1199 = vmatpush1.bf16.msra.mxu0 0
        %1200 = vmatprep.subr.bf16.mxu0 0
        %1201 = vmatpush1.bf16.msra.mxu0 0
        %1202 = vmatprep.subr.bf16.mxu0 0
        %1203 = vmatpush1.bf16.msra.mxu0 0
        %1204 = vmatprep.subr.bf16.mxu0 0
        %1205 = vmatpush1.bf16.msra.mxu0 0
        %1206 = vmatprep.subr.bf16.mxu0 0
        %1207 = vmatpush1.bf16.msra.mxu0 0
        %1208 = vmatprep.subr.bf16.mxu0 0
        %1209 = vmatpush1.bf16.msra.mxu0 0
        %1210 = vmatprep.subr.bf16.mxu0 0
        %1211 = vmatpush1.bf16.msra.mxu0 0
        %1212 = vmatprep.subr.bf16.mxu0 0
        %1213 = vmatpush1.bf16.msra.mxu0 0
        %1214 = vmatprep.subr.bf16.mxu0 0
        %1215 = vmatpush1.bf16.msra.mxu0 0
        %1216 = vmatprep.subr.bf16.mxu0 0
        %1217 = vmatpush1.bf16.msra.mxu0 0
        %1218 = vmatprep.subr.bf16.mxu0 0
        %1219 = vmatpush1.bf16.msra.mxu0 0
        %1220 = vmatprep.subr.bf16.mxu0 0
        %1221 = vmatpush1.bf16.msra.mxu0 0
        %1222 = vmatprep.subr.bf16.mxu0 0
        %1223 = vmatpush1.bf16.msra.mxu0 0
        %1224 = vmatprep.subr.bf16.mxu0 0
        %1225 = vmatpush1.bf16.msra.mxu0 0
        %1226 = vmatprep.mubr.bf16.mxu0 0
        %1227 = vmatmul.mubr.bf16.gmra.mrb[0].mxu0 %v1192
        %v1228 = vpop.f32.mrb[0].mxu0
        %v1229 = vadd.f32 0.0, %v1228
        %v1230 = vpop.f32.mrb[0].mxu0
        %v1231 = vpop.f32.mrb[0].mxu0
        %v1232 = vpop.f32.mrb[0].mxu0
        %1233 = vdwg.mxu0
        %v1234 = vadd.f32 %v1063, %v1229
        %1235 = vst [vmem:[%s273] sm:$0xff] %v1234
        %s1236 = sand.u32 %s146, 1
        %s1237 = scalar_lea.sflag [#allocation6], %s1236
        %s1238 = sand.u32 %s146, 1
        %s1239 = smul.addr %s1238, 8
        %s1240 = scalar_lea.vmem [#allocation10], %s1239
        // Predicated region
        $region53: #{tpu_custom_call.1} parent=39 // pred_check
          %p1241 = pneg %p156
        $region54: #{tpu_custom_call.1} parent=39 // pred_check_branch
          %1243 = sbr.rel (%p1241) target = $region56
        $region55: #{tpu_custom_call.1} parent=39 // pred_region
          %s1245 = ssub.s32 128, 128
          %1246 = vsyncadd %s1237, %s1245
          %s1247 = smul.addr %s28, 128
          %s1248 = scalar_lea.hbm %s6, %s1247
          %s1250 = sshll.u32 %s1240, 4
          %s1251 = int_to_ptr.vmem [resolvable:$true] %s1250
          %1253 = dma.vmem_to_hbm [thread:$0]  %s1251, 128, %s1248, %s1237
        $region56: #{tpu_custom_call.1} parent=39 // pred_fallthru
          _
      $region40: #{tpu_custom_call.1} parent=5 // pred_fallthru
        _
      %p1254 = scmp.le.s32.totalorder 2, %s23
      // Predicated region
      $region57: #{tpu_custom_call.1} parent=5 // pred_check
        %p1255 = pneg %p1254
      $region58: #{tpu_custom_call.1} parent=5 // pred_check_branch
        %1257 = sbr.rel (%p1255) target = $region60
      $region59: #{tpu_custom_call.1} parent=5 // pred_region
        %s1258 = ssub.s32 %s23, 2
        // Predicated region
        $region61: #{tpu_custom_call.1} parent=59 // pred_check
          %p1259 = pneg %p162
        $region62: #{tpu_custom_call.1} parent=59 // pred_check_branch
          %1261 = sbr.rel (%p1259) target = $region64
        $region63: #{tpu_custom_call.1} parent=59 // pred_region
          %s1262 = sand.u32 %s147, 1
          %s1263 = scalar_lea.sflag [#allocation6], %s1262
          %s1264 = sand.u32 %s147, 1
          %s1265 = smul.addr %s1264, 8
          %s1266 = scalar_lea.vmem [#allocation10], %s1265
          %1267 = dma.done %s1263, 128
        $region64: #{tpu_custom_call.1} parent=59 // pred_fallthru
          _
      $region60: #{tpu_custom_call.1} parent=5 // pred_fallthru
        _
    $region6: #{tpu_custom_call.1} parent=1 // loop_footer
      %s27 = sadd.s32 1, %s23
    $region7: #{tpu_custom_call.1} parent=1 // loop_footer_branch
      %22 = sbr.rel target = $region3
    $region8: #{tpu_custom_call.1} parent=1 // loop_exit
      _
    %1268 = vsyncpa [#allocation5], 1
    %s1269 = scalar_lea.sflag [#allocation5], 1
    %1270 = vsyncpa %s1269, 1
    %1271 = vsyncpa [#allocation8], 1
    %1272 = vsyncpa [#allocation6], 1
    %s1273 = scalar_lea.sflag [#allocation6], 1
    %1274 = vsyncpa %s1273, 1

// kernel: tpu_custom_call.1
$region0: #{tpu_custom_call.1}
  #allocation0 [shape = 'u32[]', space=smem, size = 0x4, offset = 0x4, fixed_abs, tag = 'smem constant byte address 0x4 - core index']
  #allocation1 [shape = 'u32[144,128]{1,0:T(1,128)}', space=vmem, size = 0x12000, scoped, tag = 'internal scratch']
  #allocation2 [shape = 's32[1]{0}', space=sflag, size = 0x4, scoped, tag = 'scoped memory for tpu_custom_call.1']
  #allocation3 [shape = 'u8[512]{0}', space=smem, size = 0x200, scoped, tag = 'prefetched SMEM operand 0']
  %s0 = inlined_call_operand.hbm [shape: s32[2], index: 0, kind: input, shape index: {}]
  %s1 = inlined_call_operand.hbm [shape: f32[2,8,128], index: 1, kind: input, shape index: {}]
  %s2 = inlined_call_operand.hbm [shape: bf16[128,384], index: 2, kind: input, shape index: {}]
  %s3 = inlined_call_operand.vmem [shape: f32[1,384], index: 3, kind: input, shape index: {}]
  %s4 = inlined_call_operand.hbm [shape: bf16[128,128], index: 4, kind: input, shape index: {}]
  %s5 = inlined_call_operand.vmem [shape: f32[1,128], index: 5, kind: input, shape index: {}]
  %s6 = inlined_call_operand.hbm [shape: f32[2,8,128], index: 6, kind: output, shape index: {}]
  %s7 = sld [smem:[#allocation0]]
  $region65: #{tpu_custom_call.1} parent=0
    _
  %s9 = ssub.s32 1, %s7
  %s10 = scalar_select 0, %s9, %s7
  %12 = dma.hbm_to_smem %s0, 16, [#allocation3], [#allocation2]
  %13 = dma.done [#allocation2], 16
  %14 = sfence
  $region1: #{tpu_custom_call.1} parent=0
    #allocation4 [shape = 'u8[8192]{0}', space=vmem, size = 0x2000, scoped, tag = 'input window, operand 1']
    #allocation5 [shape = 's32[2]{0}', space=sflag, size = 0x8, scoped, tag = 'scoped memory for tpu_custom_call.1']
    #allocation6 [shape = 's32[2]{0}', space=sflag, size = 0x8, scoped, tag = 'scoped memory for tpu_custom_call.1']
    #allocation7 [shape = 'u8[98304]{0}', space=vmem, size = 0x18000, scoped, tag = 'input window, operand 2, single buffered']
    #allocation8 [shape = 's32[1]{0}', space=sflag, size = 0x4, scoped, tag = 'scoped memory for tpu_custom_call.1']
    #allocation9 [shape = 'u8[32768]{0}', space=vmem, size = 0x8000, scoped, tag = 'input window, operand 4, single buffered']
    #allocation10 [shape = 'u8[8192]{0}', space=vmem, size = 0x2000, scoped, tag = 'output window, operand 0']
    %15 = vsyncpa [#allocation5], 0
    %s16 = scalar_lea.sflag [#allocation5], 1
    %17 = vsyncpa %s16, 0
    %18 = vsyncpa [#allocation8], 0
    %19 = vsyncpa [#allocation6], 0
    %s20 = scalar_lea.sflag [#allocation6], 1
    %21 = vsyncpa %s20, 0
    loop: start=0, step=1, limit=4
    $region2: #{tpu_custom_call.1} parent=1 // loop_pre_header
      _
    $region3: #{tpu_custom_call.1} parent=1 // loop_header
      %s23 = sphi 0, %s27
      %p24 = scmp.ge.s32.totalorder %s23, 4
      %s33 = sphi 0, %s35
      %s36 = sphi 0, %s33
      %s37 = sphi 0, %s36
      %s53 = sphi 0, %s37
      %s57 = sphi 0, %s57
      %s59 = sphi 0, %s57
      %s60 = sphi 0, %s59
      %s74 = sphi 0, %s60
      %s78 = sphi 0, %s78
      %s80 = sphi 0, %s78
      %s81 = sphi 0, %s80
      %s95 = sphi 0, %s81
      %s99 = sphi 0, %s99
      %s101 = sphi 0, %s99
      %s102 = sphi 0, %s101
      %s116 = sphi 0, %s102
      %s120 = sphi 0, %s120
      %s122 = sphi 0, %s120
      %s123 = sphi 0, %s122
      %s137 = sphi 0, %s123
      %s143 = sphi 0, %s145
      %s146 = sphi 0, %s143
      %s147 = sphi 0, %s146
      %s163 = sphi 0, %s147
    $region4: #{tpu_custom_call.1} parent=1 // loop_header_branch
      %26 = sbr.rel (%p24) target = $region8
    $region5: #{tpu_custom_call.1} parent=1 // loop_body
      %s28 = ssub.s32 %s23, 1
      %s29 = ssub.s32 %s23, 2
      %s30 = sadd.s32 %s23, 1
      %s31 = ssub.s32 %s23, %s30
      %p32 = scmp.eq.s32.totalorder %s31, 0
      %s34 = sadd.s32 %s33, 1
      %s35 = scalar_select %p32, %s33, %s34
      %p38 = pneg %p32
      %p39 = scmp.eq.s32.totalorder %s23, 1
      %p40 = por %p38, %p39
      %p41 = scmp.ne.s32.totalorder %s33, %s36
      %p42 = scmp.eq.s32.totalorder %s23, 0
      %p43 = por %p41, %p42
      %p44 = scmp.ne.s32.totalorder %s33, %s36
      %p45 = scmp.eq.s32.totalorder %s28, 1
      %p46 = por %p44, %p45
      %p47 = scmp.ne.s32.totalorder %s36, %s37
      %p48 = scmp.eq.s32.totalorder %s28, 0
      %p49 = por %p47, %p48
      %p50 = scmp.ne.s32.totalorder %s36, %s37
      %p51 = scmp.eq.s32.totalorder %s29, 1
      %p52 = por %p50, %p51
      %p54 = scmp.ne.s32.totalorder %s37, %s53
      %p55 = scmp.eq.s32.totalorder %s29, 0
      %p56 = por %p54, %p55
      %s58 = sadd.s32 %s57, 1
      %p61 = scmp.eq.s32.totalorder %s23, 1
      %p62 = scmp.ne.s32.totalorder %s57, %s59
      %p63 = scmp.eq.s32.totalorder %s23, 0
      %p64 = por %p62, %p63
      %p65 = scmp.ne.s32.totalorder %s57, %s59
      %p66 = scmp.eq.s32.totalorder %s28, 1
      %p67 = por %p65, %p66
      %p68 = scmp.ne.s32.totalorder %s59, %s60
      %p69 = scmp.eq.s32.totalorder %s28, 0
      %p70 = por %p68, %p69
      %p71 = scmp.ne.s32.totalorder %s59, %s60
      %p72 = scmp.eq.s32.totalorder %s29, 1
      %p73 = por %p71, %p72
      %p75 = scmp.ne.s32.totalorder %s60, %s74
      %p76 = scmp.eq.s32.totalorder %s29, 0
      %p77 = por %p75, %p76
      %s79 = sadd.s32 %s78, 1
      %p82 = scmp.eq.s32.totalorder %s23, 1
      %p83 = scmp.ne.s32.totalorder %s78, %s80
      %p84 = scmp.eq.s32.totalorder %s23, 0
      %p85 = por %p83, %p84
      %p86 = scmp.ne.s32.totalorder %s78, %s80
      %p87 = scmp.eq.s32.totalorder %s28, 1
      %p88 = por %p86, %p87
      %p89 = scmp.ne.s32.totalorder %s80, %s81
      %p90 = scmp.eq.s32.totalorder %s28, 0
      %p91 = por %p89, %p90
      %p92 = scmp.ne.s32.totalorder %s80, %s81
      %p93 = scmp.eq.s32.totalorder %s29, 1
      %p94 = por %p92, %p93
      %p96 = scmp.ne.s32.totalorder %s81, %s95
      %p97 = scmp.eq.s32.totalorder %s29, 0
      %p98 = por %p96, %p97
      %s100 = sadd.s32 %s99, 1
      %p103 = scmp.eq.s32.totalorder %s23, 1
      %p104 = scmp.ne.s32.totalorder %s99, %s101
      %p105 = scmp.eq.s32.totalorder %s23, 0
      %p106 = por %p104, %p105
      %p107 = scmp.ne.s32.totalorder %s99, %s101
      %p108 = scmp.eq.s32.totalorder %s28, 1
      %p109 = por %p107, %p108
      %p110 = scmp.ne.s32.totalorder %s101, %s102
      %p111 = scmp.eq.s32.totalorder %s28, 0
      %p112 = por %p110, %p111
      %p113 = scmp.ne.s32.totalorder %s101, %s102
      %p114 = scmp.eq.s32.totalorder %s29, 1
      %p115 = por %p113, %p114
      %p117 = scmp.ne.s32.totalorder %s102, %s116
      %p118 = scmp.eq.s32.totalorder %s29, 0
      %p119 = por %p117, %p118
      %s121 = sadd.s32 %s120, 1
      %p124 = scmp.eq.s32.totalorder %s23, 1
      %p125 = scmp.ne.s32.totalorder %s120, %s122
      %p126 = scmp.eq.s32.totalorder %s23, 0
      %p127 = por %p125, %p126
      %p128 = scmp.ne.s32.totalorder %s120, %s122
      %p129 = scmp.eq.s32.totalorder %s28, 1
      %p130 = por %p128, %p129
      %p131 = scmp.ne.s32.totalorder %s122, %s123
      %p132 = scmp.eq.s32.totalorder %s28, 0
      %p133 = por %p131, %p132
      %p134 = scmp.ne.s32.totalorder %s122, %s123
      %p135 = scmp.eq.s32.totalorder %s29, 1
      %p136 = por %p134, %p135
      %p138 = scmp.ne.s32.totalorder %s123, %s137
      %p139 = scmp.eq.s32.totalorder %s29, 0
      %p140 = por %p138, %p139
      %s141 = ssub.s32 %s23, %s30
      %p142 = scmp.eq.s32.totalorder %s141, 0
      %s144 = sadd.s32 %s143, 1
      %s145 = scalar_select %p142, %s143, %s144
      %p148 = pneg %p142
      %p149 = scmp.eq.s32.totalorder %s23, 1
      %p150 = por %p148, %p149
      %p151 = scmp.ne.s32.totalorder %s143, %s146
      %p152 = scmp.eq.s32.totalorder %s23, 0
      %p153 = por %p151, %p152
      %p154 = scmp.ne.s32.totalorder %s143, %s146
      %p155 = scmp.eq.s32.totalorder %s28, 1
      %p156 = por %p154, %p155
      %p157 = scmp.ne.s32.totalorder %s146, %s147
      %p158 = scmp.eq.s32.totalorder %s28, 0
      %p159 = por %p157, %p158
      %p160 = scmp.ne.s32.totalorder %s146, %s147
      %p161 = scmp.eq.s32.totalorder %s29, 1
      %p162 = por %p160, %p161
      %p164 = scmp.ne.s32.totalorder %s147, %s163
      %p165 = scmp.eq.s32.totalorder %s29, 0
      %p166 = por %p164, %p165
      %p167 = scmp.le.s32.totalorder 1, %s23
      %p168 = scmp.lt.s32.totalorder %s23, 3
      %p169 = pnand %p167, %p168
      %p170 = pneg %p169
      // Predicated region
      $region9: #{tpu_custom_call.1} parent=5 // pred_check
        _
      $region10: #{tpu_custom_call.1} parent=5 // pred_check_branch
        %172 = sbr.rel (%p169) target = $region12
      $region11: #{tpu_custom_call.1} parent=5 // pred_region
        %s173 = ssub.s32 %s23, 1
        // Predicated region
        $region13: #{tpu_custom_call.1} parent=11 // pred_check
          %p174 = pneg %p70
        $region14: #{tpu_custom_call.1} parent=11 // pred_check_branch
          %176 = sbr.rel (%p174) target = $region16
        $region15: #{tpu_custom_call.1} parent=11 // pred_region
          %s178 = ssub.s32 3072, 3072
          %179 = vsyncadd [#allocation8], %s178
          %s180 = sshll.u32 [#allocation7], 4
          %s181 = int_to_ptr.vmem [resolvable:$true] %s180
          %186 = dma.hbm_to_vmem [thread:$0]  %s2, 3072, %s181, [#allocation8], 192, 192, 12
        $region16: #{tpu_custom_call.1} parent=11 // pred_fallthru
          _
        // Predicated region
        $region17: #{tpu_custom_call.1} parent=11 // pred_check
          %p187 = pneg %p91
        $region18: #{tpu_custom_call.1} parent=11 // pred_check_branch
          %189 = sbr.rel (%p187) target = $region20
        $region19: #{tpu_custom_call.1} parent=11 // pred_region
          _
        $region20: #{tpu_custom_call.1} parent=11 // pred_fallthru
          _
        // Predicated region
        $region21: #{tpu_custom_call.1} parent=11 // pred_check
          %p190 = pneg %p112
        $region22: #{tpu_custom_call.1} parent=11 // pred_check_branch
          %192 = sbr.rel (%p190) target = $region24
        $region23: #{tpu_custom_call.1} parent=11 // pred_region
          %s194 = ssub.s32 1024, 1024
          %195 = vsyncadd [#allocation8], %s194
          %s196 = sshll.u32 [#allocation9], 4
          %s197 = int_to_ptr.vmem [resolvable:$true] %s196
          %202 = dma.hbm_to_vmem [thread:$0]  %s4, 1024, %s197, [#allocation8], 64, 64, 4
        $region24: #{tpu_custom_call.1} parent=11 // pred_fallthru
          _
        // Predicated region
        $region25: #{tpu_custom_call.1} parent=11 // pred_check
          %p203 = pneg %p133
        $region26: #{tpu_custom_call.1} parent=11 // pred_check_branch
          %205 = sbr.rel (%p203) target = $region28
        $region27: #{tpu_custom_call.1} parent=11 // pred_region
          _
        $region28: #{tpu_custom_call.1} parent=11 // pred_fallthru
          _
      $region12: #{tpu_custom_call.1} parent=5 // pred_fallthru
        _
      %p206 = scmp.lt.s32.totalorder %s23, 2
      // Predicated region
      $region29: #{tpu_custom_call.1} parent=5 // pred_check
        %p207 = pneg %p206
      $region30: #{tpu_custom_call.1} parent=5 // pred_check_branch
        %209 = sbr.rel (%p207) target = $region32
      $region31: #{tpu_custom_call.1} parent=5 // pred_region
        // Predicated region
        $region33: #{tpu_custom_call.1} parent=31 // pred_check
          %p210 = pneg %p43
        $region34: #{tpu_custom_call.1} parent=31 // pred_check_branch
          %212 = sbr.rel (%p210) target = $region36
        $region35: #{tpu_custom_call.1} parent=31 // pred_region
          %s213 = sand.u32 %s33, 1
          %s214 = scalar_lea.sflag [#allocation5], %s213
          %s215 = sand.u32 %s33, 1
          %s216 = smul.addr %s215, 8
          %s217 = scalar_lea.vmem [#allocation4], %s216
          %s219 = ssub.s32 128, 128
          %220 = vsyncadd %s214, %s219
          %s221 = smul.addr %s23, 128
          %s222 = scalar_lea.hbm %s1, %s221
          %s224 = sshll.u32 %s217, 4
          %s225 = int_to_ptr.vmem [resolvable:$true] %s224
          %227 = dma.hbm_to_vmem [thread:$0]  %s222, 128, %s225, %s214
        $region36: #{tpu_custom_call.1} parent=31 // pred_fallthru
          _
      $region32: #{tpu_custom_call.1} parent=5 // pred_fallthru
        _
      %p228 = scmp.le.s32.totalorder 1, %s23
      %p229 = scmp.lt.s32.totalorder %s23, 3
      %p230 = pnand %p228, %p229
      %p231 = pneg %p230
      // Predicated region
      $region37: #{tpu_custom_call.1} parent=5 // pred_check
        _
      $region38: #{tpu_custom_call.1} parent=5 // pred_check_branch
        %233 = sbr.rel (%p230) target = $region40
      $region39: #{tpu_custom_call.1} parent=5 // pred_region
        %s234 = ssub.s32 %s23, 1
        %s235 = sand.u32 %s36, 1
        %s236 = scalar_lea.sflag [#allocation5], %s235
        %s237 = sand.u32 %s36, 1
        %s238 = smul.addr %s237, 8
        %s239 = scalar_lea.vmem [#allocation4], %s238
        // Predicated region
        $region41: #{tpu_custom_call.1} parent=39 // pred_check
          %p240 = pneg %p49
        $region42: #{tpu_custom_call.1} parent=39 // pred_check_branch
          %242 = sbr.rel (%p240) target = $region44
        $region43: #{tpu_custom_call.1} parent=39 // pred_region
          %243 = dma.done %s236, 128
        $region44: #{tpu_custom_call.1} parent=39 // pred_fallthru
          _
        // Predicated region
        $region45: #{tpu_custom_call.1} parent=39 // pred_check
          %p244 = pneg %p70
        $region46: #{tpu_custom_call.1} parent=39 // pred_check_branch
          %246 = sbr.rel (%p244) target = $region48
        $region47: #{tpu_custom_call.1} parent=39 // pred_region
          %247 = dma.done [#allocation8], 3072
        $region48: #{tpu_custom_call.1} parent=39 // pred_fallthru
          _
        // Predicated region
        $region49: #{tpu_custom_call.1} parent=39 // pred_check
          %p248 = pneg %p112
        $region50: #{tpu_custom_call.1} parent=39 // pred_check_branch
          %250 = sbr.rel (%p248) target = $region52
        $region51: #{tpu_custom_call.1} parent=39 // pred_region
          %251 = dma.done [#allocation8], 1024
        $region52: #{tpu_custom_call.1} parent=39 // pred_fallthru
          _
        %s252 = sand.u32 %s36, 1
        %s253 = scalar_lea.sflag [#allocation5], %s252
        %s254 = sand.u32 %s36, 1
        %s255 = smul.addr %s254, 8
        %s256 = scalar_lea.vmem [#allocation4], %s255
        %p257 = pneg %p49
        %p258 = pneg %p46
        %p259 = pneg %p70
        %p260 = pneg %p67
        %p261 = pneg %p91
        %p262 = pneg %p88
        %p263 = pneg %p112
        %p264 = pneg %p109
        %p265 = pneg %p133
        %p266 = pneg %p130
        %p267 = pneg %p159
        %p268 = pneg %p156
        %s269 = sand.u32 %s146, 1
        %s270 = scalar_lea.sflag [#allocation6], %s269
        %s271 = sand.u32 %s146, 1
        %s272 = smul.addr %s271, 8
        %s273 = scalar_lea.vmem [#allocation10], %s272
        %v275 = vld [vmem:[%s239] sm:$0xff]
        %v276 = vpack.c.bf16 %v275, %v275
        %v277 = vld [vmem:[#allocation7] sm:$0xff]
        %v278 = vld [vmem:[#allocation7 + $0x8] sm:$0xf]
        %v279 = vld [vmem:[#allocation7 + $0xc] sm:$0xff]
        %v280 = vld [vmem:[#allocation7 + $0x14] sm:$0xf]
        %v281 = vld [vmem:[#allocation7 + $0x18] sm:$0xff]
        %v282 = vld [vmem:[#allocation7 + $0x20] sm:$0xf]
        %v283 = vld [vmem:[#allocation7 + $0x24] sm:$0xff]
        %v284 = vld [vmem:[#allocation7 + $0x2c] sm:$0xf]
        %v285 = vld [vmem:[#allocation7 + $0x30] sm:$0xff]
        %v286 = vld [vmem:[#allocation7 + $0x38] sm:$0xf]
        %v287 = vld [vmem:[#allocation7 + $0x3c] sm:$0xff]
        %v288 = vld [vmem:[#allocation7 + $0x44] sm:$0xf]
        %v289 = vld [vmem:[#allocation7 + $0x48] sm:$0xff]
        %v290 = vld [vmem:[#allocation7 + $0x50] sm:$0xf]
        %v291 = vld [vmem:[#allocation7 + $0x54] sm:$0xff]
        %v292 = vld [vmem:[#allocation7 + $0x5c] sm:$0xf]
        %v293 = vld [vmem:[#allocation7 + $0x60] sm:$0xff]
        %v294 = vld [vmem:[#allocation7 + $0x68] sm:$0xf]
        %v295 = vld [vmem:[#allocation7 + $0x6c] sm:$0xff]
        %v296 = vld [vmem:[#allocation7 + $0x74] sm:$0xf]
        %v297 = vld [vmem:[#allocation7 + $0x78] sm:$0xff]
        %v298 = vld [vmem:[#allocation7 + $0x80] sm:$0xf]
        %v299 = vld [vmem:[#allocation7 + $0x84] sm:$0xff]
        %v300 = vld [vmem:[#allocation7 + $0x8c] sm:$0xf]
        %v301 = vld [vmem:[#allocation7 + $0x90] sm:$0xff]
        %v302 = vld [vmem:[#allocation7 + $0x98] sm:$0xf]
        %v303 = vld [vmem:[#allocation7 + $0x9c] sm:$0xff]
        %v304 = vld [vmem:[#allocation7 + $0xa4] sm:$0xf]
        %v305 = vld [vmem:[#allocation7 + $0xa8] sm:$0xff]
        %v306 = vld [vmem:[#allocation7 + $0xb0] sm:$0xf]
        %v307 = vld [vmem:[#allocation7 + $0xb4] sm:$0xff]
        %v308 = vld [vmem:[#allocation7 + $0xbc] sm:$0xf]
        %v309 = vld [vmem:[%s3] sm:$0x7]
        %v311 = vlaneseq
        %v312 = vshrl.u32 %v311, 7
        %v313 = vsub.s32 0, %v312
        %v314 = vrot.slane %v309, %v313
        %v315 = vlaneseq
        %v316 = vshrl.u32 %v315, 7
        %v317 = vsub.s32 1, %v316
        %v318 = vrot.slane %v309, %v317
        %v319 = vlaneseq
        %v320 = vshrl.u32 %v319, 7
        %v321 = vsub.s32 2, %v320
        %v322 = vrot.slane %v309, %v321
        %v358 = vunpack.c.l.b16 %v277
        %v359 = vunpack.c.h.b16 %v277
        %v360 = vunpack.c.l.b16 %v278
        %v361 = vunpack.c.l.b16 %v279
        %v362 = vunpack.c.h.b16 %v279
        %v363 = vunpack.c.l.b16 %v280
        %v364 = vunpack.c.l.b16 %v281
        %v365 = vunpack.c.h.b16 %v281
        %v366 = vunpack.c.l.b16 %v282
        %v367 = vunpack.c.l.b16 %v283
        %v368 = vunpack.c.h.b16 %v283
        %v369 = vunpack.c.l.b16 %v284
        %v370 = vunpack.c.l.b16 %v285
        %v371 = vunpack.c.h.b16 %v285
        %v372 = vunpack.c.l.b16 %v286
        %v373 = vunpack.c.l.b16 %v287
        %v374 = vunpack.c.h.b16 %v287
        %v375 = vunpack.c.l.b16 %v288
        %v376 = vunpack.c.l.b16 %v289
        %v377 = vunpack.c.h.b16 %v289
        %v378 = vunpack.c.l.b16 %v290
        %v379 = vunpack.c.l.b16 %v291
        %v380 = vunpack.c.h.b16 %v291
        %v381 = vunpack.c.l.b16 %v292
        %v382 = vunpack.c.l.b16 %v293
        %v383 = vunpack.c.h.b16 %v293
        %v384 = vunpack.c.l.b16 %v294
        %v385 = vunpack.c.l.b16 %v295
        %v386 = vunpack.c.h.b16 %v295
        %v387 = vunpack.c.l.b16 %v296
        %v388 = vunpack.c.l.b16 %v297
        %v389 = vunpack.c.h.b16 %v297
        %v390 = vunpack.c.l.b16 %v298
        %v391 = vunpack.c.l.b16 %v299
        %v392 = vunpack.c.h.b16 %v299
        %v393 = vunpack.c.l.b16 %v300
        %v394 = vunpack.c.l.b16 %v301
        %v395 = vunpack.c.h.b16 %v301
        %v396 = vunpack.c.l.b16 %v302
        %v397 = vunpack.c.l.b16 %v303
        %v398 = vunpack.c.h.b16 %v303
        %v399 = vunpack.c.l.b16 %v304
        %v400 = vunpack.c.l.b16 %v305
        %v401 = vunpack.c.h.b16 %v305
        %v402 = vunpack.c.l.b16 %v306
        %v403 = vunpack.c.l.b16 %v307
        %v404 = vunpack.c.h.b16 %v307
        %v405 = vunpack.c.l.b16 %v308
        %v406 = vpack.c.b16 %v361, %v358
        %v407 = vpack.c.b16 %v362, %v359
        %v408 = vpack.c.b16 %v363, %v360
        %v409 = vpack.c.b16 %v367, %v364
        %v410 = vpack.c.b16 %v368, %v365
        %v411 = vpack.c.b16 %v369, %v366
        %v412 = vpack.c.b16 %v373, %v370
        %v413 = vpack.c.b16 %v374, %v371
        %v414 = vpack.c.b16 %v375, %v372
        %v415 = vpack.c.b16 %v379, %v376
        %v416 = vpack.c.b16 %v380, %v377
        %v417 = vpack.c.b16 %v381, %v378
        %v418 = vpack.c.b16 %v385, %v382
        %v419 = vpack.c.b16 %v386, %v383
        %v420 = vpack.c.b16 %v387, %v384
        %v421 = vpack.c.b16 %v391, %v388
        %v422 = vpack.c.b16 %v392, %v389
        %v423 = vpack.c.b16 %v393, %v390
        %v424 = vpack.c.b16 %v397, %v394
        %v425 = vpack.c.b16 %v398, %v395
        %v426 = vpack.c.b16 %v399, %v396
        %v427 = vpack.c.b16 %v403, %v400
        %v428 = vpack.c.b16 %v404, %v401
        %v429 = vpack.c.b16 %v405, %v402
        %454 = vmatprep.subr.bf16.mxu0 %v407
        %455 = vmatpush1.bf16.msra.mxu0 %v406
        %456 = vmatprep.subr.bf16.mxu0 %v410
        %457 = vmatpush1.bf16.msra.mxu0 %v409
        %458 = vmatprep.subr.bf16.mxu0 %v413
        %459 = vmatpush1.bf16.msra.mxu0 %v412
        %460 = vmatprep.subr.bf16.mxu0 %v416
        %461 = vmatpush1.bf16.msra.mxu0 %v415
        %462 = vmatprep.subr.bf16.mxu0 %v419
        %463 = vmatpush1.bf16.msra.mxu0 %v418
        %464 = vmatprep.subr.bf16.mxu0 %v422
        %465 = vmatpush1.bf16.msra.mxu0 %v421
        %466 = vmatprep.subr.bf16.mxu0 %v425
        %467 = vmatpush1.bf16.msra.mxu0 %v424
        %468 = vmatprep.subr.bf16.mxu0 %v428
        %469 = vmatpush1.bf16.msra.mxu0 %v427
        %470 = vmatprep.subr.bf16.mxu0 0
        %471 = vmatpush1.bf16.msra.mxu0 0
        %472 = vmatprep.subr.bf16.mxu0 0
        %473 = vmatpush1.bf16.msra.mxu0 0
        %474 = vmatprep.subr.bf16.mxu0 0
        %475 = vmatpush1.bf16.msra.mxu0 0
        %476 = vmatprep.subr.bf16.mxu0 0
        %477 = vmatpush1.bf16.msra.mxu0 0
        %478 = vmatprep.subr.bf16.mxu0 0
        %479 = vmatpush1.bf16.msra.mxu0 0
        %480 = vmatprep.subr.bf16.mxu0 0
        %481 = vmatpush1.bf16.msra.mxu0 0
        %482 = vmatprep.subr.bf16.mxu0 0
        %483 = vmatpush1.bf16.msra.mxu0 0
        %484 = vmatprep.subr.bf16.mxu0 0
        %485 = vmatpush1.bf16.msra.mxu0 0
        %486 = vmatprep.mubr.bf16.mxu0 0
        %487 = vmatmul.mubr.bf16.gmra.mrb[0].mxu0 %v276
        %v488 = vpop.f32.mrb[0].mxu0
        %v489 = vadd.f32 %v314, %v488
        %v490 = vpop.f32.mrb[0].mxu0
        %v491 = vadd.f32 %v318, %v490
        %v492 = vpop.f32.mrb[0].mxu0
        %v493 = vpop.f32.mrb[0].mxu0
        %494 = vdwg.mxu0
        %495 = vmatprep.subr.bf16.mxu0 0
        %496 = vmatpush1.bf16.msra.mxu0 %v408
        %497 = vmatprep.subr.bf16.mxu0 0
        %498 = vmatpush1.bf16.msra.mxu0 %v411
        %499 = vmatprep.subr.bf16.mxu0 0
        %500 = vmatpush1.bf16.msra.mxu0 %v414
        %501 = vmatprep.subr.bf16.mxu0 0
        %502 = vmatpush1.bf16.msra.mxu0 %v417
        %503 = vmatprep.subr.bf16.mxu0 0
        %504 = vmatpush1.bf16.msra.mxu0 %v420
        %505 = vmatprep.subr.bf16.mxu0 0
        %506 = vmatpush1.bf16.msra.mxu0 %v423
        %507 = vmatprep.subr.bf16.mxu0 0
        %508 = vmatpush1.bf16.msra.mxu0 %v426
        %509 = vmatprep.subr.bf16.mxu0 0
        %510 = vmatpush1.bf16.msra.mxu0 %v429
        %511 = vmatprep.subr.bf16.mxu0 0
        %512 = vmatpush1.bf16.msra.mxu0 0
        %513 = vmatprep.subr.bf16.mxu0 0
        %514 = vmatpush1.bf16.msra.mxu0 0
        %515 = vmatprep.subr.bf16.mxu0 0
        %516 = vmatpush1.bf16.msra.mxu0 0
        %517 = vmatprep.subr.bf16.mxu0 0
        %518 = vmatpush1.bf16.msra.mxu0 0
        %519 = vmatprep.subr.bf16.mxu0 0
        %520 = vmatpush1.bf16.msra.mxu0 0
        %521 = vmatprep.subr.bf16.mxu0 0
        %522 = vmatpush1.bf16.msra.mxu0 0
        %523 = vmatprep.subr.bf16.mxu0 0
        %524 = vmatpush1.bf16.msra.mxu0 0
        %525 = vmatprep.subr.bf16.mxu0 0
        %526 = vmatpush1.bf16.msra.mxu0 0
        %527 = vmatprep.mubr.bf16.mxu0 0
        %528 = vmatmul.mubr.bf16.gmra.mrb[0].mxu0 %v276
        %v529 = vpop.f32.mrb[0].mxu0
        %v530 = vadd.f32 %v322, %v529
        %v531 = vpop.f32.mrb[0].mxu0
        %v532 = vpop.f32.mrb[0].mxu0
        %v533 = vpop.f32.mrb[0].mxu0
        %534 = vdwg.mxu0
        %s535 = sld [smem:[#allocation3 + %s28]]
        %v536 = vlaneseq
        %v537 = vand.u32 %v536, 127
        %v538 = vstv %s535
        %vm539 = vcmp.lt.s32.totalorder %v537, %v538
        %v540 = vsel %vm539, 0.0, -1e+09
        %v541 = vld [vmem:[%s5] sm:$0x1]
        %v543 = vlaneseq
        %v544 = vshrl.u32 %v543, 7
        %v545 = vsub.s32 0, %v544
        %v546 = vrot.slane %v541, %v545
        %v548 = vpack.c.bf16 %v489, %v489
        %v549 = vpack.c.bf16 %v491, %v491
        %v550 = vpack.c.bf16 %v530, %v530
        %vm551 = vcmask 261120
        %v553 = vsel %vm551, %v548, 0
        %v556 = vsel %vm551, %v549, 0
        %558 = vmatprep.subr.bf16.mxu0 0
        %559 = vmatpush1.bf16.xpose.msra.mxu0 %v556
        %560 = vmatprep.subr.bf16.mxu0 0
        %561 = vmatpush1.bf16.xpose.msra.mxu0 0
        %562 = vmatprep.subr.bf16.mxu0 0
        %563 = vmatpush1.bf16.xpose.msra.mxu0 0
        %564 = vmatprep.subr.bf16.mxu0 0
        %565 = vmatpush1.bf16.xpose.msra.mxu0 0
        %566 = vmatprep.subr.bf16.mxu0 0
        %567 = vmatpush1.bf16.xpose.msra.mxu0 0
        %568 = vmatprep.subr.bf16.mxu0 0
        %569 = vmatpush1.bf16.xpose.msra.mxu0 0
        %570 = vmatprep.subr.bf16.mxu0 0
        %571 = vmatpush1.bf16.xpose.msra.mxu0 0
        %572 = vmatprep.subr.bf16.mxu0 0
        %573 = vmatpush1.bf16.xpose.msra.mxu0 0
        %574 = vmatprep.subr.bf16.mxu0 0
        %575 = vmatpush1.bf16.xpose.msra.mxu0 0
        %576 = vmatprep.subr.bf16.mxu0 0
        %577 = vmatpush1.bf16.xpose.msra.mxu0 0
        %578 = vmatprep.subr.bf16.mxu0 0
        %579 = vmatpush1.bf16.xpose.msra.mxu0 0
        %580 = vmatprep.subr.bf16.mxu0 0
        %581 = vmatpush1.bf16.xpose.msra.mxu0 0
        %582 = vmatprep.subr.bf16.mxu0 0
        %583 = vmatpush1.bf16.xpose.msra.mxu0 0
        %584 = vmatprep.subr.bf16.mxu0 0
        %585 = vmatpush1.bf16.xpose.msra.mxu0 0
        %586 = vmatprep.subr.bf16.mxu0 0
        %587 = vmatpush1.bf16.xpose.msra.mxu0 0
        %588 = vmatprep.subr.bf16.mxu0 0
        %589 = vmatpush1.bf16.xpose.msra.mxu0 0
        %590 = vmatprep.mubr.bf16.mxu0 0
        %591 = vmatmul.mubr.bf16.gmra.mrb[0].mxu0 %v553
        %v592 = vpop.f32.mrb[0].mxu0
        %v593 = vadd.f32 %v540, %v592
        %v594 = vpop.f32.mrb[0].mxu0
        %v595 = vpop.f32.mrb[0].mxu0
        %v596 = vpop.f32.mrb[0].mxu0
        %597 = vdwg.mxu0
        %vm598 = vcmask 64512
        %v599 = vsel %vm598, %v593, -inf
        %600 = vmax.xlane.f32.xlu0 %v599
        %v601 = vpop.xlane.xlu0 %600
        %v602 = vsub.f32 %v593, %v601
        %v603 = vmul.f32 %v602, 1.442695
        %v604 = vpow.pop %v603
        %v605 = vsel %vm598, %v604, 0.0
        %606 = vadd.xlane.f32.xlu0 %v605
        %v607 = vpop.xlane.xlu0 %606
        %v608 = vpack.c.bf16 %v604, %v604
        %v610 = vsel %vm598, %v608, 0
        %vm612 = vcmask 1043456
        %v614 = vsel %vm612, %v550, 0
        %616 = vmatprep.subr.bf16.mxu0 0
        %617 = vmatpush1.bf16.msra.mxu0 %v614
        %618 = vmatprep.subr.bf16.mxu0 0
        %619 = vmatpush1.bf16.msra.mxu0 0
        %620 = vmatprep.subr.bf16.mxu0 0
        %621 = vmatpush1.bf16.msra.mxu0 0
        %622 = vmatprep.subr.bf16.mxu0 0
        %623 = vmatpush1.bf16.msra.mxu0 0
        %624 = vmatprep.subr.bf16.mxu0 0
        %625 = vmatpush1.bf16.msra.mxu0 0
        %626 = vmatprep.subr.bf16.mxu0 0
        %627 = vmatpush1.bf16.msra.mxu0 0
        %628 = vmatprep.subr.bf16.mxu0 0
        %629 = vmatpush1.bf16.msra.mxu0 0
        %630 = vmatprep.subr.bf16.mxu0 0
        %631 = vmatpush1.bf16.msra.mxu0 0
        %632 = vmatprep.subr.bf16.mxu0 0
        %633 = vmatpush1.bf16.msra.mxu0 0
        %634 = vmatprep.subr.bf16.mxu0 0
        %635 = vmatpush1.bf16.msra.mxu0 0
        %636 = vmatprep.subr.bf16.mxu0 0
        %637 = vmatpush1.bf16.msra.mxu0 0
        %638 = vmatprep.subr.bf16.mxu0 0
        %639 = vmatpush1.bf16.msra.mxu0 0
        %640 = vmatprep.subr.bf16.mxu0 0
        %641 = vmatpush1.bf16.msra.mxu0 0
        %642 = vmatprep.subr.bf16.mxu0 0
        %643 = vmatpush1.bf16.msra.mxu0 0
        %644 = vmatprep.subr.bf16.mxu0 0
        %645 = vmatpush1.bf16.msra.mxu0 0
        %646 = vmatprep.subr.bf16.mxu0 0
        %647 = vmatpush1.bf16.msra.mxu0 0
        %648 = vmatprep.mubr.bf16.mxu0 0
        %649 = vmatmul.mubr.bf16.gmra.mrb[0].mxu0 %v610
        %v650 = vpop.f32.mrb[0].mxu0
        %v651 = vadd.f32 0.0, %v650
        %v652 = vpop.f32.mrb[0].mxu0
        %v653 = vpop.f32.mrb[0].mxu0
        %v654 = vpop.f32.mrb[0].mxu0
        %655 = vdwg.mxu0
        %v656 = vrcp.pop %v607
        %v657 = vmul.f32 %v651, %v656
        %v658 = vpack.c.bf16 %v657, %v657
        %v659 = vld [vmem:[#allocation9] sm:$0xf]
        %v660 = vld [vmem:[#allocation9 + $0x4] sm:$0xf]
        %v661 = vld [vmem:[#allocation9 + $0x8] sm:$0xf]
        %v662 = vld [vmem:[#allocation9 + $0xc] sm:$0xf]
        %v667 = vunpack.c.l.b16 %v659
        %v668 = vunpack.c.l.b16 %v660
        %v669 = vunpack.c.l.b16 %v661
        %v670 = vunpack.c.l.b16 %v662
        %v671 = vpack.c.b16 %v668, %v667
        %v672 = vpack.c.b16 %v670, %v669
        %v676 = vsel %vm551, %v658, 0
        %678 = vmatprep.subr.bf16.mxu0 0
        %679 = vmatpush1.bf16.msra.mxu0 %v671
        %680 = vmatprep.subr.bf16.mxu0 0
        %681 = vmatpush1.bf16.msra.mxu0 %v672
        %682 = vmatprep.subr.bf16.mxu0 0
        %683 = vmatpush1.bf16.msra.mxu0 0
        %684 = vmatprep.subr.bf16.mxu0 0
        %685 = vmatpush1.bf16.msra.mxu0 0
        %686 = vmatprep.subr.bf16.mxu0 0
        %687 = vmatpush1.bf16.msra.mxu0 0
        %688 = vmatprep.subr.bf16.mxu0 0
        %689 = vmatpush1.bf16.msra.mxu0 0
        %690 = vmatprep.subr.bf16.mxu0 0
        %691 = vmatpush1.bf16.msra.mxu0 0
        %692 = vmatprep.subr.bf16.mxu0 0
        %693 = vmatpush1.bf16.msra.mxu0 0
        %694 = vmatprep.subr.bf16.mxu0 0
        %695 = vmatpush1.bf16.msra.mxu0 0
        %696 = vmatprep.subr.bf16.mxu0 0
        %697 = vmatpush1.bf16.msra.mxu0 0
        %698 = vmatprep.subr.bf16.mxu0 0
        %699 = vmatpush1.bf16.msra.mxu0 0
        %700 = vmatprep.subr.bf16.mxu0 0
        %701 = vmatpush1.bf16.msra.mxu0 0
        %702 = vmatprep.subr.bf16.mxu0 0
        %703 = vmatpush1.bf16.msra.mxu0 0
        %704 = vmatprep.subr.bf16.mxu0 0
        %705 = vmatpush1.bf16.msra.mxu0 0
        %706 = vmatprep.subr.bf16.mxu0 0
        %707 = vmatpush1.bf16.msra.mxu0 0
        %708 = vmatprep.subr.bf16.mxu0 0
        %709 = vmatpush1.bf16.msra.mxu0 0
        %710 = vmatprep.mubr.bf16.mxu0 0
        %711 = vmatmul.mubr.bf16.gmra.mrb[0].mxu0 %v676
        %v712 = vpop.f32.mrb[0].mxu0
        %v713 = vadd.f32 0.0, %v712
        %v714 = vpop.f32.mrb[0].mxu0
        %v715 = vpop.f32.mrb[0].mxu0
        %v716 = vpop.f32.mrb[0].mxu0
        %717 = vdwg.mxu0
        %v718 = vadd.f32 %v546, %v713
        %720 = vrot.lane.b32.xlu0 %v548, 96
        %v721 = vpop.permute.xlu0 %720
        %723 = vrot.lane.b32.xlu0 %v549, 96
        %v724 = vpop.permute.xlu0 %723
        %v726 = vsel %vm551, %v721, 0
        %v729 = vsel %vm551, %v724, 0
        %731 = vmatprep.subr.bf16.mxu0 0
        %732 = vmatpush1.bf16.xpose.msra.mxu0 %v729
        %733 = vmatprep.subr.bf16.mxu0 0
        %734 = vmatpush1.bf16.xpose.msra.mxu0 0
        %735 = vmatprep.subr.bf16.mxu0 0
        %736 = vmatpush1.bf16.xpose.msra.mxu0 0
        %737 = vmatprep.subr.bf16.mxu0 0
        %738 = vmatpush1.bf16.xpose.msra.mxu0 0
        %739 = vmatprep.subr.bf16.mxu0 0
        %740 = vmatpush1.bf16.xpose.msra.mxu0 0
        %741 = vmatprep.subr.bf16.mxu0 0
        %742 = vmatpush1.bf16.xpose.msra.mxu0 0
        %743 = vmatprep.subr.bf16.mxu0 0
        %744 = vmatpush1.bf16.xpose.msra.mxu0 0
        %745 = vmatprep.subr.bf16.mxu0 0
        %746 = vmatpush1.bf16.xpose.msra.mxu0 0
        %747 = vmatprep.subr.bf16.mxu0 0
        %748 = vmatpush1.bf16.xpose.msra.mxu0 0
        %749 = vmatprep.subr.bf16.mxu0 0
        %750 = vmatpush1.bf16.xpose.msra.mxu0 0
        %751 = vmatprep.subr.bf16.mxu0 0
        %752 = vmatpush1.bf16.xpose.msra.mxu0 0
        %753 = vmatprep.subr.bf16.mxu0 0
        %754 = vmatpush1.bf16.xpose.msra.mxu0 0
        %755 = vmatprep.subr.bf16.mxu0 0
        %756 = vmatpush1.bf16.xpose.msra.mxu0 0
        %757 = vmatprep.subr.bf16.mxu0 0
        %758 = vmatpush1.bf16.xpose.msra.mxu0 0
        %759 = vmatprep.subr.bf16.mxu0 0
        %760 = vmatpush1.bf16.xpose.msra.mxu0 0
        %761 = vmatprep.subr.bf16.mxu0 0
        %762 = vmatpush1.bf16.xpose.msra.mxu0 0
        %763 = vmatprep.mubr.bf16.mxu0 0
        %764 = vmatmul.mubr.bf16.gmra.mrb[0].mxu0 %v726
        %v765 = vpop.f32.mrb[0].mxu0
        %v766 = vadd.f32 %v540, %v765
        %v767 = vpop.f32.mrb[0].mxu0
        %v768 = vpop.f32.mrb[0].mxu0
        %v769 = vpop.f32.mrb[0].mxu0
        %770 = vdwg.mxu0
        %v771 = vsel %vm598, %v766, -inf
        %772 = vmax.xlane.f32.xlu0 %v771
        %v773 = vpop.xlane.xlu0 %772
        %v774 = vsub.f32 %v766, %v773
        %v775 = vmul.f32 %v774, 1.442695
        %v776 = vpow.pop %v775
        %v777 = vsel %vm598, %v776, 0.0
        %778 = vadd.xlane.f32.xlu0 %v777
        %v779 = vpop.xlane.xlu0 %778
        %v780 = vpack.c.bf16 %v776, %v776
        %782 = vrot.lane.b32.xlu0 %v550, 96
        %v783 = vpop.permute.xlu0 %782
        %v785 = vsel %vm598, %v780, 0
        %v788 = vsel %vm612, %v783, 0
        %790 = vmatprep.subr.bf16.mxu0 0
        %791 = vmatpush1.bf16.msra.mxu0 %v788
        %792 = vmatprep.subr.bf16.mxu0 0
        %793 = vmatpush1.bf16.msra.mxu0 0
        %794 = vmatprep.subr.bf16.mxu0 0
        %795 = vmatpush1.bf16.msra.mxu0 0
        %796 = vmatprep.subr.bf16.mxu0 0
        %797 = vmatpush1.bf16.msra.mxu0 0
        %798 = vmatprep.subr.bf16.mxu0 0
        %799 = vmatpush1.bf16.msra.mxu0 0
        %800 = vmatprep.subr.bf16.mxu0 0
        %801 = vmatpush1.bf16.msra.mxu0 0
        %802 = vmatprep.subr.bf16.mxu0 0
        %803 = vmatpush1.bf16.msra.mxu0 0
        %804 = vmatprep.subr.bf16.mxu0 0
        %805 = vmatpush1.bf16.msra.mxu0 0
        %806 = vmatprep.subr.bf16.mxu0 0
        %807 = vmatpush1.bf16.msra.mxu0 0
        %808 = vmatprep.subr.bf16.mxu0 0
        %809 = vmatpush1.bf16.msra.mxu0 0
        %810 = vmatprep.subr.bf16.mxu0 0
        %811 = vmatpush1.bf16.msra.mxu0 0
        %812 = vmatprep.subr.bf16.mxu0 0
        %813 = vmatpush1.bf16.msra.mxu0 0
        %814 = vmatprep.subr.bf16.mxu0 0
        %815 = vmatpush1.bf16.msra.mxu0 0
        %816 = vmatprep.subr.bf16.mxu0 0
        %817 = vmatpush1.bf16.msra.mxu0 0
        %818 = vmatprep.subr.bf16.mxu0 0
        %819 = vmatpush1.bf16.msra.mxu0 0
        %820 = vmatprep.subr.bf16.mxu0 0
        %821 = vmatpush1.bf16.msra.mxu0 0
        %822 = vmatprep.mubr.bf16.mxu0 0
        %823 = vmatmul.mubr.bf16.gmra.mrb[0].mxu0 %v785
        %v824 = vpop.f32.mrb[0].mxu0
        %v825 = vadd.f32 0.0, %v824
        %v826 = vpop.f32.mrb[0].mxu0
        %v827 = vpop.f32.mrb[0].mxu0
        %v828 = vpop.f32.mrb[0].mxu0
        %829 = vdwg.mxu0
        %v830 = vrcp.pop %v779
        %v831 = vmul.f32 %v825, %v830
        %v832 = vpack.c.bf16 %v831, %v831
        %v833 = vld [vmem:[#allocation9 + $0x10] sm:$0xf]
        %v834 = vld [vmem:[#allocation9 + $0x14] sm:$0xf]
        %v835 = vld [vmem:[#allocation9 + $0x18] sm:$0xf]
        %v836 = vld [vmem:[#allocation9 + $0x1c] sm:$0xf]
        %v841 = vunpack.c.l.b16 %v833
        %v842 = vunpack.c.l.b16 %v834
        %v843 = vunpack.c.l.b16 %v835
        %v844 = vunpack.c.l.b16 %v836
        %v845 = vpack.c.b16 %v842, %v841
        %v846 = vpack.c.b16 %v844, %v843
        %v850 = vsel %vm551, %v832, 0
        %852 = vmatprep.subr.bf16.mxu0 0
        %853 = vmatpush1.bf16.msra.mxu0 %v845
        %854 = vmatprep.subr.bf16.mxu0 0
        %855 = vmatpush1.bf16.msra.mxu0 %v846
        %856 = vmatprep.subr.bf16.mxu0 0
        %857 = vmatpush1.bf16.msra.mxu0 0
        %858 = vmatprep.subr.bf16.mxu0 0
        %859 = vmatpush1.bf16.msra.mxu0 0
        %860 = vmatprep.subr.bf16.mxu0 0
        %861 = vmatpush1.bf16.msra.mxu0 0
        %862 = vmatprep.subr.bf16.mxu0 0
        %863 = vmatpush1.bf16.msra.mxu0 0
        %864 = vmatprep.subr.bf16.mxu0 0
        %865 = vmatpush1.bf16.msra.mxu0 0
        %866 = vmatprep.subr.bf16.mxu0 0
        %867 = vmatpush1.bf16.msra.mxu0 0
        %868 = vmatprep.subr.bf16.mxu0 0
        %869 = vmatpush1.bf16.msra.mxu0 0
        %870 = vmatprep.subr.bf16.mxu0 0
        %871 = vmatpush1.bf16.msra.mxu0 0
        %872 = vmatprep.subr.bf16.mxu0 0
        %873 = vmatpush1.bf16.msra.mxu0 0
        %874 = vmatprep.subr.bf16.mxu0 0
        %875 = vmatpush1.bf16.msra.mxu0 0
        %876 = vmatprep.subr.bf16.mxu0 0
        %877 = vmatpush1.bf16.msra.mxu0 0
        %878 = vmatprep.subr.bf16.mxu0 0
        %879 = vmatpush1.bf16.msra.mxu0 0
        %880 = vmatprep.subr.bf16.mxu0 0
        %881 = vmatpush1.bf16.msra.mxu0 0
        %882 = vmatprep.subr.bf16.mxu0 0
        %883 = vmatpush1.bf16.msra.mxu0 0
        %884 = vmatprep.mubr.bf16.mxu0 0
        %885 = vmatmul.mubr.bf16.gmra.mrb[0].mxu0 %v850
        %v886 = vpop.f32.mrb[0].mxu0
        %v887 = vadd.f32 0.0, %v886
        %v888 = vpop.f32.mrb[0].mxu0
        %v889 = vpop.f32.mrb[0].mxu0
        %v890 = vpop.f32.mrb[0].mxu0
        %891 = vdwg.mxu0
        %v892 = vadd.f32 %v718, %v887
        %893 = vrot.lane.b32.xlu0 %v548, 64
        %v894 = vpop.permute.xlu0 %893
        %895 = vrot.lane.b32.xlu0 %v549, 64
        %v896 = vpop.permute.xlu0 %895
        %v898 = vsel %vm551, %v894, 0
        %v901 = vsel %vm551, %v896, 0
        %903 = vmatprep.subr.bf16.mxu0 0
        %904 = vmatpush1.bf16.xpose.msra.mxu0 %v901
        %905 = vmatprep.subr.bf16.mxu0 0
        %906 = vmatpush1.bf16.xpose.msra.mxu0 0
        %907 = vmatprep.subr.bf16.mxu0 0
        %908 = vmatpush1.bf16.xpose.msra.mxu0 0
        %909 = vmatprep.subr.bf16.mxu0 0
        %910 = vmatpush1.bf16.xpose.msra.mxu0 0
        %911 = vmatprep.subr.bf16.mxu0 0
        %912 = vmatpush1.bf16.xpose.msra.mxu0 0
        %913 = vmatprep.subr.bf16.mxu0 0
        %914 = vmatpush1.bf16.xpose.msra.mxu0 0
        %915 = vmatprep.subr.bf16.mxu0 0
        %916 = vmatpush1.bf16.xpose.msra.mxu0 0
        %917 = vmatprep.subr.bf16.mxu0 0
        %918 = vmatpush1.bf16.xpose.msra.mxu0 0
        %919 = vmatprep.subr.bf16.mxu0 0
        %920 = vmatpush1.bf16.xpose.msra.mxu0 0
        %921 = vmatprep.subr.bf16.mxu0 0
        %922 = vmatpush1.bf16.xpose.msra.mxu0 0
        %923 = vmatprep.subr.bf16.mxu0 0
        %924 = vmatpush1.bf16.xpose.msra.mxu0 0
        %925 = vmatprep.subr.bf16.mxu0 0
        %926 = vmatpush1.bf16.xpose.msra.mxu0 0
        %927 = vmatprep.subr.bf16.mxu0 0
        %928 = vmatpush1.bf16.xpose.msra.mxu0 0
        %929 = vmatprep.subr.bf16.mxu0 0
        %930 = vmatpush1.bf16.xpose.msra.mxu0 0
        %931 = vmatprep.subr.bf16.mxu0 0
        %932 = vmatpush1.bf16.xpose.msra.mxu0 0
        %933 = vmatprep.subr.bf16.mxu0 0
        %934 = vmatpush1.bf16.xpose.msra.mxu0 0
        %935 = vmatprep.mubr.bf16.mxu0 0
        %936 = vmatmul.mubr.bf16.gmra.mrb[0].mxu0 %v898
        %v937 = vpop.f32.mrb[0].mxu0
        %v938 = vadd.f32 %v540, %v937
        %v939 = vpop.f32.mrb[0].mxu0
        %v940 = vpop.f32.mrb[0].mxu0
        %v941 = vpop.f32.mrb[0].mxu0
        %942 = vdwg.mxu0
        %v943 = vsel %vm598, %v938, -inf
        %944 = vmax.xlane.f32.xlu0 %v943
        %v945 = vpop.xlane.xlu0 %944
        %v946 = vsub.f32 %v938, %v945
        %v947 = vmul.f32 %v946, 1.442695
        %v948 = vpow.pop %v947
        %v949 = vsel %vm598, %v948, 0.0
        %950 = vadd.xlane.f32.xlu0 %v949
        %v951 = vpop.xlane.xlu0 %950
        %v952 = vpack.c.bf16 %v948, %v948
        %953 = vrot.lane.b32.xlu0 %v550, 64
        %v954 = vpop.permute.xlu0 %953
        %v956 = vsel %vm598, %v952, 0
        %v959 = vsel %vm612, %v954, 0
        %961 = vmatprep.subr.bf16.mxu0 0
        %962 = vmatpush1.bf16.msra.mxu0 %v959
        %963 = vmatprep.subr.bf16.mxu0 0
        %964 = vmatpush1.bf16.msra.mxu0 0
        %965 = vmatprep.subr.bf16.mxu0 0
        %966 = vmatpush1.bf16.msra.mxu0 0
        %967 = vmatprep.subr.bf16.mxu0 0
        %968 = vmatpush1.bf16.msra.mxu0 0
        %969 = vmatprep.subr.bf16.mxu0 0
        %970 = vmatpush1.bf16.msra.mxu0 0
        %971 = vmatprep.subr.bf16.mxu0 0
        %972 = vmatpush1.bf16.msra.mxu0 0
        %973 = vmatprep.subr.bf16.mxu0 0
        %974 = vmatpush1.bf16.msra.mxu0 0
        %975 = vmatprep.subr.bf16.mxu0 0
        %976 = vmatpush1.bf16.msra.mxu0 0
        %977 = vmatprep.subr.bf16.mxu0 0
        %978 = vmatpush1.bf16.msra.mxu0 0
        %979 = vmatprep.subr.bf16.mxu0 0
        %980 = vmatpush1.bf16.msra.mxu0 0
        %981 = vmatprep.subr.bf16.mxu0 0
        %982 = vmatpush1.bf16.msra.mxu0 0
        %983 = vmatprep.subr.bf16.mxu0 0
        %984 = vmatpush1.bf16.msra.mxu0 0
        %985 = vmatprep.subr.bf16.mxu0 0
        %986 = vmatpush1.bf16.msra.mxu0 0
        %987 = vmatprep.subr.bf16.mxu0 0
        %988 = vmatpush1.bf16.msra.mxu0 0
        %989 = vmatprep.subr.bf16.mxu0 0
        %990 = vmatpush1.bf16.msra.mxu0 0
        %991 = vmatprep.subr.bf16.mxu0 0
        %992 = vmatpush1.bf16.msra.mxu0 0
        %993 = vmatprep.mubr.bf16.mxu0 0
        %994 = vmatmul.mubr.bf16.gmra.mrb[0].mxu0 %v956
        %v995 = vpop.f32.mrb[0].mxu0
        %v996 = vadd.f32 0.0, %v995
        %v997 = vpop.f32.mrb[0].mxu0
        %v998 = vpop.f32.mrb[0].mxu0
        %v999 = vpop.f32.mrb[0].mxu0
        %1000 = vdwg.mxu0
        %v1001 = vrcp.pop %v951
        %v1002 = vmul.f32 %v996, %v1001
        %v1003 = vpack.c.bf16 %v1002, %v1002
        %v1004 = vld [vmem:[#allocation9 + $0x20] sm:$0xf]
        %v1005 = vld [vmem:[#allocation9 + $0x24] sm:$0xf]
        %v1006 = vld [vmem:[#allocation9 + $0x28] sm:$0xf]
        %v1007 = vld [vmem:[#allocation9 + $0x2c] sm:$0xf]
        %v1012 = vunpack.c.l.b16 %v1004
        %v1013 = vunpack.c.l.b16 %v1005
        %v1014 = vunpack.c.l.b16 %v1006
        %v1015 = vunpack.c.l.b16 %v1007
        %v1016 = vpack.c.b16 %v1013, %v1012
        %v1017 = vpack.c.b16 %v1015, %v1014
        %v1021 = vsel %vm551, %v1003, 0
        %1023 = vmatprep.subr.bf16.mxu0 0
        %1024 = vmatpush1.bf16.msra.mxu0 %v1016
        %1025 = vmatprep.subr.bf16.mxu0 0
        %1026 = vmatpush1.bf16.msra.mxu0 %v1017
        %1027 = vmatprep.subr.bf16.mxu0 0
        %1028 = vmatpush1.bf16.msra.mxu0 0
        %1029 = vmatprep.subr.bf16.mxu0 0
        %1030 = vmatpush1.bf16.msra.mxu0 0
        %1031 = vmatprep.subr.bf16.mxu0 0
        %1032 = vmatpush1.bf16.msra.mxu0 0
        %1033 = vmatprep.subr.bf16.mxu0 0
        %1034 = vmatpush1.bf16.msra.mxu0 0
        %1035 = vmatprep.subr.bf16.mxu0 0
        %1036 = vmatpush1.bf16.msra.mxu0 0
        %1037 = vmatprep.subr.bf16.mxu0 0
        %1038 = vmatpush1.bf16.msra.mxu0 0
        %1039 = vmatprep.subr.bf16.mxu0 0
        %1040 = vmatpush1.bf16.msra.mxu0 0
        %1041 = vmatprep.subr.bf16.mxu0 0
        %1042 = vmatpush1.bf16.msra.mxu0 0
        %1043 = vmatprep.subr.bf16.mxu0 0
        %1044 = vmatpush1.bf16.msra.mxu0 0
        %1045 = vmatprep.subr.bf16.mxu0 0
        %1046 = vmatpush1.bf16.msra.mxu0 0
        %1047 = vmatprep.subr.bf16.mxu0 0
        %1048 = vmatpush1.bf16.msra.mxu0 0
        %1049 = vmatprep.subr.bf16.mxu0 0
        %1050 = vmatpush1.bf16.msra.mxu0 0
        %1051 = vmatprep.subr.bf16.mxu0 0
        %1052 = vmatpush1.bf16.msra.mxu0 0
        %1053 = vmatprep.subr.bf16.mxu0 0
        %1054 = vmatpush1.bf16.msra.mxu0 0
        %1055 = vmatprep.mubr.bf16.mxu0 0
        %1056 = vmatmul.mubr.bf16.gmra.mrb[0].mxu0 %v1021
        %v1057 = vpop.f32.mrb[0].mxu0
        %v1058 = vadd.f32 0.0, %v1057
        %v1059 = vpop.f32.mrb[0].mxu0
        %v1060 = vpop.f32.mrb[0].mxu0
        %v1061 = vpop.f32.mrb[0].mxu0
        %1062 = vdwg.mxu0
        %v1063 = vadd.f32 %v892, %v1058
        %1064 = vrot.lane.b32.xlu0 %v548, 32
        %v1065 = vpop.permute.xlu0 %1064
        %1066 = vrot.lane.b32.xlu0 %v549, 32
        %v1067 = vpop.permute.xlu0 %1066
        %v1069 = vsel %vm551, %v1065, 0
        %v1072 = vsel %vm551, %v1067, 0
        %1074 = vmatprep.subr.bf16.mxu0 0
        %1075 = vmatpush1.bf16.xpose.msra.mxu0 %v1072
        %1076 = vmatprep.subr.bf16.mxu0 0
        %1077 = vmatpush1.bf16.xpose.msra.mxu0 0
        %1078 = vmatprep.subr.bf16.mxu0 0
        %1079 = vmatpush1.bf16.xpose.msra.mxu0 0
        %1080 = vmatprep.subr.bf16.mxu0 0
        %1081 = vmatpush1.bf16.xpose.msra.mxu0 0
        %1082 = vmatprep.subr.bf16.mxu0 0
        %1083 = vmatpush1.bf16.xpose.msra.mxu0 0
        %1084 = vmatprep.subr.bf16.mxu0 0
        %1085 = vmatpush1.bf16.xpose.msra.mxu0 0
        %1086 = vmatprep.subr.bf16.mxu0 0
        %1087 = vmatpush1.bf16.xpose.msra.mxu0 0
        %1088 = vmatprep.subr.bf16.mxu0 0
        %1089 = vmatpush1.bf16.xpose.msra.mxu0 0
        %1090 = vmatprep.subr.bf16.mxu0 0
        %1091 = vmatpush1.bf16.xpose.msra.mxu0 0
        %1092 = vmatprep.subr.bf16.mxu0 0
        %1093 = vmatpush1.bf16.xpose.msra.mxu0 0
        %1094 = vmatprep.subr.bf16.mxu0 0
        %1095 = vmatpush1.bf16.xpose.msra.mxu0 0
        %1096 = vmatprep.subr.bf16.mxu0 0
        %1097 = vmatpush1.bf16.xpose.msra.mxu0 0
        %1098 = vmatprep.subr.bf16.mxu0 0
        %1099 = vmatpush1.bf16.xpose.msra.mxu0 0
        %1100 = vmatprep.subr.bf16.mxu0 0
        %1101 = vmatpush1.bf16.xpose.msra.mxu0 0
        %1102 = vmatprep.subr.bf16.mxu0 0
        %1103 = vmatpush1.bf16.xpose.msra.mxu0 0
        %1104 = vmatprep.subr.bf16.mxu0 0
        %1105 = vmatpush1.bf16.xpose.msra.mxu0 0
        %1106 = vmatprep.mubr.bf16.mxu0 0
        %1107 = vmatmul.mubr.bf16.gmra.mrb[0].mxu0 %v1069
        %v1108 = vpop.f32.mrb[0].mxu0
        %v1109 = vadd.f32 %v540, %v1108
        %v1110 = vpop.f32.mrb[0].mxu0
        %v1111 = vpop.f32.mrb[0].mxu0
        %v1112 = vpop.f32.mrb[0].mxu0
        %1113 = vdwg.mxu0
        %v1114 = vsel %vm598, %v1109, -inf
        %1115 = vmax.xlane.f32.xlu0 %v1114
        %v1116 = vpop.xlane.xlu0 %1115
        %v1117 = vsub.f32 %v1109, %v1116
        %v1118 = vmul.f32 %v1117, 1.442695
        %v1119 = vpow.pop %v1118
        %v1120 = vsel %vm598, %v1119, 0.0
        %1121 = vadd.xlane.f32.xlu0 %v1120
        %v1122 = vpop.xlane.xlu0 %1121
        %v1123 = vpack.c.bf16 %v1119, %v1119
        %1124 = vrot.lane.b32.xlu0 %v550, 32
        %v1125 = vpop.permute.xlu0 %1124
        %v1127 = vsel %vm598, %v1123, 0
        %v1130 = vsel %vm612, %v1125, 0
        %1132 = vmatprep.subr.bf16.mxu0 0
        %1133 = vmatpush1.bf16.msra.mxu0 %v1130
        %1134 = vmatprep.subr.bf16.mxu0 0
        %1135 = vmatpush1.bf16.msra.mxu0 0
        %1136 = vmatprep.subr.bf16.mxu0 0
        %1137 = vmatpush1.bf16.msra.mxu0 0
        %1138 = vmatprep.subr.bf16.mxu0 0
        %1139 = vmatpush1.bf16.msra.mxu0 0
        %1140 = vmatprep.subr.bf16.mxu0 0
        %1141 = vmatpush1.bf16.msra.mxu0 0
        %1142 = vmatprep.subr.bf16.mxu0 0
        %1143 = vmatpush1.bf16.msra.mxu0 0
        %1144 = vmatprep.subr.bf16.mxu0 0
        %1145 = vmatpush1.bf16.msra.mxu0 0
        %1146 = vmatprep.subr.bf16.mxu0 0
        %1147 = vmatpush1.bf16.msra.mxu0 0
        %1148 = vmatprep.subr.bf16.mxu0 0
        %1149 = vmatpush1.bf16.msra.mxu0 0
        %1150 = vmatprep.subr.bf16.mxu0 0
        %1151 = vmatpush1.bf16.msra.mxu0 0
        %1152 = vmatprep.subr.bf16.mxu0 0
        %1153 = vmatpush1.bf16.msra.mxu0 0
        %1154 = vmatprep.subr.bf16.mxu0 0
        %1155 = vmatpush1.bf16.msra.mxu0 0
        %1156 = vmatprep.subr.bf16.mxu0 0
        %1157 = vmatpush1.bf16.msra.mxu0 0
        %1158 = vmatprep.subr.bf16.mxu0 0
        %1159 = vmatpush1.bf16.msra.mxu0 0
        %1160 = vmatprep.subr.bf16.mxu0 0
        %1161 = vmatpush1.bf16.msra.mxu0 0
        %1162 = vmatprep.subr.bf16.mxu0 0
        %1163 = vmatpush1.bf16.msra.mxu0 0
        %1164 = vmatprep.mubr.bf16.mxu0 0
        %1165 = vmatmul.mubr.bf16.gmra.mrb[0].mxu0 %v1127
        %v1166 = vpop.f32.mrb[0].mxu0
        %v1167 = vadd.f32 0.0, %v1166
        %v1168 = vpop.f32.mrb[0].mxu0
        %v1169 = vpop.f32.mrb[0].mxu0
        %v1170 = vpop.f32.mrb[0].mxu0
        %1171 = vdwg.mxu0
        %v1172 = vrcp.pop %v1122
        %v1173 = vmul.f32 %v1167, %v1172
        %v1174 = vpack.c.bf16 %v1173, %v1173
        %v1175 = vld [vmem:[#allocation9 + $0x30] sm:$0xf]
        %v1176 = vld [vmem:[#allocation9 + $0x34] sm:$0xf]
        %v1177 = vld [vmem:[#allocation9 + $0x38] sm:$0xf]
        %v1178 = vld [vmem:[#allocation9 + $0x3c] sm:$0xf]
        %v1183 = vunpack.c.l.b16 %v1175
        %v1184 = vunpack.c.l.b16 %v1176
        %v1185 = vunpack.c.l.b16 %v1177
        %v1186 = vunpack.c.l.b16 %v1178
        %v1187 = vpack.c.b16 %v1184, %v1183
        %v1188 = vpack.c.b16 %v1186, %v1185
        %v1192 = vsel %vm551, %v1174, 0
        %1194 = vmatprep.subr.bf16.mxu0 0
        %1195 = vmatpush1.bf16.msra.mxu0 %v1187
        %1196 = vmatprep.subr.bf16.mxu0 0
        %1197 = vmatpush1.bf16.msra.mxu0 %v1188
        %1198 = vmatprep.subr.bf16.mxu0 0
        %1199 = vmatpush1.bf16.msra.mxu0 0
        %1200 = vmatprep.subr.bf16.mxu0 0
        %1201 = vmatpush1.bf16.msra.mxu0 0
        %1202 = vmatprep.subr.bf16.mxu0 0
        %1203 = vmatpush1.bf16.msra.mxu0 0
        %1204 = vmatprep.subr.bf16.mxu0 0
        %1205 = vmatpush1.bf16.msra.mxu0 0
        %1206 = vmatprep.subr.bf16.mxu0 0
        %1207 = vmatpush1.bf16.msra.mxu0 0
        %1208 = vmatprep.subr.bf16.mxu0 0
        %1209 = vmatpush1.bf16.msra.mxu0 0
        %1210 = vmatprep.subr.bf16.mxu0 0
        %1211 = vmatpush1.bf16.msra.mxu0 0
        %1212 = vmatprep.subr.bf16.mxu0 0
        %1213 = vmatpush1.bf16.msra.mxu0 0
        %1214 = vmatprep.subr.bf16.mxu0 0
        %1215 = vmatpush1.bf16.msra.mxu0 0
        %1216 = vmatprep.subr.bf16.mxu0 0
        %1217 = vmatpush1.bf16.msra.mxu0 0
        %1218 = vmatprep.subr.bf16.mxu0 0
        %1219 = vmatpush1.bf16.msra.mxu0 0
        %1220 = vmatprep.subr.bf16.mxu0 0
        %1221 = vmatpush1.bf16.msra.mxu0 0
        %1222 = vmatprep.subr.bf16.mxu0 0
        %1223 = vmatpush1.bf16.msra.mxu0 0
        %1224 = vmatprep.subr.bf16.mxu0 0
        %1225 = vmatpush1.bf16.msra.mxu0 0
        %1226 = vmatprep.mubr.bf16.mxu0 0
        %1227 = vmatmul.mubr.bf16.gmra.mrb[0].mxu0 %v1192
        %v1228 = vpop.f32.mrb[0].mxu0
        %v1229 = vadd.f32 0.0, %v1228
        %v1230 = vpop.f32.mrb[0].mxu0
        %v1231 = vpop.f32.mrb[0].mxu0
        %v1232 = vpop.f32.mrb[0].mxu0
        %1233 = vdwg.mxu0
        %v1234 = vadd.f32 %v1063, %v1229
        %1235 = vst [vmem:[%s273] sm:$0xff] %v1234
        %s1236 = sand.u32 %s146, 1
        %s1237 = scalar_lea.sflag [#allocation6], %s1236
        %s1238 = sand.u32 %s146, 1
        %s1239 = smul.addr %s1238, 8
        %s1240 = scalar_lea.vmem [#allocation10], %s1239
        // Predicated region
        $region53: #{tpu_custom_call.1} parent=39 // pred_check
          %p1241 = pneg %p156
        $region54: #{tpu_custom_call.1} parent=39 // pred_check_branch
          %1243 = sbr.rel (%p1241) target = $region56
        $region55: #{tpu_custom_call.1} parent=39 // pred_region
          %s1245 = ssub.s32 128, 128
          %1246 = vsyncadd %s1237, %s1245
          %s1247 = smul.addr %s28, 128
          %s1248 = scalar_lea.hbm %s6, %s1247
          %s1250 = sshll.u32 %s1240, 4
          %s1251 = int_to_ptr.vmem [resolvable:$true] %s1250
          %1253 = dma.vmem_to_hbm [thread:$0]  %s1251, 128, %s1248, %s1237
        $region56: #{tpu_custom_call.1} parent=39 // pred_fallthru
          _
      $region40: #{tpu_custom_call.1} parent=5 // pred_fallthru
        _
      %p1254 = scmp.le.s32.totalorder 2, %s23
      // Predicated region
      $region57: #{tpu_custom_call.1} parent=5 // pred_check
        %p1255 = pneg %p1254
      $region58: #{tpu_custom_call.1} parent=5 // pred_check_branch
        %1257 = sbr.rel (%p1255) target = $region60
      $region59: #{tpu_custom_call.1} parent=5 // pred_region
        %s1258 = ssub.s32 %s23, 2
        // Predicated region
        $region61: #{tpu_custom_call.1} parent=59 // pred_check
          %p1259 = pneg %p162
        $region62: #{tpu_custom_call.1} parent=59 // pred_check_branch
          %1261 = sbr.rel (%p1259) target = $region64
        $region63: #{tpu_custom_call.1} parent=59 // pred_region
          %s1262 = sand.u32 %s147, 1
          %s1263 = scalar_lea.sflag [#allocation6], %s1262
          %s1264 = sand.u32 %s147, 1
          %s1265 = smul.addr %s1264, 8
          %s1266 = scalar_lea.vmem [#allocation10], %s1265
          %1267 = dma.done %s1263, 128
        $region64: #{tpu_custom_call.1} parent=59 // pred_fallthru
          _
      $region60: #{tpu_custom_call.1} parent=5 // pred_fallthru
        _
    $region6: #{tpu_custom_call.1} parent=1 // loop_footer
      %s27 = sadd.s32 1, %s23
    $region7: #{tpu_custom_call.1} parent=1 // loop_footer_branch
      %22 = sbr.rel target = $region3
    $region8: #{tpu_custom_call.1} parent=1 // loop_exit
      _
    %1268 = vsyncpa [#allocation5], 1
    %s1269 = scalar_lea.sflag [#allocation5], 1
    %1270 = vsyncpa %s1269, 1
    %1271 = vsyncpa [#allocation8], 1
    %1272 = vsyncpa [#allocation6], 1
    %s1273 = scalar_lea.sflag [#allocation6], 1
    %1274 = vsyncpa %s1273, 1

</llo_original>
